<compile_context>
chip_gen: v7x
topology: tpu7x:2x2x1
jax: 0.10.0
libtpu: 0.0.40
codegen_flags: <defaults>
</compile_context>

<pallas_src>
import functools

import jax
import jax.numpy as jnp
from jax.experimental import pallas as pl
from jax.experimental.pallas import tpu as pltpu

_VMEM_LIMIT = 32 * 1024 * 1024   # scoped limit; leaves headroom on v7x's 64 MiB


def _round_up(x, m):
    return (x + m - 1) // m * m


# ----------------------------------------------------------------------------
# In-kernel helpers
# ----------------------------------------------------------------------------
def _leaky(x):
    # leaky_relu(x, 0.2) with a single VPU max (cheaper than compare+select)
    return jnp.maximum(x, 0.2 * x)


def _pad_into(scr_ref, interior, P, HW):
    """Zero-halo a VMEM scratch and store `interior` at lane offset P (aligned)."""
    scr_ref[...] = jnp.zeros_like(scr_ref)
    scr_ref[:, P:P + HW] = interior


def _conv3x3_padded(a, w, mask_l, mask_r, H, W, P):
    """3x3 conv (pad=1) of a zero-haloed flat activation.

    a : (Cin, Ltot) f32, interior (H*W pixels) at lane offset P, halos zero.
    w : (Cout, 9*Cin) bf16, columns ordered (tap-major, chan-minor).
    returns (Cout, H*W) f32 (bias not added).  Vertical padding is physical
    (halo), horizontal wrap is handled by 2 lane masks.
    """
    HW = H * W
    cin = a.shape[0]
    cout = w.shape[0]
    taps = []
    for ky in range(3):
        for kx in range(3):
            off = (ky - 1) * W + (kx - 1)
            t = a[:, P + off:P + off + HW]           # static lane slice
            if kx == 0:
                t = jnp.where(mask_l, t, jnp.zeros_like(t))
            elif kx == 2:
                t = jnp.where(mask_r, t, jnp.zeros_like(t))
            taps.append(t)
    if cin >= 128:
        # 9 accumulating matmuls: no (9*Cin, HW) patch buffer in VMEM.  On v7x
        # the MRB accumulates in place; on v5e/v6e the saved copies outweigh
        # the extra result pops at this Cin.
        acc = jnp.zeros((cout, HW), jnp.float32)
        for t_idx, t in enumerate(taps):
            acc = acc + jnp.dot(w[:, t_idx * cin:(t_idx + 1) * cin],
                                t.astype(jnp.bfloat16),
                                preferred_element_type=jnp.float32)
        return acc
    # Small Cin: one deep matmul, K = 9*Cin.
    patch = jnp.concatenate(taps, axis=0).astype(jnp.bfloat16)
    return jnp.dot(w, patch, preferred_element_type=jnp.float32)


def _lane_masks(H, W):
    HW = H * W
    col = jax.lax.broadcasted_iota(jnp.int32, (1, HW), 1) % W
    return col > 0, col < (W - 1)


def _block_core(x, w0, b0, w1, b1, xp_scr, dp_scr, H, W, P):
    """conv_1(actvn(conv_0(actvn(x)))) with dx kept entirely in VMEM."""
    HW = H * W
    mask_l, mask_r = _lane_masks(H, W)
    # dx = conv_0(actvn(x))
    _pad_into(xp_scr, _leaky(x.astype(jnp.float32)), P, HW)
    acc0 = _conv3x3_padded(xp_scr[...], w0, mask_l, mask_r, H, W, P) + b0
    # conv_1(actvn(dx))
    _pad_into(dp_scr, _leaky(acc0), P, HW)
    acc1 = _conv3x3_padded(dp_scr[...], w1, mask_l, mask_r, H, W, P) + b1
    return acc1


# ----------------------------------------------------------------------------
# Kernels
# ----------------------------------------------------------------------------
def _resblock_kernel(x_ref, w0_ref, b0_ref, w1_ref, b1_ref, o_ref,
                     xp_scr, dp_scr, *, H, W, P, alpha):
    # identity shortcut: out = x + alpha * conv_1(actvn(conv_0(actvn(x))))
    x = x_ref[0]                                      # (Cin, HW) bf16
    acc1 = _block_core(x, w0_ref[...], b0_ref[...], w1_ref[...], b1_ref[...],
                       xp_scr, dp_scr, H, W, P)
    out = x.astype(jnp.float32) + alpha * acc1
    o_ref[0] = out.astype(o_ref.dtype)


def _resblock_s_kernel(x_ref, w0_ref, b0_ref, w1_ref, b1_ref, ws_ref, o_ref,
                       xp_scr, dp_scr, *, H, W, P, alpha):
    # learned shortcut: out = conv1x1(x) + alpha * conv_1(actvn(conv_0(actvn(x))))
    x = x_ref[0]                                      # (Cin, HW) bf16
    acc1 = _block_core(x, w0_ref[...], b0_ref[...], w1_ref[...], b1_ref[...],
                       xp_scr, dp_scr, H, W, P)
    xs = jnp.dot(ws_ref[...], x, preferred_element_type=jnp.float32)
    o_ref[0] = (xs + alpha * acc1).astype(o_ref.dtype)


def _convimg_kernel(x_ref, w_ref, b_ref, o_ref, xp_scr, *, H, W, P):
    # tanh(conv3x3(actvn(x)) + b)
    HW = H * W
    mask_l, mask_r = _lane_masks(H, W)
    x = x_ref[0]
    _pad_into(xp_scr, _leaky(x.astype(jnp.float32)), P, HW)
    acc = _conv3x3_padded(xp_scr[...], w_ref[...], mask_l, mask_r, H, W, P)
    o_ref[0] = jnp.tanh(acc + b_ref[...]).astype(o_ref.dtype)


def _fc_kernel(z_ref, w_ref, b_ref, o_ref):
    acc = jnp.dot(z_ref[...], w_ref[...], preferred_element_type=jnp.float32)
    o_ref[...] = (acc + b_ref[...]).astype(o_ref.dtype)


# ----------------------------------------------------------------------------
# Pallas wrappers
# ----------------------------------------------------------------------------
def _act_spec(shape):
    _, c, n = shape
    return pl.BlockSpec((1, c, n), lambda i: (i, 0, 0))


def _full_spec(shape):
    return pl.BlockSpec(shape, lambda i: (0,) * len(shape))


def _cparams():
    return pltpu.CompilerParams(dimension_semantics=("parallel",),
                                vmem_limit_bytes=_VMEM_LIMIT)


def _halo_geometry(H, W):
    HW = H * W
    P = _round_up(W + 1, 128)                 # 128-aligned interior start
    Ltot = _round_up(P + HW + W + 1, 128)     # room for the +W+1 tap on the right
    return HW, P, Ltot


def resnet_block(x, p, H, W, alpha=0.1):
    """Whole ResnetBlock (conv_0 + conv_1 + shortcut + residual) in one call."""
    B, cin, HW = x.shape
    chid = p["w0"].shape[0]
    cout = p["w1"].shape[0]
    _, P, Ltot = _halo_geometry(H, W)
    ws = p.get("ws")
    if ws is None:
        kernel = functools.partial(_resblock_kernel, H=H, W=W, P=P, alpha=alpha)
        in_specs = [_act_spec(x.shape), _full_spec(p["w0"].shape),
                    _full_spec(p["b0"].shape), _full_spec(p["w1"].shape),
                    _full_spec(p["b1"].shape)]
        args = (x, p["w0"], p["b0"], p["w1"], p["b1"])
    else:
        kernel = functools.partial(_resblock_s_kernel, H=H, W=W, P=P, alpha=alpha)
        in_specs = [_act_spec(x.shape), _full_spec(p["w0"].shape),
                    _full_spec(p["b0"].shape), _full_spec(p["w1"].shape),
                    _full_spec(p["b1"].shape), _full_spec(ws.shape)]
        args = (x, p["w0"], p["b0"], p["w1"], p["b1"], ws)
    return pl.pallas_call(
        kernel,
        out_shape=jax.ShapeDtypeStruct((B, cout, HW), jnp.bfloat16),
        grid=(B,),
        in_specs=in_specs,
        out_specs=pl.BlockSpec((1, cout, HW), lambda i: (i, 0, 0)),
        scratch_shapes=[pltpu.VMEM((cin, Ltot), jnp.float32),
                        pltpu.VMEM((chid, Ltot), jnp.float32)],
        compiler_params=_cparams(),
    )(*args)


def conv_img(x, w, b, H, W):
    """Final image conv: tanh(conv3x3(actvn(x)) + b), f32 output."""
    B, cin, HW = x.shape
    cout = w.shape[0]
    _, P, Ltot = _halo_geometry(H, W)
    kernel = functools.partial(_convimg_kernel, H=H, W=W, P=P)
    return pl.pallas_call(
        kernel,
        out_shape=jax.ShapeDtypeStruct((B, cout, HW), jnp.float32),
        grid=(B,),
        in_specs=[_act_spec(x.shape), _full_spec(w.shape), _full_spec(b.shape)],
        out_specs=pl.BlockSpec((1, cout, HW), lambda i: (i, 0, 0)),
        scratch_shapes=[pltpu.VMEM((cin, Ltot), jnp.float32)],
        compiler_params=_cparams(),
    )(x, w, b)


def fc(z, w, b):
    """fc(z) = z @ w + b. Single-shot when the weight fits comfortably in VMEM,
    otherwise lane-tiled over the output dim (per-step overhead amortized)."""
    B, zd = z.shape
    dout = w.shape[1]
    budget = 4 * 1024 * 1024
    tn = dout
    if zd * dout * 2 > budget:            # bf16 weight tile too big -> tile lanes
        for cand in (4096, 2048, 1024, 512, 256, 128):
            if dout % cand == 0 and zd * cand * 2 <= budget:
                tn = cand
                break
    return pl.pallas_call(
        _fc_kernel,
        out_shape=jax.ShapeDtypeStruct((B, dout), jnp.bfloat16),
        grid=(dout // tn,),
        in_specs=[
            pl.BlockSpec((B, zd), lambda j: (0, 0)),
            pl.BlockSpec((zd, tn), lambda j: (0, j)),
            pl.BlockSpec((1, tn), lambda j: (0, j)),
        ],
        out_specs=pl.BlockSpec((B, tn), lambda j: (0, j)),
        compiler_params=_cparams(),
    )(z, w, b.reshape(1, dout))


# ----------------------------------------------------------------------------
# Model glue (Generator forward)
# ----------------------------------------------------------------------------
def upsample2x(x_flat, H, W):
    # nn.Upsample(scale_factor=2), nearest  (XLA layout glue between kernels)
    B, C, _ = x_flat.shape
    xv = x_flat.reshape(B, C, H, W)
    xv = jnp.repeat(jnp.repeat(xv, 2, axis=2), 2, axis=3)
    return xv.reshape(B, C, 4 * H * W)


def generator_forward(z, params):
    B = z.shape[0]
    s0 = 4                                              # static (matches torch module)
    dout = params["fc_w"].shape[1]                      # static under jit
    nf0 = dout // (s0 * s0)

    out = fc(z.astype(jnp.bfloat16), params["fc_w"], params["fc_b"])   # (B, nf0*16) bf16
    out = out.reshape(B, nf0, s0 * s0)                  # NCHW flattened: (B, C, HW)
    H = W = s0

    blocks = params["blocks"]
    for idx, blk in enumerate(blocks):
        out = resnet_block(out, blk, H, W)
        if idx < len(blocks) - 1:                       # every block but the last upsamples
            out = upsample2x(out, H, W)
            H, W = 2 * H, 2 * W

    out = conv_img(out, params["img_w"], params["img_b"], H, W)         # tanh fused, f32
    return out.reshape(B, 3, H, W)                      # NCHW, like the torch module


# ----------------------------------------------------------------------------
# Deterministic parameter construction (mirrors the torch module's __init__)
# ----------------------------------------------------------------------------
def _oihw_to_mxu(w_oihw):
    # (Cout, Cin, 3, 3) -> (Cout, 3, 3, Cin) -> (Cout, 9*Cin); column index
    # (ky*3 + kx)*Cin + ci matches the in-kernel tap ordering.  Stored bf16.
    o, i, kh, kw = w_oihw.shape
    return jnp.transpose(w_oihw, (0, 2, 3, 1)).reshape(o, kh * kw * i).astype(jnp.bfloat16)


def make_generator_params(key, z_dim, size, final_channels=64,
                          max_channels=1024, scale=0.05):
    assert size >= 4 and (size & (size - 1)) == 0
    s0 = 4
    nf = final_channels
    nf_max = max_channels
    num_layers = (size // s0).bit_length() - 1          # exact log2 for powers of 2
    nf0 = min(nf_max, nf * 2 ** num_layers)

    keys = iter(jax.random.split(key, 128))

    def rnd(shape):
        return scale * jax.random.normal(next(keys), shape, jnp.float32)

    params = {}
    # fc: nn.Linear(z_dim, nf0*s0*s0) (torch weight is (out,in) -> stored as (in,out))
    params["fc_w"] = rnd((z_dim, nf0 * s0 * s0)).astype(jnp.bfloat16)
    params["fc_b"] = rnd((nf0 * s0 * s0,))

    blocks = []
    for i in range(num_layers):
        fin = min(nf * 2 ** (num_layers - i), nf_max)
        fout = min(nf * 2 ** (num_layers - i - 1), nf_max)
        fhidden = min(fin, fout)
        blk = {
            "w0": _oihw_to_mxu(rnd((fhidden, fin, 3, 3))),
            "b0": rnd((fhidden, 1)),
            "w1": _oihw_to_mxu(rnd((fout, fhidden, 3, 3))),
            "b1": rnd((fout, 1)),
        }
        if fin != fout:
            # conv_s: (fout, fin, 1, 1), bias=False -> (Cout, Cin) bf16
            blk["ws"] = rnd((fout, fin, 1, 1))[:, :, 0, 0].astype(jnp.bfloat16)
        blocks.append(blk)

    # final ResnetBlock(nf, nf): identity shortcut, no upsample after it
    blocks.append({
        "w0": _oihw_to_mxu(rnd((nf, nf, 3, 3))),
        "b0": rnd((nf, 1)),
        "w1": _oihw_to_mxu(rnd((nf, nf, 3, 3))),
        "b1": rnd((nf, 1)),
    })
    params["blocks"] = blocks

    # conv_img: Conv2d(nf, 3, 3, padding=1)
    params["img_w"] = _oihw_to_mxu(rnd((3, nf, 3, 3)))
    params["img_b"] = rnd((3, 1))
    return params


# ----------------------------------------------------------------------------
if __name__ == "__main__":
    # Small configuration: z_dim=32, size=16, final_channels=8, max_channels=32
    # -> fc: 32 -> 32*4*4, blocks: Res(32,16)+Up, Res(16,8)+Up, Res(8,8),
    #    conv_img: 8 -> 3, output (B, 3, 16, 16)
    Z_DIM, SIZE, NF, NF_MAX, BATCH = 32, 16, 8, 32, 2

    key = jax.random.PRNGKey(0)
    pkey, zkey = jax.random.split(key)
    params = make_generator_params(pkey, Z_DIM, SIZE, NF, NF_MAX)
    z = jax.random.normal(zkey, (BATCH, Z_DIM), jnp.float32)

    out = jax.jit(generator_forward)(z, params)
    out = jax.block_until_ready(out)

    assert out.shape == (BATCH, 3, SIZE, SIZE), out.shape
    assert bool(jnp.all(jnp.isfinite(out)))
    assert bool(jnp.all(jnp.abs(out) <= 1.0))  # tanh output range
    print("KERNEL_OK")
</pallas_src>

<mosaic_0001>
module attributes {stable_mosaic.version = 11 : i64} {
  func.func @_fc_kernel(%arg0: i32, %arg1: memref<2x32xbf16, #tpu.memory_space<vmem>>, %arg2: memref<32x512xbf16, #tpu.memory_space<vmem>>, %arg3: memref<1x512xf32, #tpu.memory_space<vmem>>, %arg4: memref<2x512xbf16, #tpu.memory_space<vmem>>) attributes {dimension_semantics = [#tpu.dimension_semantics<parallel>], iteration_bounds = array<i64: 1>, scalar_prefetch = 0 : i64, scratch_operands = 0 : i64, tpu.core_type = #tpu.core_type<tc>, window_params = [{pipeline_mode = #tpu.pipeline_mode<synchronous>, transform_indices = @transform_0, window_bounds = array<i64: 2, 32>}, {transform_indices = @transform_1, window_bounds = array<i64: 32, 512>}, {transform_indices = @transform_2, window_bounds = array<i64: 1, 512>}, {transform_indices = @transform_3, window_bounds = array<i64: 2, 512>}]} {
    %c0 = arith.constant 0 : index
    %c0_0 = arith.constant 0 : index
    %0 = vector.load %arg1[%c0, %c0_0] : memref<2x32xbf16, #tpu.memory_space<vmem>>, vector<2x32xbf16>
    %c0_1 = arith.constant 0 : index
    %c0_2 = arith.constant 0 : index
    %1 = vector.load %arg2[%c0_1, %c0_2] : memref<32x512xbf16, #tpu.memory_space<vmem>>, vector<32x512xbf16>
    %cst = arith.constant dense<0.000000e+00> : vector<2x512xf32>
    %2 = tpu.matmul %0, %1, %cst {dimension_numbers = #tpu.dot_dimension_numbers<[1], [0], [0], [1], [0, 0, 1, 1], [], []>} : vector<2x32xbf16>, vector<32x512xbf16>, vector<2x512xf32> -> vector<2x512xf32>
    %c0_3 = arith.constant 0 : index
    %c0_4 = arith.constant 0 : index
    %3 = vector.load %arg3[%c0_3, %c0_4] : memref<1x512xf32, #tpu.memory_space<vmem>>, vector<1x512xf32>
    %4 = vector.broadcast %3 : vector<1x512xf32> to vector<2x512xf32>
    %5 = arith.addf %2, %4 : vector<2x512xf32>
    %6 = arith.truncf %5 : vector<2x512xf32> to vector<2x512xbf16>
    %c0_5 = arith.constant 0 : index
    %c0_6 = arith.constant 0 : index
    %7 = vector.load %arg4[%c0_5, %c0_6] : memref<2x512xbf16, #tpu.memory_space<vmem>>, vector<2x512xbf16>
    tpu.vector_store %arg4[%c0_5, %c0_6], %6 {strides = array<i32>} : memref<2x512xbf16, #tpu.memory_space<vmem>>, vector<2x512xbf16>,
    return
  }
  func.func @transform_0(%arg0: i32) -> (i32, i32) {
    %c0_i32 = arith.constant 0 : i32
    %c0_i32_0 = arith.constant 0 : i32
    %c0_i32_1 = arith.constant 0 : i32
    return %c0_i32, %c0_i32_0 : i32, i32
  }
  func.func @transform_1(%arg0: i32) -> (i32, i32) {
    %c0_i32 = arith.constant 0 : i32
    %c0_i32_0 = arith.constant 0 : i32
    return %c0_i32, %arg0 : i32, i32
  }
  func.func @transform_2(%arg0: i32) -> (i32, i32) {
    %c0_i32 = arith.constant 0 : i32
    %c0_i32_0 = arith.constant 0 : i32
    return %c0_i32, %arg0 : i32, i32
  }
  func.func @transform_3(%arg0: i32) -> (i32, i32) {
    %c0_i32 = arith.constant 0 : i32
    %c0_i32_0 = arith.constant 0 : i32
    return %c0_i32, %arg0 : i32, i32
  }
}

module attributes {stable_mosaic.version = 11 : i64} {
  func.func @_resblock_s_kernel(%arg0: i32, %arg1: memref<1x32x16xbf16, #tpu.memory_space<vmem>>, %arg2: memref<16x288xbf16, #tpu.memory_space<vmem>>, %arg3: memref<16x1xf32, #tpu.memory_space<vmem>>, %arg4: memref<16x144xbf16, #tpu.memory_space<vmem>>, %arg5: memref<16x1xf32, #tpu.memory_space<vmem>>, %arg6: memref<16x32xbf16, #tpu.memory_space<vmem>>, %arg7: memref<1x16x16xbf16, #tpu.memory_space<vmem>>, %arg8: memref<32x256xf32, #tpu.memory_space<vmem>>, %arg9: memref<16x256xf32, #tpu.memory_space<vmem>>) attributes {dimension_semantics = [#tpu.dimension_semantics<parallel>], iteration_bounds = array<i64: 2>, scalar_prefetch = 0 : i64, scratch_operands = 2 : i64, tpu.core_type = #tpu.core_type<tc>, window_params = [{transform_indices = @transform_0, window_bounds = array<i64: 1, 32, 16>}, {pipeline_mode = #tpu.pipeline_mode<synchronous>, transform_indices = @transform_1, window_bounds = array<i64: 16, 288>}, {pipeline_mode = #tpu.pipeline_mode<synchronous>, transform_indices = @transform_2, window_bounds = array<i64: 16, 1>}, {pipeline_mode = #tpu.pipeline_mode<synchronous>, transform_indices = @transform_3, window_bounds = array<i64: 16, 144>}, {pipeline_mode = #tpu.pipeline_mode<synchronous>, transform_indices = @transform_4, window_bounds = array<i64: 16, 1>}, {pipeline_mode = #tpu.pipeline_mode<synchronous>, transform_indices = @transform_5, window_bounds = array<i64: 16, 32>}, {transform_indices = @transform_6, window_bounds = array<i64: 1, 16, 16>}]} {
    %c0 = arith.constant 0 : index
    %c0_0 = arith.constant 0 : index
    %c0_1 = arith.constant 0 : index
    %0 = vector.load %arg1[%c0, %c0_0, %c0_1] : memref<1x32x16xbf16, #tpu.memory_space<vmem>>, vector<1x32x16xbf16>
    %1 = vector.shape_cast %0 : vector<1x32x16xbf16> to vector<32x16xbf16>
    %c0_2 = arith.constant 0 : index
    %c0_3 = arith.constant 0 : index
    %2 = vector.load %arg2[%c0_2, %c0_3] : memref<16x288xbf16, #tpu.memory_space<vmem>>, vector<16x288xbf16>
    %c0_4 = arith.constant 0 : index
    %c0_5 = arith.constant 0 : index
    %3 = vector.load %arg3[%c0_4, %c0_5] : memref<16x1xf32, #tpu.memory_space<vmem>>, vector<16x1xf32>
    %c0_6 = arith.constant 0 : index
    %c0_7 = arith.constant 0 : index
    %4 = vector.load %arg4[%c0_6, %c0_7] : memref<16x144xbf16, #tpu.memory_space<vmem>>, vector<16x144xbf16>
    %c0_8 = arith.constant 0 : index
    %c0_9 = arith.constant 0 : index
    %5 = vector.load %arg5[%c0_8, %c0_9] : memref<16x1xf32, #tpu.memory_space<vmem>>, vector<16x1xf32>
    %6 = tpu.iota {dimensions = array<i32: 1>} : vector<1x16xi32>
    %c4_i32 = arith.constant 4 : i32
    %c0_i32 = arith.constant 0 : i32
    %7 = arith.cmpi eq, %c4_i32, %c0_i32 : i32
    %c1_i32 = arith.constant 1 : i32
    %8 = arith.select %7, %c1_i32, %c4_i32 : i32
    %9 = vector.broadcast %8 : i32 to vector<1x16xi32>
    %10 = arith.remsi %6, %9 : vector<1x16xi32>
    %c0_i32_10 = arith.constant 0 : i32
    %11 = vector.broadcast %c0_i32_10 : i32 to vector<1x16xi32>
    %12 = arith.cmpi ne, %10, %11 : vector<1x16xi32>
    %c0_i32_11 = arith.constant 0 : i32
    %13 = vector.broadcast %c0_i32_11 : i32 to vector<1x16xi32>
    %14 = arith.cmpi slt, %10, %13 : vector<1x16xi32>
    %c0_i32_12 = arith.constant 0 : i32
    %15 = arith.cmpi slt, %8, %c0_i32_12 : i32
    %16 = vector.broadcast %15 : i1 to vector<1x16xi1>
    %17 = vector.broadcast %16 : vector<1x16xi1> to vector<1x16xi1>
    %18 = arith.xori %14, %17 : vector<1x16xi1>
    %19 = arith.andi %18, %12 : vector<1x16xi1>
    %20 = vector.broadcast %8 : i32 to vector<1x16xi32>
    %21 = arith.addi %10, %20 : vector<1x16xi32>
    %22 = arith.select %19, %21, %10 : vector<1x16xi1>, vector<1x16xi32>
    %c0_i32_13 = arith.constant 0 : i32
    %23 = vector.broadcast %c0_i32_13 : i32 to vector<1x16xi32>
    %24 = arith.cmpi sgt, %22, %23 : vector<1x16xi32>
    %c3_i32 = arith.constant 3 : i32
    %25 = vector.broadcast %c3_i32 : i32 to vector<1x16xi32>
    %26 = arith.cmpi slt, %22, %25 : vector<1x16xi32>
    %27 = arith.extf %1 : vector<32x16xbf16> to vector<32x16xf32>
    %cst = arith.constant 2.000000e-01 : f32
    %28 = vector.broadcast %cst : f32 to vector<32x16xf32>
    %29 = arith.mulf %28, %27 : vector<32x16xf32>
    %30 = arith.maximumf %27, %29 : vector<32x16xf32>
    %cst_14 = arith.constant 0.000000e+00 : f32
    %31 = vector.broadcast %cst_14 : f32 to vector<32x256xf32>
    %c0_15 = arith.constant 0 : index
    %c0_16 = arith.constant 0 : index
    %32 = vector.load %arg8[%c0_15, %c0_16] : memref<32x256xf32, #tpu.memory_space<vmem>>, vector<32x256xf32>
    tpu.vector_store %arg8[%c0_15, %c0_16], %31 {strides = array<i32>} : memref<32x256xf32, #tpu.memory_space<vmem>>, vector<32x256xf32>,
    %c0_17 = arith.constant 0 : index
    %c128 = arith.constant 128 : index
    %33 = vector.load %arg8[%c0_17, %c128] : memref<32x256xf32, #tpu.memory_space<vmem>>, vector<32x16xf32>
    tpu.vector_store %arg8[%c0_17, %c128], %30 {strides = array<i32>} : memref<32x256xf32, #tpu.memory_space<vmem>>, vector<32x16xf32>,
    %c0_18 = arith.constant 0 : index
    %c0_19 = arith.constant 0 : index
    %34 = vector.load %arg8[%c0_18, %c0_19] : memref<32x256xf32, #tpu.memory_space<vmem>>, vector<32x256xf32>
    %35 = vector.extract_strided_slice %34 {offsets = [0, 123], sizes = [32, 16], strides = [1, 1]} : vector<32x256xf32> to vector<32x16xf32>
    %cst_20 = arith.constant 0.000000e+00 : f32
    %36 = vector.broadcast %cst_20 : f32 to vector<32x16xf32>
    %37 = vector.shape_cast %24 : vector<1x16xi1> to vector<1x16xi1>
    %38 = vector.broadcast %37 : vector<1x16xi1> to vector<32x16xi1>
    %39 = arith.select %38, %35, %36 : vector<32x16xi1>, vector<32x16xf32>
    %40 = vector.extract_strided_slice %34 {offsets = [0, 124], sizes = [32, 16], strides = [1, 1]} : vector<32x256xf32> to vector<32x16xf32>
    %41 = vector.extract_strided_slice %34 {offsets = [0, 125], sizes = [32, 16], strides = [1, 1]} : vector<32x256xf32> to vector<32x16xf32>
    %cst_21 = arith.constant 0.000000e+00 : f32
    %42 = vector.broadcast %cst_21 : f32 to vector<32x16xf32>
    %43 = vector.shape_cast %26 : vector<1x16xi1> to vector<1x16xi1>
    %44 = vector.broadcast %43 : vector<1x16xi1> to vector<32x16xi1>
    %45 = arith.select %44, %41, %42 : vector<32x16xi1>, vector<32x16xf32>
    %46 = vector.extract_strided_slice %34 {offsets = [0, 127], sizes = [32, 16], strides = [1, 1]} : vector<32x256xf32> to vector<32x16xf32>
    %cst_22 = arith.constant 0.000000e+00 : f32
    %47 = vector.broadcast %cst_22 : f32 to vector<32x16xf32>
    %48 = vector.shape_cast %24 : vector<1x16xi1> to vector<1x16xi1>
    %49 = vector.broadcast %48 : vector<1x16xi1> to vector<32x16xi1>
    %50 = arith.select %49, %46, %47 : vector<32x16xi1>, vector<32x16xf32>
    %51 = vector.extract_strided_slice %34 {offsets = [0, 128], sizes = [32, 16], strides = [1, 1]} : vector<32x256xf32> to vector<32x16xf32>
    %52 = vector.extract_strided_slice %34 {offsets = [0, 129], sizes = [32, 16], strides = [1, 1]} : vector<32x256xf32> to vector<32x16xf32>
    %cst_23 = arith.constant 0.000000e+00 : f32
    %53 = vector.broadcast %cst_23 : f32 to vector<32x16xf32>
    %54 = vector.shape_cast %26 : vector<1x16xi1> to vector<1x16xi1>
    %55 = vector.broadcast %54 : vector<1x16xi1> to vector<32x16xi1>
    %56 = arith.select %55, %52, %53 : vector<32x16xi1>, vector<32x16xf32>
    %57 = vector.extract_strided_slice %34 {offsets = [0, 131], sizes = [32, 16], strides = [1, 1]} : vector<32x256xf32> to vector<32x16xf32>
    %cst_24 = arith.constant 0.000000e+00 : f32
    %58 = vector.broadcast %cst_24 : f32 to vector<32x16xf32>
    %59 = vector.shape_cast %24 : vector<1x16xi1> to vector<1x16xi1>
    %60 = vector.broadcast %59 : vector<1x16xi1> to vector<32x16xi1>
    %61 = arith.select %60, %57, %58 : vector<32x16xi1>, vector<32x16xf32>
    %62 = vector.extract_strided_slice %34 {offsets = [0, 132], sizes = [32, 16], strides = [1, 1]} : vector<32x256xf32> to vector<32x16xf32>
    %63 = vector.extract_strided_slice %34 {offsets = [0, 133], sizes = [32, 16], strides = [1, 1]} : vector<32x256xf32> to vector<32x16xf32>
    %cst_25 = arith.constant 0.000000e+00 : f32
    %64 = vector.broadcast %cst_25 : f32 to vector<32x16xf32>
    %65 = vector.shape_cast %26 : vector<1x16xi1> to vector<1x16xi1>
    %66 = vector.broadcast %65 : vector<1x16xi1> to vector<32x16xi1>
    %67 = arith.select %66, %63, %64 : vector<32x16xi1>, vector<32x16xf32>
    %68 = tpu.concatenate %39, %40, %45, %50, %51, %56, %61, %62, %67 in 0 : vector<32x16xf32>, vector<32x16xf32>, vector<32x16xf32>, vector<32x16xf32>, vector<32x16xf32>, vector<32x16xf32>, vector<32x16xf32>, vector<32x16xf32>, vector<32x16xf32> -> vector<288x16xf32>
    %69 = arith.truncf %68 : vector<288x16xf32> to vector<288x16xbf16>
    %cst_26 = arith.constant dense<0.000000e+00> : vector<16x16xf32>
    %70 = tpu.matmul %2, %69, %cst_26 {dimension_numbers = #tpu.dot_dimension_numbers<[1], [0], [0], [1], [0, 0, 1, 1], [], []>} : vector<16x288xbf16>, vector<288x16xbf16>, vector<16x16xf32> -> vector<16x16xf32>
    %71 = vector.broadcast %3 : vector<16x1xf32> to vector<16x16xf32>
    %72 = arith.addf %70, %71 : vector<16x16xf32>
    %cst_27 = arith.constant 2.000000e-01 : f32
    %73 = vector.broadcast %cst_27 : f32 to vector<16x16xf32>
    %74 = arith.mulf %73, %72 : vector<16x16xf32>
    %75 = arith.maximumf %72, %74 : vector<16x16xf32>
    %cst_28 = arith.constant 0.000000e+00 : f32
    %76 = vector.broadcast %cst_28 : f32 to vector<16x256xf32>
    %c0_29 = arith.constant 0 : index
    %c0_30 = arith.constant 0 : index
    %77 = vector.load %arg9[%c0_29, %c0_30] : memref<16x256xf32, #tpu.memory_space<vmem>>, vector<16x256xf32>
    tpu.vector_store %arg9[%c0_29, %c0_30], %76 {strides = array<i32>} : memref<16x256xf32, #tpu.memory_space<vmem>>, vector<16x256xf32>,
    %c0_31 = arith.constant 0 : index
    %c128_32 = arith.constant 128 : index
    %78 = vector.load %arg9[%c0_31, %c128_32] : memref<16x256xf32, #tpu.memory_space<vmem>>, vector<16x16xf32>
    tpu.vector_store %arg9[%c0_31, %c128_32], %75 {strides = array<i32>} : memref<16x256xf32, #tpu.memory_space<vmem>>, vector<16x16xf32>,
    %c0_33 = arith.constant 0 : index
    %c0_34 = arith.constant 0 : index
    %79 = vector.load %arg9[%c0_33, %c0_34] : memref<16x256xf32, #tpu.memory_space<vmem>>, vector<16x256xf32>
    %80 = vector.extract_strided_slice %79 {offsets = [0, 123], sizes = [16, 16], strides = [1, 1]} : vector<16x256xf32> to vector<16x16xf32>
    %cst_35 = arith.constant 0.000000e+00 : f32
    %81 = vector.broadcast %cst_35 : f32 to vector<16x16xf32>
    %82 = vector.shape_cast %24 : vector<1x16xi1> to vector<1x16xi1>
    %83 = vector.broadcast %82 : vector<1x16xi1> to vector<16x16xi1>
    %84 = arith.select %83, %80, %81 : vector<16x16xi1>, vector<16x16xf32>
    %85 = vector.extract_strided_slice %79 {offsets = [0, 124], sizes = [16, 16], strides = [1, 1]} : vector<16x256xf32> to vector<16x16xf32>
    %86 = vector.extract_strided_slice %79 {offsets = [0, 125], sizes = [16, 16], strides = [1, 1]} : vector<16x256xf32> to vector<16x16xf32>
    %cst_36 = arith.constant 0.000000e+00 : f32
    %87 = vector.broadcast %cst_36 : f32 to vector<16x16xf32>
    %88 = vector.shape_cast %26 : vector<1x16xi1> to vector<1x16xi1>
    %89 = vector.broadcast %88 : vector<1x16xi1> to vector<16x16xi1>
    %90 = arith.select %89, %86, %87 : vector<16x16xi1>, vector<16x16xf32>
    %91 = vector.extract_strided_slice %79 {offsets = [0, 127], sizes = [16, 16], strides = [1, 1]} : vector<16x256xf32> to vector<16x16xf32>
    %cst_37 = arith.constant 0.000000e+00 : f32
    %92 = vector.broadcast %cst_37 : f32 to vector<16x16xf32>
    %93 = vector.shape_cast %24 : vector<1x16xi1> to vector<1x16xi1>
    %94 = vector.broadcast %93 : vector<1x16xi1> to vector<16x16xi1>
    %95 = arith.select %94, %91, %92 : vector<16x16xi1>, vector<16x16xf32>
    %96 = vector.extract_strided_slice %79 {offsets = [0, 128], sizes = [16, 16], strides = [1, 1]} : vector<16x256xf32> to vector<16x16xf32>
    %97 = vector.extract_strided_slice %79 {offsets = [0, 129], sizes = [16, 16], strides = [1, 1]} : vector<16x256xf32> to vector<16x16xf32>
    %cst_38 = arith.constant 0.000000e+00 : f32
    %98 = vector.broadcast %cst_38 : f32 to vector<16x16xf32>
    %99 = vector.shape_cast %26 : vector<1x16xi1> to vector<1x16xi1>
    %100 = vector.broadcast %99 : vector<1x16xi1> to vector<16x16xi1>
    %101 = arith.select %100, %97, %98 : vector<16x16xi1>, vector<16x16xf32>
    %102 = vector.extract_strided_slice %79 {offsets = [0, 131], sizes = [16, 16], strides = [1, 1]} : vector<16x256xf32> to vector<16x16xf32>
    %cst_39 = arith.constant 0.000000e+00 : f32
    %103 = vector.broadcast %cst_39 : f32 to vector<16x16xf32>
    %104 = vector.shape_cast %24 : vector<1x16xi1> to vector<1x16xi1>
    %105 = vector.broadcast %104 : vector<1x16xi1> to vector<16x16xi1>
    %106 = arith.select %105, %102, %103 : vector<16x16xi1>, vector<16x16xf32>
    %107 = vector.extract_strided_slice %79 {offsets = [0, 132], sizes = [16, 16], strides = [1, 1]} : vector<16x256xf32> to vector<16x16xf32>
    %108 = vector.extract_strided_slice %79 {offsets = [0, 133], sizes = [16, 16], strides = [1, 1]} : vector<16x256xf32> to vector<16x16xf32>
    %cst_40 = arith.constant 0.000000e+00 : f32
    %109 = vector.broadcast %cst_40 : f32 to vector<16x16xf32>
    %110 = vector.shape_cast %26 : vector<1x16xi1> to vector<1x16xi1>
    %111 = vector.broadcast %110 : vector<1x16xi1> to vector<16x16xi1>
    %112 = arith.select %111, %108, %109 : vector<16x16xi1>, vector<16x16xf32>
    %113 = tpu.concatenate %84, %85, %90, %95, %96, %101, %106, %107, %112 in 0 : vector<16x16xf32>, vector<16x16xf32>, vector<16x16xf32>, vector<16x16xf32>, vector<16x16xf32>, vector<16x16xf32>, vector<16x16xf32>, vector<16x16xf32>, vector<16x16xf32> -> vector<144x16xf32>
    %114 = arith.truncf %113 : vector<144x16xf32> to vector<144x16xbf16>
    %cst_41 = arith.constant dense<0.000000e+00> : vector<16x16xf32>
    %115 = tpu.matmul %4, %114, %cst_41 {dimension_numbers = #tpu.dot_dimension_numbers<[1], [0], [0], [1], [0, 0, 1, 1], [], []>} : vector<16x144xbf16>, vector<144x16xbf16>, vector<16x16xf32> -> vector<16x16xf32>
    %116 = vector.broadcast %5 : vector<16x1xf32> to vector<16x16xf32>
    %117 = arith.addf %115, %116 : vector<16x16xf32>
    %c0_42 = arith.constant 0 : index
    %c0_43 = arith.constant 0 : index
    %118 = vector.load %arg6[%c0_42, %c0_43] : memref<16x32xbf16, #tpu.memory_space<vmem>>, vector<16x32xbf16>
    %cst_44 = arith.constant dense<0.000000e+00> : vector<16x16xf32>
    %119 = tpu.matmul %118, %1, %cst_44 {dimension_numbers = #tpu.dot_dimension_numbers<[1], [0], [0], [1], [0, 0, 1, 1], [], []>} : vector<16x32xbf16>, vector<32x16xbf16>, vector<16x16xf32> -> vector<16x16xf32>
    %cst_45 = arith.constant 1.000000e-01 : f32
    %120 = vector.broadcast %cst_45 : f32 to vector<16x16xf32>
    %121 = arith.mulf %120, %117 : vector<16x16xf32>
    %122 = arith.addf %119, %121 : vector<16x16xf32>
    %123 = arith.truncf %122 : vector<16x16xf32> to vector<16x16xbf16>
    %c0_46 = arith.constant 0 : index
    %c0_47 = arith.constant 0 : index
    %c0_48 = arith.constant 0 : index
    %124 = vector.load %arg7[%c0_46, %c0_47, %c0_48] : memref<1x16x16xbf16, #tpu.memory_space<vmem>>, vector<1x16x16xbf16>
    %125 = vector.shape_cast %124 : vector<1x16x16xbf16> to vector<16x16xbf16>
    %126 = vector.shape_cast %123 : vector<16x16xbf16> to vector<1x16x16xbf16>
    tpu.vector_store %arg7[%c0_46, %c0_47, %c0_48], %126 {strides = array<i32>} : memref<1x16x16xbf16, #tpu.memory_space<vmem>>, vector<1x16x16xbf16>,
    return
  }
  func.func @transform_0(%arg0: i32) -> (i32, i32, i32) {
    %c0_i32 = arith.constant 0 : i32
    %c0_i32_0 = arith.constant 0 : i32
    %c0_i32_1 = arith.constant 0 : i32
    return %arg0, %c0_i32, %c0_i32_0 : i32, i32, i32
  }
  func.func @transform_1(%arg0: i32) -> (i32, i32) {
    %c0_i32 = arith.constant 0 : i32
    %c0_i32_0 = arith.constant 0 : i32
    %c0_i32_1 = arith.constant 0 : i32
    return %c0_i32, %c0_i32_0 : i32, i32
  }
  func.func @transform_2(%arg0: i32) -> (i32, i32) {
    %c0_i32 = arith.constant 0 : i32
    %c0_i32_0 = arith.constant 0 : i32
    %c0_i32_1 = arith.constant 0 : i32
    return %c0_i32, %c0_i32_0 : i32, i32
  }
  func.func @transform_3(%arg0: i32) -> (i32, i32) {
    %c0_i32 = arith.constant 0 : i32
    %c0_i32_0 = arith.constant 0 : i32
    %c0_i32_1 = arith.constant 0 : i32
    return %c0_i32, %c0_i32_0 : i32, i32
  }
  func.func @transform_4(%arg0: i32) -> (i32, i32) {
    %c0_i32 = arith.constant 0 : i32
    %c0_i32_0 = arith.constant 0 : i32
    %c0_i32_1 = arith.constant 0 : i32
    return %c0_i32, %c0_i32_0 : i32, i32
  }
  func.func @transform_5(%arg0: i32) -> (i32, i32) {
    %c0_i32 = arith.constant 0 : i32
    %c0_i32_0 = arith.constant 0 : i32
    %c0_i32_1 = arith.constant 0 : i32
    return %c0_i32, %c0_i32_0 : i32, i32
  }
  func.func @transform_6(%arg0: i32) -> (i32, i32, i32) {
    %c0_i32 = arith.constant 0 : i32
    %c0_i32_0 = arith.constant 0 : i32
    %c0_i32_1 = arith.constant 0 : i32
    return %arg0, %c0_i32, %c0_i32_0 : i32, i32, i32
  }
}

module attributes {stable_mosaic.version = 11 : i64} {
  func.func @_resblock_s_kernel(%arg0: i32, %arg1: memref<1x16x64xbf16, #tpu.memory_space<vmem>>, %arg2: memref<8x144xbf16, #tpu.memory_space<vmem>>, %arg3: memref<8x1xf32, #tpu.memory_space<vmem>>, %arg4: memref<8x72xbf16, #tpu.memory_space<vmem>>, %arg5: memref<8x1xf32, #tpu.memory_space<vmem>>, %arg6: memref<8x16xbf16, #tpu.memory_space<vmem>>, %arg7: memref<1x8x64xbf16, #tpu.memory_space<vmem>>, %arg8: memref<16x256xf32, #tpu.memory_space<vmem>>, %arg9: memref<8x256xf32, #tpu.memory_space<vmem>>) attributes {dimension_semantics = [#tpu.dimension_semantics<parallel>], iteration_bounds = array<i64: 2>, scalar_prefetch = 0 : i64, scratch_operands = 2 : i64, tpu.core_type = #tpu.core_type<tc>, window_params = [{transform_indices = @transform_0, window_bounds = array<i64: 1, 16, 64>}, {pipeline_mode = #tpu.pipeline_mode<synchronous>, transform_indices = @transform_1, window_bounds = array<i64: 8, 144>}, {pipeline_mode = #tpu.pipeline_mode<synchronous>, transform_indices = @transform_2, window_bounds = array<i64: 8, 1>}, {pipeline_mode = #tpu.pipeline_mode<synchronous>, transform_indices = @transform_3, window_bounds = array<i64: 8, 72>}, {pipeline_mode = #tpu.pipeline_mode<synchronous>, transform_indices = @transform_4, window_bounds = array<i64: 8, 1>}, {pipeline_mode = #tpu.pipeline_mode<synchronous>, transform_indices = @transform_5, window_bounds = array<i64: 8, 16>}, {transform_indices = @transform_6, window_bounds = array<i64: 1, 8, 64>}]} {
    %c0 = arith.constant 0 : index
    %c0_0 = arith.constant 0 : index
    %c0_1 = arith.constant 0 : index
    %0 = vector.load %arg1[%c0, %c0_0, %c0_1] : memref<1x16x64xbf16, #tpu.memory_space<vmem>>, vector<1x16x64xbf16>
    %1 = vector.shape_cast %0 : vector<1x16x64xbf16> to vector<16x64xbf16>
    %c0_2 = arith.constant 0 : index
    %c0_3 = arith.constant 0 : index
    %2 = vector.load %arg2[%c0_2, %c0_3] : memref<8x144xbf16, #tpu.memory_space<vmem>>, vector<8x144xbf16>
    %c0_4 = arith.constant 0 : index
    %c0_5 = arith.constant 0 : index
    %3 = vector.load %arg3[%c0_4, %c0_5] : memref<8x1xf32, #tpu.memory_space<vmem>>, vector<8x1xf32>
    %c0_6 = arith.constant 0 : index
    %c0_7 = arith.constant 0 : index
    %4 = vector.load %arg4[%c0_6, %c0_7] : memref<8x72xbf16, #tpu.memory_space<vmem>>, vector<8x72xbf16>
    %c0_8 = arith.constant 0 : index
    %c0_9 = arith.constant 0 : index
    %5 = vector.load %arg5[%c0_8, %c0_9] : memref<8x1xf32, #tpu.memory_space<vmem>>, vector<8x1xf32>
    %6 = tpu.iota {dimensions = array<i32: 1>} : vector<1x64xi32>
    %c8_i32 = arith.constant 8 : i32
    %c0_i32 = arith.constant 0 : i32
    %7 = arith.cmpi eq, %c8_i32, %c0_i32 : i32
    %c1_i32 = arith.constant 1 : i32
    %8 = arith.select %7, %c1_i32, %c8_i32 : i32
    %9 = vector.broadcast %8 : i32 to vector<1x64xi32>
    %10 = arith.remsi %6, %9 : vector<1x64xi32>
    %c0_i32_10 = arith.constant 0 : i32
    %11 = vector.broadcast %c0_i32_10 : i32 to vector<1x64xi32>
    %12 = arith.cmpi ne, %10, %11 : vector<1x64xi32>
    %c0_i32_11 = arith.constant 0 : i32
    %13 = vector.broadcast %c0_i32_11 : i32 to vector<1x64xi32>
    %14 = arith.cmpi slt, %10, %13 : vector<1x64xi32>
    %c0_i32_12 = arith.constant 0 : i32
    %15 = arith.cmpi slt, %8, %c0_i32_12 : i32
    %16 = vector.broadcast %15 : i1 to vector<1x64xi1>
    %17 = vector.broadcast %16 : vector<1x64xi1> to vector<1x64xi1>
    %18 = arith.xori %14, %17 : vector<1x64xi1>
    %19 = arith.andi %18, %12 : vector<1x64xi1>
    %20 = vector.broadcast %8 : i32 to vector<1x64xi32>
    %21 = arith.addi %10, %20 : vector<1x64xi32>
    %22 = arith.select %19, %21, %10 : vector<1x64xi1>, vector<1x64xi32>
    %c0_i32_13 = arith.constant 0 : i32
    %23 = vector.broadcast %c0_i32_13 : i32 to vector<1x64xi32>
    %24 = arith.cmpi sgt, %22, %23 : vector<1x64xi32>
    %c7_i32 = arith.constant 7 : i32
    %25 = vector.broadcast %c7_i32 : i32 to vector<1x64xi32>
    %26 = arith.cmpi slt, %22, %25 : vector<1x64xi32>
    %27 = arith.extf %1 : vector<16x64xbf16> to vector<16x64xf32>
    %cst = arith.constant 2.000000e-01 : f32
    %28 = vector.broadcast %cst : f32 to vector<16x64xf32>
    %29 = arith.mulf %28, %27 : vector<16x64xf32>
    %30 = arith.maximumf %27, %29 : vector<16x64xf32>
    %cst_14 = arith.constant 0.000000e+00 : f32
    %31 = vector.broadcast %cst_14 : f32 to vector<16x256xf32>
    %c0_15 = arith.constant 0 : index
    %c0_16 = arith.constant 0 : index
    %32 = vector.load %arg8[%c0_15, %c0_16] : memref<16x256xf32, #tpu.memory_space<vmem>>, vector<16x256xf32>
    tpu.vector_store %arg8[%c0_15, %c0_16], %31 {strides = array<i32>} : memref<16x256xf32, #tpu.memory_space<vmem>>, vector<16x256xf32>,
    %c0_17 = arith.constant 0 : index
    %c128 = arith.constant 128 : index
    %33 = vector.load %arg8[%c0_17, %c128] : memref<16x256xf32, #tpu.memory_space<vmem>>, vector<16x64xf32>
    tpu.vector_store %arg8[%c0_17, %c128], %30 {strides = array<i32>} : memref<16x256xf32, #tpu.memory_space<vmem>>, vector<16x64xf32>,
    %c0_18 = arith.constant 0 : index
    %c0_19 = arith.constant 0 : index
    %34 = vector.load %arg8[%c0_18, %c0_19] : memref<16x256xf32, #tpu.memory_space<vmem>>, vector<16x256xf32>
    %35 = vector.extract_strided_slice %34 {offsets = [0, 119], sizes = [16, 64], strides = [1, 1]} : vector<16x256xf32> to vector<16x64xf32>
    %cst_20 = arith.constant 0.000000e+00 : f32
    %36 = vector.broadcast %cst_20 : f32 to vector<16x64xf32>
    %37 = vector.shape_cast %24 : vector<1x64xi1> to vector<1x64xi1>
    %38 = vector.broadcast %37 : vector<1x64xi1> to vector<16x64xi1>
    %39 = arith.select %38, %35, %36 : vector<16x64xi1>, vector<16x64xf32>
    %40 = vector.extract_strided_slice %34 {offsets = [0, 120], sizes = [16, 64], strides = [1, 1]} : vector<16x256xf32> to vector<16x64xf32>
    %41 = vector.extract_strided_slice %34 {offsets = [0, 121], sizes = [16, 64], strides = [1, 1]} : vector<16x256xf32> to vector<16x64xf32>
    %cst_21 = arith.constant 0.000000e+00 : f32
    %42 = vector.broadcast %cst_21 : f32 to vector<16x64xf32>
    %43 = vector.shape_cast %26 : vector<1x64xi1> to vector<1x64xi1>
    %44 = vector.broadcast %43 : vector<1x64xi1> to vector<16x64xi1>
    %45 = arith.select %44, %41, %42 : vector<16x64xi1>, vector<16x64xf32>
    %46 = vector.extract_strided_slice %34 {offsets = [0, 127], sizes = [16, 64], strides = [1, 1]} : vector<16x256xf32> to vector<16x64xf32>
    %cst_22 = arith.constant 0.000000e+00 : f32
    %47 = vector.broadcast %cst_22 : f32 to vector<16x64xf32>
    %48 = vector.shape_cast %24 : vector<1x64xi1> to vector<1x64xi1>
    %49 = vector.broadcast %48 : vector<1x64xi1> to vector<16x64xi1>
    %50 = arith.select %49, %46, %47 : vector<16x64xi1>, vector<16x64xf32>
    %51 = vector.extract_strided_slice %34 {offsets = [0, 128], sizes = [16, 64], strides = [1, 1]} : vector<16x256xf32> to vector<16x64xf32>
    %52 = vector.extract_strided_slice %34 {offsets = [0, 129], sizes = [16, 64], strides = [1, 1]} : vector<16x256xf32> to vector<16x64xf32>
    %cst_23 = arith.constant 0.000000e+00 : f32
    %53 = vector.broadcast %cst_23 : f32 to vector<16x64xf32>
    %54 = vector.shape_cast %26 : vector<1x64xi1> to vector<1x64xi1>
    %55 = vector.broadcast %54 : vector<1x64xi1> to vector<16x64xi1>
    %56 = arith.select %55, %52, %53 : vector<16x64xi1>, vector<16x64xf32>
    %57 = vector.extract_strided_slice %34 {offsets = [0, 135], sizes = [16, 64], strides = [1, 1]} : vector<16x256xf32> to vector<16x64xf32>
    %cst_24 = arith.constant 0.000000e+00 : f32
    %58 = vector.broadcast %cst_24 : f32 to vector<16x64xf32>
    %59 = vector.shape_cast %24 : vector<1x64xi1> to vector<1x64xi1>
    %60 = vector.broadcast %59 : vector<1x64xi1> to vector<16x64xi1>
    %61 = arith.select %60, %57, %58 : vector<16x64xi1>, vector<16x64xf32>
    %62 = vector.extract_strided_slice %34 {offsets = [0, 136], sizes = [16, 64], strides = [1, 1]} : vector<16x256xf32> to vector<16x64xf32>
    %63 = vector.extract_strided_slice %34 {offsets = [0, 137], sizes = [16, 64], strides = [1, 1]} : vector<16x256xf32> to vector<16x64xf32>
    %cst_25 = arith.constant 0.000000e+00 : f32
    %64 = vector.broadcast %cst_25 : f32 to vector<16x64xf32>
    %65 = vector.shape_cast %26 : vector<1x64xi1> to vector<1x64xi1>
    %66 = vector.broadcast %65 : vector<1x64xi1> to vector<16x64xi1>
    %67 = arith.select %66, %63, %64 : vector<16x64xi1>, vector<16x64xf32>
    %68 = tpu.concatenate %39, %40, %45, %50, %51, %56, %61, %62, %67 in 0 : vector<16x64xf32>, vector<16x64xf32>, vector<16x64xf32>, vector<16x64xf32>, vector<16x64xf32>, vector<16x64xf32>, vector<16x64xf32>, vector<16x64xf32>, vector<16x64xf32> -> vector<144x64xf32>
    %69 = arith.truncf %68 : vector<144x64xf32> to vector<144x64xbf16>
    %cst_26 = arith.constant dense<0.000000e+00> : vector<8x64xf32>
    %70 = tpu.matmul %2, %69, %cst_26 {dimension_numbers = #tpu.dot_dimension_numbers<[1], [0], [0], [1], [0, 0, 1, 1], [], []>} : vector<8x144xbf16>, vector<144x64xbf16>, vector<8x64xf32> -> vector<8x64xf32>
    %71 = vector.broadcast %3 : vector<8x1xf32> to vector<8x64xf32>
    %72 = arith.addf %70, %71 : vector<8x64xf32>
    %cst_27 = arith.constant 2.000000e-01 : f32
    %73 = vector.broadcast %cst_27 : f32 to vector<8x64xf32>
    %74 = arith.mulf %73, %72 : vector<8x64xf32>
    %75 = arith.maximumf %72, %74 : vector<8x64xf32>
    %cst_28 = arith.constant 0.000000e+00 : f32
    %76 = vector.broadcast %cst_28 : f32 to vector<8x256xf32>
    %c0_29 = arith.constant 0 : index
    %c0_30 = arith.constant 0 : index
    %77 = vector.load %arg9[%c0_29, %c0_30] : memref<8x256xf32, #tpu.memory_space<vmem>>, vector<8x256xf32>
    tpu.vector_store %arg9[%c0_29, %c0_30], %76 {strides = array<i32>} : memref<8x256xf32, #tpu.memory_space<vmem>>, vector<8x256xf32>,
    %c0_31 = arith.constant 0 : index
    %c128_32 = arith.constant 128 : index
    %78 = vector.load %arg9[%c0_31, %c128_32] : memref<8x256xf32, #tpu.memory_space<vmem>>, vector<8x64xf32>
    tpu.vector_store %arg9[%c0_31, %c128_32], %75 {strides = array<i32>} : memref<8x256xf32, #tpu.memory_space<vmem>>, vector<8x64xf32>,
    %c0_33 = arith.constant 0 : index
    %c0_34 = arith.constant 0 : index
    %79 = vector.load %arg9[%c0_33, %c0_34] : memref<8x256xf32, #tpu.memory_space<vmem>>, vector<8x256xf32>
    %80 = vector.extract_strided_slice %79 {offsets = [0, 119], sizes = [8, 64], strides = [1, 1]} : vector<8x256xf32> to vector<8x64xf32>
    %cst_35 = arith.constant 0.000000e+00 : f32
    %81 = vector.broadcast %cst_35 : f32 to vector<8x64xf32>
    %82 = vector.shape_cast %24 : vector<1x64xi1> to vector<1x64xi1>
    %83 = vector.broadcast %82 : vector<1x64xi1> to vector<8x64xi1>
    %84 = arith.select %83, %80, %81 : vector<8x64xi1>, vector<8x64xf32>
    %85 = vector.extract_strided_slice %79 {offsets = [0, 120], sizes = [8, 64], strides = [1, 1]} : vector<8x256xf32> to vector<8x64xf32>
    %86 = vector.extract_strided_slice %79 {offsets = [0, 121], sizes = [8, 64], strides = [1, 1]} : vector<8x256xf32> to vector<8x64xf32>
    %cst_36 = arith.constant 0.000000e+00 : f32
    %87 = vector.broadcast %cst_36 : f32 to vector<8x64xf32>
    %88 = vector.shape_cast %26 : vector<1x64xi1> to vector<1x64xi1>
    %89 = vector.broadcast %88 : vector<1x64xi1> to vector<8x64xi1>
    %90 = arith.select %89, %86, %87 : vector<8x64xi1>, vector<8x64xf32>
    %91 = vector.extract_strided_slice %79 {offsets = [0, 127], sizes = [8, 64], strides = [1, 1]} : vector<8x256xf32> to vector<8x64xf32>
    %cst_37 = arith.constant 0.000000e+00 : f32
    %92 = vector.broadcast %cst_37 : f32 to vector<8x64xf32>
    %93 = vector.shape_cast %24 : vector<1x64xi1> to vector<1x64xi1>
    %94 = vector.broadcast %93 : vector<1x64xi1> to vector<8x64xi1>
    %95 = arith.select %94, %91, %92 : vector<8x64xi1>, vector<8x64xf32>
    %96 = vector.extract_strided_slice %79 {offsets = [0, 128], sizes = [8, 64], strides = [1, 1]} : vector<8x256xf32> to vector<8x64xf32>
    %97 = vector.extract_strided_slice %79 {offsets = [0, 129], sizes = [8, 64], strides = [1, 1]} : vector<8x256xf32> to vector<8x64xf32>
    %cst_38 = arith.constant 0.000000e+00 : f32
    %98 = vector.broadcast %cst_38 : f32 to vector<8x64xf32>
    %99 = vector.shape_cast %26 : vector<1x64xi1> to vector<1x64xi1>
    %100 = vector.broadcast %99 : vector<1x64xi1> to vector<8x64xi1>
    %101 = arith.select %100, %97, %98 : vector<8x64xi1>, vector<8x64xf32>
    %102 = vector.extract_strided_slice %79 {offsets = [0, 135], sizes = [8, 64], strides = [1, 1]} : vector<8x256xf32> to vector<8x64xf32>
    %cst_39 = arith.constant 0.000000e+00 : f32
    %103 = vector.broadcast %cst_39 : f32 to vector<8x64xf32>
    %104 = vector.shape_cast %24 : vector<1x64xi1> to vector<1x64xi1>
    %105 = vector.broadcast %104 : vector<1x64xi1> to vector<8x64xi1>
    %106 = arith.select %105, %102, %103 : vector<8x64xi1>, vector<8x64xf32>
    %107 = vector.extract_strided_slice %79 {offsets = [0, 136], sizes = [8, 64], strides = [1, 1]} : vector<8x256xf32> to vector<8x64xf32>
    %108 = vector.extract_strided_slice %79 {offsets = [0, 137], sizes = [8, 64], strides = [1, 1]} : vector<8x256xf32> to vector<8x64xf32>
    %cst_40 = arith.constant 0.000000e+00 : f32
    %109 = vector.broadcast %cst_40 : f32 to vector<8x64xf32>
    %110 = vector.shape_cast %26 : vector<1x64xi1> to vector<1x64xi1>
    %111 = vector.broadcast %110 : vector<1x64xi1> to vector<8x64xi1>
    %112 = arith.select %111, %108, %109 : vector<8x64xi1>, vector<8x64xf32>
    %113 = tpu.concatenate %84, %85, %90, %95, %96, %101, %106, %107, %112 in 0 : vector<8x64xf32>, vector<8x64xf32>, vector<8x64xf32>, vector<8x64xf32>, vector<8x64xf32>, vector<8x64xf32>, vector<8x64xf32>, vector<8x64xf32>, vector<8x64xf32> -> vector<72x64xf32>
    %114 = arith.truncf %113 : vector<72x64xf32> to vector<72x64xbf16>
    %cst_41 = arith.constant dense<0.000000e+00> : vector<8x64xf32>
    %115 = tpu.matmul %4, %114, %cst_41 {dimension_numbers = #tpu.dot_dimension_numbers<[1], [0], [0], [1], [0, 0, 1, 1], [], []>} : vector<8x72xbf16>, vector<72x64xbf16>, vector<8x64xf32> -> vector<8x64xf32>
    %116 = vector.broadcast %5 : vector<8x1xf32> to vector<8x64xf32>
    %117 = arith.addf %115, %116 : vector<8x64xf32>
    %c0_42 = arith.constant 0 : index
    %c0_43 = arith.constant 0 : index
    %118 = vector.load %arg6[%c0_42, %c0_43] : memref<8x16xbf16, #tpu.memory_space<vmem>>, vector<8x16xbf16>
    %cst_44 = arith.constant dense<0.000000e+00> : vector<8x64xf32>
    %119 = tpu.matmul %118, %1, %cst_44 {dimension_numbers = #tpu.dot_dimension_numbers<[1], [0], [0], [1], [0, 0, 1, 1], [], []>} : vector<8x16xbf16>, vector<16x64xbf16>, vector<8x64xf32> -> vector<8x64xf32>
    %cst_45 = arith.constant 1.000000e-01 : f32
    %120 = vector.broadcast %cst_45 : f32 to vector<8x64xf32>
    %121 = arith.mulf %120, %117 : vector<8x64xf32>
    %122 = arith.addf %119, %121 : vector<8x64xf32>
    %123 = arith.truncf %122 : vector<8x64xf32> to vector<8x64xbf16>
    %c0_46 = arith.constant 0 : index
    %c0_47 = arith.constant 0 : index
    %c0_48 = arith.constant 0 : index
    %124 = vector.load %arg7[%c0_46, %c0_47, %c0_48] : memref<1x8x64xbf16, #tpu.memory_space<vmem>>, vector<1x8x64xbf16>
    %125 = vector.shape_cast %124 : vector<1x8x64xbf16> to vector<8x64xbf16>
    %126 = vector.shape_cast %123 : vector<8x64xbf16> to vector<1x8x64xbf16>
    tpu.vector_store %arg7[%c0_46, %c0_47, %c0_48], %126 {strides = array<i32>} : memref<1x8x64xbf16, #tpu.memory_space<vmem>>, vector<1x8x64xbf16>,
    return
  }
  func.func @transform_0(%arg0: i32) -> (i32, i32, i32) {
    %c0_i32 = arith.constant 0 : i32
    %c0_i32_0 = arith.constant 0 : i32
    %c0_i32_1 = arith.constant 0 : i32
    return %arg0, %c0_i32, %c0_i32_0 : i32, i32, i32
  }
  func.func @transform_1(%arg0: i32) -> (i32, i32) {
    %c0_i32 = arith.constant 0 : i32
    %c0_i32_0 = arith.constant 0 : i32
    %c0_i32_1 = arith.constant 0 : i32
    return %c0_i32, %c0_i32_0 : i32, i32
  }
  func.func @transform_2(%arg0: i32) -> (i32, i32) {
    %c0_i32 = arith.constant 0 : i32
    %c0_i32_0 = arith.constant 0 : i32
    %c0_i32_1 = arith.constant 0 : i32
    return %c0_i32, %c0_i32_0 : i32, i32
  }
  func.func @transform_3(%arg0: i32) -> (i32, i32) {
    %c0_i32 = arith.constant 0 : i32
    %c0_i32_0 = arith.constant 0 : i32
    %c0_i32_1 = arith.constant 0 : i32
    return %c0_i32, %c0_i32_0 : i32, i32
  }
  func.func @transform_4(%arg0: i32) -> (i32, i32) {
    %c0_i32 = arith.constant 0 : i32
    %c0_i32_0 = arith.constant 0 : i32
    %c0_i32_1 = arith.constant 0 : i32
    return %c0_i32, %c0_i32_0 : i32, i32
  }
  func.func @transform_5(%arg0: i32) -> (i32, i32) {
    %c0_i32 = arith.constant 0 : i32
    %c0_i32_0 = arith.constant 0 : i32
    %c0_i32_1 = arith.constant 0 : i32
    return %c0_i32, %c0_i32_0 : i32, i32
  }
  func.func @transform_6(%arg0: i32) -> (i32, i32, i32) {
    %c0_i32 = arith.constant 0 : i32
    %c0_i32_0 = arith.constant 0 : i32
    %c0_i32_1 = arith.constant 0 : i32
    return %arg0, %c0_i32, %c0_i32_0 : i32, i32, i32
  }
}

module attributes {stable_mosaic.version = 11 : i64} {
  func.func @_convimg_kernel(%arg0: i32, %arg1: memref<1x8x256xbf16, #tpu.memory_space<vmem>>, %arg2: memref<3x72xbf16, #tpu.memory_space<vmem>>, %arg3: memref<3x1xf32, #tpu.memory_space<vmem>>, %arg4: memref<1x3x256xf32, #tpu.memory_space<vmem>>, %arg5: memref<8x512xf32, #tpu.memory_space<vmem>>) attributes {dimension_semantics = [#tpu.dimension_semantics<parallel>], iteration_bounds = array<i64: 2>, scalar_prefetch = 0 : i64, scratch_operands = 1 : i64, tpu.core_type = #tpu.core_type<tc>, window_params = [{transform_indices = @transform_0, window_bounds = array<i64: 1, 8, 256>}, {pipeline_mode = #tpu.pipeline_mode<synchronous>, transform_indices = @transform_1, window_bounds = array<i64: 3, 72>}, {pipeline_mode = #tpu.pipeline_mode<synchronous>, transform_indices = @transform_2, window_bounds = array<i64: 3, 1>}, {transform_indices = @transform_3, window_bounds = array<i64: 1, 3, 256>}]} {
    %0 = tpu.iota {dimensions = array<i32: 1>} : vector<1x256xi32>
    %c16_i32 = arith.constant 16 : i32
    %c0_i32 = arith.constant 0 : i32
    %1 = arith.cmpi eq, %c16_i32, %c0_i32 : i32
    %c1_i32 = arith.constant 1 : i32
    %2 = arith.select %1, %c1_i32, %c16_i32 : i32
    %3 = vector.broadcast %2 : i32 to vector<1x256xi32>
    %4 = arith.remsi %0, %3 : vector<1x256xi32>
    %c0_i32_0 = arith.constant 0 : i32
    %5 = vector.broadcast %c0_i32_0 : i32 to vector<1x256xi32>
    %6 = arith.cmpi ne, %4, %5 : vector<1x256xi32>
    %c0_i32_1 = arith.constant 0 : i32
    %7 = vector.broadcast %c0_i32_1 : i32 to vector<1x256xi32>
    %8 = arith.cmpi slt, %4, %7 : vector<1x256xi32>
    %c0_i32_2 = arith.constant 0 : i32
    %9 = arith.cmpi slt, %2, %c0_i32_2 : i32
    %10 = vector.broadcast %9 : i1 to vector<1x256xi1>
    %11 = vector.broadcast %10 : vector<1x256xi1> to vector<1x256xi1>
    %12 = arith.xori %8, %11 : vector<1x256xi1>
    %13 = arith.andi %12, %6 : vector<1x256xi1>
    %14 = vector.broadcast %2 : i32 to vector<1x256xi32>
    %15 = arith.addi %4, %14 : vector<1x256xi32>
    %16 = arith.select %13, %15, %4 : vector<1x256xi1>, vector<1x256xi32>
    %c0_i32_3 = arith.constant 0 : i32
    %17 = vector.broadcast %c0_i32_3 : i32 to vector<1x256xi32>
    %18 = arith.cmpi sgt, %16, %17 : vector<1x256xi32>
    %c15_i32 = arith.constant 15 : i32
    %19 = vector.broadcast %c15_i32 : i32 to vector<1x256xi32>
    %20 = arith.cmpi slt, %16, %19 : vector<1x256xi32>
    %c0 = arith.constant 0 : index
    %c0_4 = arith.constant 0 : index
    %c0_5 = arith.constant 0 : index
    %21 = vector.load %arg1[%c0, %c0_4, %c0_5] : memref<1x8x256xbf16, #tpu.memory_space<vmem>>, vector<1x8x256xbf16>
    %22 = vector.shape_cast %21 : vector<1x8x256xbf16> to vector<8x256xbf16>
    %23 = arith.extf %22 : vector<8x256xbf16> to vector<8x256xf32>
    %cst = arith.constant 2.000000e-01 : f32
    %24 = vector.broadcast %cst : f32 to vector<8x256xf32>
    %25 = arith.mulf %24, %23 : vector<8x256xf32>
    %26 = arith.maximumf %23, %25 : vector<8x256xf32>
    %cst_6 = arith.constant 0.000000e+00 : f32
    %27 = vector.broadcast %cst_6 : f32 to vector<8x512xf32>
    %c0_7 = arith.constant 0 : index
    %c0_8 = arith.constant 0 : index
    %28 = vector.load %arg5[%c0_7, %c0_8] : memref<8x512xf32, #tpu.memory_space<vmem>>, vector<8x512xf32>
    tpu.vector_store %arg5[%c0_7, %c0_8], %27 {strides = array<i32>} : memref<8x512xf32, #tpu.memory_space<vmem>>, vector<8x512xf32>,
    %c0_9 = arith.constant 0 : index
    %c128 = arith.constant 128 : index
    %29 = vector.load %arg5[%c0_9, %c128] : memref<8x512xf32, #tpu.memory_space<vmem>>, vector<8x256xf32>
    tpu.vector_store %arg5[%c0_9, %c128], %26 {strides = array<i32>} : memref<8x512xf32, #tpu.memory_space<vmem>>, vector<8x256xf32>,
    %c0_10 = arith.constant 0 : index
    %c0_11 = arith.constant 0 : index
    %30 = vector.load %arg5[%c0_10, %c0_11] : memref<8x512xf32, #tpu.memory_space<vmem>>, vector<8x512xf32>
    %c0_12 = arith.constant 0 : index
    %c0_13 = arith.constant 0 : index
    %31 = vector.load %arg2[%c0_12, %c0_13] : memref<3x72xbf16, #tpu.memory_space<vmem>>, vector<3x72xbf16>
    %32 = vector.extract_strided_slice %30 {offsets = [0, 111], sizes = [8, 256], strides = [1, 1]} : vector<8x512xf32> to vector<8x256xf32>
    %cst_14 = arith.constant 0.000000e+00 : f32
    %33 = vector.broadcast %cst_14 : f32 to vector<8x256xf32>
    %34 = vector.shape_cast %18 : vector<1x256xi1> to vector<1x256xi1>
    %35 = vector.broadcast %34 : vector<1x256xi1> to vector<8x256xi1>
    %36 = arith.select %35, %32, %33 : vector<8x256xi1>, vector<8x256xf32>
    %37 = vector.extract_strided_slice %30 {offsets = [0, 112], sizes = [8, 256], strides = [1, 1]} : vector<8x512xf32> to vector<8x256xf32>
    %38 = vector.extract_strided_slice %30 {offsets = [0, 113], sizes = [8, 256], strides = [1, 1]} : vector<8x512xf32> to vector<8x256xf32>
    %cst_15 = arith.constant 0.000000e+00 : f32
    %39 = vector.broadcast %cst_15 : f32 to vector<8x256xf32>
    %40 = vector.shape_cast %20 : vector<1x256xi1> to vector<1x256xi1>
    %41 = vector.broadcast %40 : vector<1x256xi1> to vector<8x256xi1>
    %42 = arith.select %41, %38, %39 : vector<8x256xi1>, vector<8x256xf32>
    %43 = vector.extract_strided_slice %30 {offsets = [0, 127], sizes = [8, 256], strides = [1, 1]} : vector<8x512xf32> to vector<8x256xf32>
    %cst_16 = arith.constant 0.000000e+00 : f32
    %44 = vector.broadcast %cst_16 : f32 to vector<8x256xf32>
    %45 = vector.shape_cast %18 : vector<1x256xi1> to vector<1x256xi1>
    %46 = vector.broadcast %45 : vector<1x256xi1> to vector<8x256xi1>
    %47 = arith.select %46, %43, %44 : vector<8x256xi1>, vector<8x256xf32>
    %48 = vector.extract_strided_slice %30 {offsets = [0, 128], sizes = [8, 256], strides = [1, 1]} : vector<8x512xf32> to vector<8x256xf32>
    %49 = vector.extract_strided_slice %30 {offsets = [0, 129], sizes = [8, 256], strides = [1, 1]} : vector<8x512xf32> to vector<8x256xf32>
    %cst_17 = arith.constant 0.000000e+00 : f32
    %50 = vector.broadcast %cst_17 : f32 to vector<8x256xf32>
    %51 = vector.shape_cast %20 : vector<1x256xi1> to vector<1x256xi1>
    %52 = vector.broadcast %51 : vector<1x256xi1> to vector<8x256xi1>
    %53 = arith.select %52, %49, %50 : vector<8x256xi1>, vector<8x256xf32>
    %54 = vector.extract_strided_slice %30 {offsets = [0, 143], sizes = [8, 256], strides = [1, 1]} : vector<8x512xf32> to vector<8x256xf32>
    %cst_18 = arith.constant 0.000000e+00 : f32
    %55 = vector.broadcast %cst_18 : f32 to vector<8x256xf32>
    %56 = vector.shape_cast %18 : vector<1x256xi1> to vector<1x256xi1>
    %57 = vector.broadcast %56 : vector<1x256xi1> to vector<8x256xi1>
    %58 = arith.select %57, %54, %55 : vector<8x256xi1>, vector<8x256xf32>
    %59 = vector.extract_strided_slice %30 {offsets = [0, 144], sizes = [8, 256], strides = [1, 1]} : vector<8x512xf32> to vector<8x256xf32>
    %60 = vector.extract_strided_slice %30 {offsets = [0, 145], sizes = [8, 256], strides = [1, 1]} : vector<8x512xf32> to vector<8x256xf32>
    %cst_19 = arith.constant 0.000000e+00 : f32
    %61 = vector.broadcast %cst_19 : f32 to vector<8x256xf32>
    %62 = vector.shape_cast %20 : vector<1x256xi1> to vector<1x256xi1>
    %63 = vector.broadcast %62 : vector<1x256xi1> to vector<8x256xi1>
    %64 = arith.select %63, %60, %61 : vector<8x256xi1>, vector<8x256xf32>
    %65 = tpu.concatenate %36, %37, %42, %47, %48, %53, %58, %59, %64 in 0 : vector<8x256xf32>, vector<8x256xf32>, vector<8x256xf32>, vector<8x256xf32>, vector<8x256xf32>, vector<8x256xf32>, vector<8x256xf32>, vector<8x256xf32>, vector<8x256xf32> -> vector<72x256xf32>
    %66 = arith.truncf %65 : vector<72x256xf32> to vector<72x256xbf16>
    %cst_20 = arith.constant dense<0.000000e+00> : vector<3x256xf32>
    %67 = tpu.matmul %31, %66, %cst_20 {dimension_numbers = #tpu.dot_dimension_numbers<[1], [0], [0], [1], [0, 0, 1, 1], [], []>} : vector<3x72xbf16>, vector<72x256xbf16>, vector<3x256xf32> -> vector<3x256xf32>
    %c0_21 = arith.constant 0 : index
    %c0_22 = arith.constant 0 : index
    %68 = vector.load %arg3[%c0_21, %c0_22] : memref<3x1xf32, #tpu.memory_space<vmem>>, vector<3x1xf32>
    %69 = vector.broadcast %68 : vector<3x1xf32> to vector<3x256xf32>
    %70 = arith.addf %67, %69 : vector<3x256xf32>
    %71 = math.tanh %70 : vector<3x256xf32>
    %c0_23 = arith.constant 0 : index
    %c0_24 = arith.constant 0 : index
    %c0_25 = arith.constant 0 : index
    %72 = vector.load %arg4[%c0_23, %c0_24, %c0_25] : memref<1x3x256xf32, #tpu.memory_space<vmem>>, vector<1x3x256xf32>
    %73 = vector.shape_cast %72 : vector<1x3x256xf32> to vector<3x256xf32>
    %74 = vector.shape_cast %71 : vector<3x256xf32> to vector<1x3x256xf32>
    tpu.vector_store %arg4[%c0_23, %c0_24, %c0_25], %74 {strides = array<i32>} : memref<1x3x256xf32, #tpu.memory_space<vmem>>, vector<1x3x256xf32>,
    return
  }
  func.func @transform_0(%arg0: i32) -> (i32, i32, i32) {
    %c0_i32 = arith.constant 0 : i32
    %c0_i32_0 = arith.constant 0 : i32
    %c0_i32_1 = arith.constant 0 : i32
    return %arg0, %c0_i32, %c0_i32_0 : i32, i32, i32
  }
  func.func @transform_1(%arg0: i32) -> (i32, i32) {
    %c0_i32 = arith.constant 0 : i32
    %c0_i32_0 = arith.constant 0 : i32
    %c0_i32_1 = arith.constant 0 : i32
    return %c0_i32, %c0_i32_0 : i32, i32
  }
  func.func @transform_2(%arg0: i32) -> (i32, i32) {
    %c0_i32 = arith.constant 0 : i32
    %c0_i32_0 = arith.constant 0 : i32
    %c0_i32_1 = arith.constant 0 : i32
    return %c0_i32, %c0_i32_0 : i32, i32
  }
  func.func @transform_3(%arg0: i32) -> (i32, i32, i32) {
    %c0_i32 = arith.constant 0 : i32
    %c0_i32_0 = arith.constant 0 : i32
    %c0_i32_1 = arith.constant 0 : i32
    return %arg0, %c0_i32, %c0_i32_0 : i32, i32, i32
  }
}

module attributes {stable_mosaic.version = 11 : i64} {
  func.func @_resblock_kernel(%arg0: i32, %arg1: memref<1x8x256xbf16, #tpu.memory_space<vmem>>, %arg2: memref<8x72xbf16, #tpu.memory_space<vmem>>, %arg3: memref<8x1xf32, #tpu.memory_space<vmem>>, %arg4: memref<8x72xbf16, #tpu.memory_space<vmem>>, %arg5: memref<8x1xf32, #tpu.memory_space<vmem>>, %arg6: memref<1x8x256xbf16, #tpu.memory_space<vmem>>, %arg7: memref<8x512xf32, #tpu.memory_space<vmem>>, %arg8: memref<8x512xf32, #tpu.memory_space<vmem>>) attributes {dimension_semantics = [#tpu.dimension_semantics<parallel>], iteration_bounds = array<i64: 2>, scalar_prefetch = 0 : i64, scratch_operands = 2 : i64, tpu.core_type = #tpu.core_type<tc>, window_params = [{transform_indices = @transform_0, window_bounds = array<i64: 1, 8, 256>}, {pipeline_mode = #tpu.pipeline_mode<synchronous>, transform_indices = @transform_1, window_bounds = array<i64: 8, 72>}, {pipeline_mode = #tpu.pipeline_mode<synchronous>, transform_indices = @transform_2, window_bounds = array<i64: 8, 1>}, {pipeline_mode = #tpu.pipeline_mode<synchronous>, transform_indices = @transform_3, window_bounds = array<i64: 8, 72>}, {pipeline_mode = #tpu.pipeline_mode<synchronous>, transform_indices = @transform_4, window_bounds = array<i64: 8, 1>}, {transform_indices = @transform_5, window_bounds = array<i64: 1, 8, 256>}]} {
    %c0 = arith.constant 0 : index
    %c0_0 = arith.constant 0 : index
    %c0_1 = arith.constant 0 : index
    %0 = vector.load %arg1[%c0, %c0_0, %c0_1] : memref<1x8x256xbf16, #tpu.memory_space<vmem>>, vector<1x8x256xbf16>
    %1 = vector.shape_cast %0 : vector<1x8x256xbf16> to vector<8x256xbf16>
    %c0_2 = arith.constant 0 : index
    %c0_3 = arith.constant 0 : index
    %2 = vector.load %arg2[%c0_2, %c0_3] : memref<8x72xbf16, #tpu.memory_space<vmem>>, vector<8x72xbf16>
    %c0_4 = arith.constant 0 : index
    %c0_5 = arith.constant 0 : index
    %3 = vector.load %arg3[%c0_4, %c0_5] : memref<8x1xf32, #tpu.memory_space<vmem>>, vector<8x1xf32>
    %c0_6 = arith.constant 0 : index
    %c0_7 = arith.constant 0 : index
    %4 = vector.load %arg4[%c0_6, %c0_7] : memref<8x72xbf16, #tpu.memory_space<vmem>>, vector<8x72xbf16>
    %c0_8 = arith.constant 0 : index
    %c0_9 = arith.constant 0 : index
    %5 = vector.load %arg5[%c0_8, %c0_9] : memref<8x1xf32, #tpu.memory_space<vmem>>, vector<8x1xf32>
    %6 = tpu.iota {dimensions = array<i32: 1>} : vector<1x256xi32>
    %c16_i32 = arith.constant 16 : i32
    %c0_i32 = arith.constant 0 : i32
    %7 = arith.cmpi eq, %c16_i32, %c0_i32 : i32
    %c1_i32 = arith.constant 1 : i32
    %8 = arith.select %7, %c1_i32, %c16_i32 : i32
    %9 = vector.broadcast %8 : i32 to vector<1x256xi32>
    %10 = arith.remsi %6, %9 : vector<1x256xi32>
    %c0_i32_10 = arith.constant 0 : i32
    %11 = vector.broadcast %c0_i32_10 : i32 to vector<1x256xi32>
    %12 = arith.cmpi ne, %10, %11 : vector<1x256xi32>
    %c0_i32_11 = arith.constant 0 : i32
    %13 = vector.broadcast %c0_i32_11 : i32 to vector<1x256xi32>
    %14 = arith.cmpi slt, %10, %13 : vector<1x256xi32>
    %c0_i32_12 = arith.constant 0 : i32
    %15 = arith.cmpi slt, %8, %c0_i32_12 : i32
    %16 = vector.broadcast %15 : i1 to vector<1x256xi1>
    %17 = vector.broadcast %16 : vector<1x256xi1> to vector<1x256xi1>
    %18 = arith.xori %14, %17 : vector<1x256xi1>
    %19 = arith.andi %18, %12 : vector<1x256xi1>
    %20 = vector.broadcast %8 : i32 to vector<1x256xi32>
    %21 = arith.addi %10, %20 : vector<1x256xi32>
    %22 = arith.select %19, %21, %10 : vector<1x256xi1>, vector<1x256xi32>
    %c0_i32_13 = arith.constant 0 : i32
    %23 = vector.broadcast %c0_i32_13 : i32 to vector<1x256xi32>
    %24 = arith.cmpi sgt, %22, %23 : vector<1x256xi32>
    %c15_i32 = arith.constant 15 : i32
    %25 = vector.broadcast %c15_i32 : i32 to vector<1x256xi32>
    %26 = arith.cmpi slt, %22, %25 : vector<1x256xi32>
    %27 = arith.extf %1 : vector<8x256xbf16> to vector<8x256xf32>
    %cst = arith.constant 2.000000e-01 : f32
    %28 = vector.broadcast %cst : f32 to vector<8x256xf32>
    %29 = arith.mulf %28, %27 : vector<8x256xf32>
    %30 = arith.maximumf %27, %29 : vector<8x256xf32>
    %cst_14 = arith.constant 0.000000e+00 : f32
    %31 = vector.broadcast %cst_14 : f32 to vector<8x512xf32>
    %c0_15 = arith.constant 0 : index
    %c0_16 = arith.constant 0 : index
    %32 = vector.load %arg7[%c0_15, %c0_16] : memref<8x512xf32, #tpu.memory_space<vmem>>, vector<8x512xf32>
    tpu.vector_store %arg7[%c0_15, %c0_16], %31 {strides = array<i32>} : memref<8x512xf32, #tpu.memory_space<vmem>>, vector<8x512xf32>,
    %c0_17 = arith.constant 0 : index
    %c128 = arith.constant 128 : index
    %33 = vector.load %arg7[%c0_17, %c128] : memref<8x512xf32, #tpu.memory_space<vmem>>, vector<8x256xf32>
    tpu.vector_store %arg7[%c0_17, %c128], %30 {strides = array<i32>} : memref<8x512xf32, #tpu.memory_space<vmem>>, vector<8x256xf32>,
    %c0_18 = arith.constant 0 : index
    %c0_19 = arith.constant 0 : index
    %34 = vector.load %arg7[%c0_18, %c0_19] : memref<8x512xf32, #tpu.memory_space<vmem>>, vector<8x512xf32>
    %35 = vector.extract_strided_slice %34 {offsets = [0, 111], sizes = [8, 256], strides = [1, 1]} : vector<8x512xf32> to vector<8x256xf32>
    %cst_20 = arith.constant 0.000000e+00 : f32
    %36 = vector.broadcast %cst_20 : f32 to vector<8x256xf32>
    %37 = vector.shape_cast %24 : vector<1x256xi1> to vector<1x256xi1>
    %38 = vector.broadcast %37 : vector<1x256xi1> to vector<8x256xi1>
    %39 = arith.select %38, %35, %36 : vector<8x256xi1>, vector<8x256xf32>
    %40 = vector.extract_strided_slice %34 {offsets = [0, 112], sizes = [8, 256], strides = [1, 1]} : vector<8x512xf32> to vector<8x256xf32>
    %41 = vector.extract_strided_slice %34 {offsets = [0, 113], sizes = [8, 256], strides = [1, 1]} : vector<8x512xf32> to vector<8x256xf32>
    %cst_21 = arith.constant 0.000000e+00 : f32
    %42 = vector.broadcast %cst_21 : f32 to vector<8x256xf32>
    %43 = vector.shape_cast %26 : vector<1x256xi1> to vector<1x256xi1>
    %44 = vector.broadcast %43 : vector<1x256xi1> to vector<8x256xi1>
    %45 = arith.select %44, %41, %42 : vector<8x256xi1>, vector<8x256xf32>
    %46 = vector.extract_strided_slice %34 {offsets = [0, 127], sizes = [8, 256], strides = [1, 1]} : vector<8x512xf32> to vector<8x256xf32>
    %cst_22 = arith.constant 0.000000e+00 : f32
    %47 = vector.broadcast %cst_22 : f32 to vector<8x256xf32>
    %48 = vector.shape_cast %24 : vector<1x256xi1> to vector<1x256xi1>
    %49 = vector.broadcast %48 : vector<1x256xi1> to vector<8x256xi1>
    %50 = arith.select %49, %46, %47 : vector<8x256xi1>, vector<8x256xf32>
    %51 = vector.extract_strided_slice %34 {offsets = [0, 128], sizes = [8, 256], strides = [1, 1]} : vector<8x512xf32> to vector<8x256xf32>
    %52 = vector.extract_strided_slice %34 {offsets = [0, 129], sizes = [8, 256], strides = [1, 1]} : vector<8x512xf32> to vector<8x256xf32>
    %cst_23 = arith.constant 0.000000e+00 : f32
    %53 = vector.broadcast %cst_23 : f32 to vector<8x256xf32>
    %54 = vector.shape_cast %26 : vector<1x256xi1> to vector<1x256xi1>
    %55 = vector.broadcast %54 : vector<1x256xi1> to vector<8x256xi1>
    %56 = arith.select %55, %52, %53 : vector<8x256xi1>, vector<8x256xf32>
    %57 = vector.extract_strided_slice %34 {offsets = [0, 143], sizes = [8, 256], strides = [1, 1]} : vector<8x512xf32> to vector<8x256xf32>
    %cst_24 = arith.constant 0.000000e+00 : f32
    %58 = vector.broadcast %cst_24 : f32 to vector<8x256xf32>
    %59 = vector.shape_cast %24 : vector<1x256xi1> to vector<1x256xi1>
    %60 = vector.broadcast %59 : vector<1x256xi1> to vector<8x256xi1>
    %61 = arith.select %60, %57, %58 : vector<8x256xi1>, vector<8x256xf32>
    %62 = vector.extract_strided_slice %34 {offsets = [0, 144], sizes = [8, 256], strides = [1, 1]} : vector<8x512xf32> to vector<8x256xf32>
    %63 = vector.extract_strided_slice %34 {offsets = [0, 145], sizes = [8, 256], strides = [1, 1]} : vector<8x512xf32> to vector<8x256xf32>
    %cst_25 = arith.constant 0.000000e+00 : f32
    %64 = vector.broadcast %cst_25 : f32 to vector<8x256xf32>
    %65 = vector.shape_cast %26 : vector<1x256xi1> to vector<1x256xi1>
    %66 = vector.broadcast %65 : vector<1x256xi1> to vector<8x256xi1>
    %67 = arith.select %66, %63, %64 : vector<8x256xi1>, vector<8x256xf32>
    %68 = tpu.concatenate %39, %40, %45, %50, %51, %56, %61, %62, %67 in 0 : vector<8x256xf32>, vector<8x256xf32>, vector<8x256xf32>, vector<8x256xf32>, vector<8x256xf32>, vector<8x256xf32>, vector<8x256xf32>, vector<8x256xf32>, vector<8x256xf32> -> vector<72x256xf32>
    %69 = arith.truncf %68 : vector<72x256xf32> to vector<72x256xbf16>
    %cst_26 = arith.constant dense<0.000000e+00> : vector<8x256xf32>
    %70 = tpu.matmul %2, %69, %cst_26 {dimension_numbers = #tpu.dot_dimension_numbers<[1], [0], [0], [1], [0, 0, 1, 1], [], []>} : vector<8x72xbf16>, vector<72x256xbf16>, vector<8x256xf32> -> vector<8x256xf32>
    %71 = vector.broadcast %3 : vector<8x1xf32> to vector<8x256xf32>
    %72 = arith.addf %70, %71 : vector<8x256xf32>
    %cst_27 = arith.constant 2.000000e-01 : f32
    %73 = vector.broadcast %cst_27 : f32 to vector<8x256xf32>
    %74 = arith.mulf %73, %72 : vector<8x256xf32>
    %75 = arith.maximumf %72, %74 : vector<8x256xf32>
    %cst_28 = arith.constant 0.000000e+00 : f32
    %76 = vector.broadcast %cst_28 : f32 to vector<8x512xf32>
    %c0_29 = arith.constant 0 : index
    %c0_30 = arith.constant 0 : index
    %77 = vector.load %arg8[%c0_29, %c0_30] : memref<8x512xf32, #tpu.memory_space<vmem>>, vector<8x512xf32>
    tpu.vector_store %arg8[%c0_29, %c0_30], %76 {strides = array<i32>} : memref<8x512xf32, #tpu.memory_space<vmem>>, vector<8x512xf32>,
    %c0_31 = arith.constant 0 : index
    %c128_32 = arith.constant 128 : index
    %78 = vector.load %arg8[%c0_31, %c128_32] : memref<8x512xf32, #tpu.memory_space<vmem>>, vector<8x256xf32>
    tpu.vector_store %arg8[%c0_31, %c128_32], %75 {strides = array<i32>} : memref<8x512xf32, #tpu.memory_space<vmem>>, vector<8x256xf32>,
    %c0_33 = arith.constant 0 : index
    %c0_34 = arith.constant 0 : index
    %79 = vector.load %arg8[%c0_33, %c0_34] : memref<8x512xf32, #tpu.memory_space<vmem>>, vector<8x512xf32>
    %80 = vector.extract_strided_slice %79 {offsets = [0, 111], sizes = [8, 256], strides = [1, 1]} : vector<8x512xf32> to vector<8x256xf32>
    %cst_35 = arith.constant 0.000000e+00 : f32
    %81 = vector.broadcast %cst_35 : f32 to vector<8x256xf32>
    %82 = vector.shape_cast %24 : vector<1x256xi1> to vector<1x256xi1>
    %83 = vector.broadcast %82 : vector<1x256xi1> to vector<8x256xi1>
    %84 = arith.select %83, %80, %81 : vector<8x256xi1>, vector<8x256xf32>
    %85 = vector.extract_strided_slice %79 {offsets = [0, 112], sizes = [8, 256], strides = [1, 1]} : vector<8x512xf32> to vector<8x256xf32>
    %86 = vector.extract_strided_slice %79 {offsets = [0, 113], sizes = [8, 256], strides = [1, 1]} : vector<8x512xf32> to vector<8x256xf32>
    %cst_36 = arith.constant 0.000000e+00 : f32
    %87 = vector.broadcast %cst_36 : f32 to vector<8x256xf32>
    %88 = vector.shape_cast %26 : vector<1x256xi1> to vector<1x256xi1>
    %89 = vector.broadcast %88 : vector<1x256xi1> to vector<8x256xi1>
    %90 = arith.select %89, %86, %87 : vector<8x256xi1>, vector<8x256xf32>
    %91 = vector.extract_strided_slice %79 {offsets = [0, 127], sizes = [8, 256], strides = [1, 1]} : vector<8x512xf32> to vector<8x256xf32>
    %cst_37 = arith.constant 0.000000e+00 : f32
    %92 = vector.broadcast %cst_37 : f32 to vector<8x256xf32>
    %93 = vector.shape_cast %24 : vector<1x256xi1> to vector<1x256xi1>
    %94 = vector.broadcast %93 : vector<1x256xi1> to vector<8x256xi1>
    %95 = arith.select %94, %91, %92 : vector<8x256xi1>, vector<8x256xf32>
    %96 = vector.extract_strided_slice %79 {offsets = [0, 128], sizes = [8, 256], strides = [1, 1]} : vector<8x512xf32> to vector<8x256xf32>
    %97 = vector.extract_strided_slice %79 {offsets = [0, 129], sizes = [8, 256], strides = [1, 1]} : vector<8x512xf32> to vector<8x256xf32>
    %cst_38 = arith.constant 0.000000e+00 : f32
    %98 = vector.broadcast %cst_38 : f32 to vector<8x256xf32>
    %99 = vector.shape_cast %26 : vector<1x256xi1> to vector<1x256xi1>
    %100 = vector.broadcast %99 : vector<1x256xi1> to vector<8x256xi1>
    %101 = arith.select %100, %97, %98 : vector<8x256xi1>, vector<8x256xf32>
    %102 = vector.extract_strided_slice %79 {offsets = [0, 143], sizes = [8, 256], strides = [1, 1]} : vector<8x512xf32> to vector<8x256xf32>
    %cst_39 = arith.constant 0.000000e+00 : f32
    %103 = vector.broadcast %cst_39 : f32 to vector<8x256xf32>
    %104 = vector.shape_cast %24 : vector<1x256xi1> to vector<1x256xi1>
    %105 = vector.broadcast %104 : vector<1x256xi1> to vector<8x256xi1>
    %106 = arith.select %105, %102, %103 : vector<8x256xi1>, vector<8x256xf32>
    %107 = vector.extract_strided_slice %79 {offsets = [0, 144], sizes = [8, 256], strides = [1, 1]} : vector<8x512xf32> to vector<8x256xf32>
    %108 = vector.extract_strided_slice %79 {offsets = [0, 145], sizes = [8, 256], strides = [1, 1]} : vector<8x512xf32> to vector<8x256xf32>
    %cst_40 = arith.constant 0.000000e+00 : f32
    %109 = vector.broadcast %cst_40 : f32 to vector<8x256xf32>
    %110 = vector.shape_cast %26 : vector<1x256xi1> to vector<1x256xi1>
    %111 = vector.broadcast %110 : vector<1x256xi1> to vector<8x256xi1>
    %112 = arith.select %111, %108, %109 : vector<8x256xi1>, vector<8x256xf32>
    %113 = tpu.concatenate %84, %85, %90, %95, %96, %101, %106, %107, %112 in 0 : vector<8x256xf32>, vector<8x256xf32>, vector<8x256xf32>, vector<8x256xf32>, vector<8x256xf32>, vector<8x256xf32>, vector<8x256xf32>, vector<8x256xf32>, vector<8x256xf32> -> vector<72x256xf32>
    %114 = arith.truncf %113 : vector<72x256xf32> to vector<72x256xbf16>
    %cst_41 = arith.constant dense<0.000000e+00> : vector<8x256xf32>
    %115 = tpu.matmul %4, %114, %cst_41 {dimension_numbers = #tpu.dot_dimension_numbers<[1], [0], [0], [1], [0, 0, 1, 1], [], []>} : vector<8x72xbf16>, vector<72x256xbf16>, vector<8x256xf32> -> vector<8x256xf32>
    %116 = vector.broadcast %5 : vector<8x1xf32> to vector<8x256xf32>
    %117 = arith.addf %115, %116 : vector<8x256xf32>
    %118 = arith.extf %1 : vector<8x256xbf16> to vector<8x256xf32>
    %cst_42 = arith.constant 1.000000e-01 : f32
    %119 = vector.broadcast %cst_42 : f32 to vector<8x256xf32>
    %120 = arith.mulf %119, %117 : vector<8x256xf32>
    %121 = arith.addf %118, %120 : vector<8x256xf32>
    %122 = arith.truncf %121 : vector<8x256xf32> to vector<8x256xbf16>
    %c0_43 = arith.constant 0 : index
    %c0_44 = arith.constant 0 : index
    %c0_45 = arith.constant 0 : index
    %123 = vector.load %arg6[%c0_43, %c0_44, %c0_45] : memref<1x8x256xbf16, #tpu.memory_space<vmem>>, vector<1x8x256xbf16>
    %124 = vector.shape_cast %123 : vector<1x8x256xbf16> to vector<8x256xbf16>
    %125 = vector.shape_cast %122 : vector<8x256xbf16> to vector<1x8x256xbf16>
    tpu.vector_store %arg6[%c0_43, %c0_44, %c0_45], %125 {strides = array<i32>} : memref<1x8x256xbf16, #tpu.memory_space<vmem>>, vector<1x8x256xbf16>,
    return
  }
  func.func @transform_0(%arg0: i32) -> (i32, i32, i32) {
    %c0_i32 = arith.constant 0 : i32
    %c0_i32_0 = arith.constant 0 : i32
    %c0_i32_1 = arith.constant 0 : i32
    return %arg0, %c0_i32, %c0_i32_0 : i32, i32, i32
  }
  func.func @transform_1(%arg0: i32) -> (i32, i32) {
    %c0_i32 = arith.constant 0 : i32
    %c0_i32_0 = arith.constant 0 : i32
    %c0_i32_1 = arith.constant 0 : i32
    return %c0_i32, %c0_i32_0 : i32, i32
  }
  func.func @transform_2(%arg0: i32) -> (i32, i32) {
    %c0_i32 = arith.constant 0 : i32
    %c0_i32_0 = arith.constant 0 : i32
    %c0_i32_1 = arith.constant 0 : i32
    return %c0_i32, %c0_i32_0 : i32, i32
  }
  func.func @transform_3(%arg0: i32) -> (i32, i32) {
    %c0_i32 = arith.constant 0 : i32
    %c0_i32_0 = arith.constant 0 : i32
    %c0_i32_1 = arith.constant 0 : i32
    return %c0_i32, %c0_i32_0 : i32, i32
  }
  func.func @transform_4(%arg0: i32) -> (i32, i32) {
    %c0_i32 = arith.constant 0 : i32
    %c0_i32_0 = arith.constant 0 : i32
    %c0_i32_1 = arith.constant 0 : i32
    return %c0_i32, %c0_i32_0 : i32, i32
  }
  func.func @transform_5(%arg0: i32) -> (i32, i32, i32) {
    %c0_i32 = arith.constant 0 : i32
    %c0_i32_0 = arith.constant 0 : i32
    %c0_i32_1 = arith.constant 0 : i32
    return %arg0, %c0_i32, %c0_i32_0 : i32, i32, i32
  }
}

</mosaic_0001>

<llo_original>
// kernel: generator_forward.5
$region0: #{generator_forward.5}
  #allocation0 [shape = 'u32[]', space=smem, size = 0x4, offset = 0x4, fixed_abs, tag = 'smem constant byte address 0x4 - core index']
  #allocation1 [shape = 'u32[144,128]{1,0:T(1,128)}', space=vmem, size = 0x12000, scoped, tag = 'internal scratch']
  %s0 = inlined_call_operand.vmem [shape: bf16[2,32], index: 0, kind: input, shape index: {}]
  %s1 = inlined_call_operand.vmem [shape: bf16[32,512], index: 1, kind: input, shape index: {}]
  %s2 = inlined_call_operand.vmem [shape: f32[1,512], index: 2, kind: input, shape index: {}]
  %s3 = inlined_call_operand.vmem [shape: bf16[2,512], index: 3, kind: output, shape index: {}]
  %s4 = sld [smem:[#allocation0]]
  $region22: #{generator_forward.5} parent=0
    _
  %s6 = ssub.s32 1, %s4
  %s7 = scalar_select 0, %s6, %s4
  // Predicated region
  $region2: #{generator_forward.5} parent=0 // pred_check
    _
  $region3: #{generator_forward.5} parent=0 // pred_check_branch
    %9 = sbr.rel (0) target = $region5
  $region4: #{generator_forward.5} parent=0 // pred_region
    _
  $region5: #{generator_forward.5} parent=0 // pred_fallthru
    _
  // Predicated region
  $region6: #{generator_forward.5} parent=0 // pred_check
    _
  $region7: #{generator_forward.5} parent=0 // pred_check_branch
    %11 = sbr.rel (0) target = $region9
  $region8: #{generator_forward.5} parent=0 // pred_region
    _
  $region9: #{generator_forward.5} parent=0 // pred_fallthru
    _
  // Predicated region
  $region10: #{generator_forward.5} parent=0 // pred_check
    _
  $region11: #{generator_forward.5} parent=0 // pred_check_branch
    %13 = sbr.rel (0) target = $region13
  $region12: #{generator_forward.5} parent=0 // pred_region
    _
  $region13: #{generator_forward.5} parent=0 // pred_fallthru
    _
  %v15 = vld [vmem:[%s0] sm:$0x1]
  %v16 = vld [vmem:[%s1] sm:$0xff]
  %v17 = vld [vmem:[%s1 + $0x8] sm:$0xff]
  %v18 = vld [vmem:[%s1 + $0x10] sm:$0xff]
  %v19 = vld [vmem:[%s1 + $0x18] sm:$0xff]
  %v20 = vld [vmem:[%s1 + $0x20] sm:$0xff]
  %v21 = vld [vmem:[%s1 + $0x28] sm:$0xff]
  %v22 = vld [vmem:[%s1 + $0x30] sm:$0xff]
  %v23 = vld [vmem:[%s1 + $0x38] sm:$0xff]
  %v24 = vld [vmem:[%s2] sm:$0xf]
  %v26 = vlaneseq
  %v27 = vshrl.u32 %v26, 7
  %v28 = vsub.s32 0, %v27
  %v29 = vrot.slane %v24, %v28
  %v30 = vlaneseq
  %v31 = vshrl.u32 %v30, 7
  %v32 = vsub.s32 1, %v31
  %v33 = vrot.slane %v24, %v32
  %v34 = vlaneseq
  %v35 = vshrl.u32 %v34, 7
  %v36 = vsub.s32 2, %v35
  %v37 = vrot.slane %v24, %v36
  %v38 = vlaneseq
  %v39 = vshrl.u32 %v38, 7
  %v40 = vsub.s32 3, %v39
  %v41 = vrot.slane %v24, %v40
  %v54 = vunpack.c.l.b16 %v16
  %v55 = vunpack.c.h.b16 %v16
  %v56 = vunpack.c.l.b16 %v17
  %v57 = vunpack.c.h.b16 %v17
  %v58 = vunpack.c.l.b16 %v18
  %v59 = vunpack.c.h.b16 %v18
  %v60 = vunpack.c.l.b16 %v19
  %v61 = vunpack.c.h.b16 %v19
  %v62 = vunpack.c.l.b16 %v20
  %v63 = vunpack.c.h.b16 %v20
  %v64 = vunpack.c.l.b16 %v21
  %v65 = vunpack.c.h.b16 %v21
  %v66 = vunpack.c.l.b16 %v22
  %v67 = vunpack.c.h.b16 %v22
  %v68 = vunpack.c.l.b16 %v23
  %v69 = vunpack.c.h.b16 %v23
  %v70 = vpack.c.b16 %v58, %v54
  %v71 = vpack.c.b16 %v59, %v55
  %v72 = vpack.c.b16 %v60, %v56
  %v73 = vpack.c.b16 %v61, %v57
  %v74 = vpack.c.b16 %v66, %v62
  %v75 = vpack.c.b16 %v67, %v63
  %v76 = vpack.c.b16 %v68, %v64
  %v77 = vpack.c.b16 %v69, %v65
  %vm86 = vcmask 261120
  %v88 = vsel %vm86, %v15, 0
  %90 = vmatprep.subr.bf16.mxu0 %v71
  %91 = vmatpush1.bf16.msra.mxu0 %v70
  %92 = vmatprep.subr.bf16.mxu0 %v75
  %93 = vmatpush1.bf16.msra.mxu0 %v74
  %94 = vmatprep.subr.bf16.mxu0 0
  %95 = vmatpush1.bf16.msra.mxu0 0
  %96 = vmatprep.subr.bf16.mxu0 0
  %97 = vmatpush1.bf16.msra.mxu0 0
  %98 = vmatprep.subr.bf16.mxu0 0
  %99 = vmatpush1.bf16.msra.mxu0 0
  %100 = vmatprep.subr.bf16.mxu0 0
  %101 = vmatpush1.bf16.msra.mxu0 0
  %102 = vmatprep.subr.bf16.mxu0 0
  %103 = vmatpush1.bf16.msra.mxu0 0
  %104 = vmatprep.subr.bf16.mxu0 0
  %105 = vmatpush1.bf16.msra.mxu0 0
  %106 = vmatprep.subr.bf16.mxu0 0
  %107 = vmatpush1.bf16.msra.mxu0 0
  %108 = vmatprep.subr.bf16.mxu0 0
  %109 = vmatpush1.bf16.msra.mxu0 0
  %110 = vmatprep.subr.bf16.mxu0 0
  %111 = vmatpush1.bf16.msra.mxu0 0
  %112 = vmatprep.subr.bf16.mxu0 0
  %113 = vmatpush1.bf16.msra.mxu0 0
  %114 = vmatprep.subr.bf16.mxu0 0
  %115 = vmatpush1.bf16.msra.mxu0 0
  %116 = vmatprep.subr.bf16.mxu0 0
  %117 = vmatpush1.bf16.msra.mxu0 0
  %118 = vmatprep.subr.bf16.mxu0 0
  %119 = vmatpush1.bf16.msra.mxu0 0
  %120 = vmatprep.subr.bf16.mxu0 0
  %121 = vmatpush1.bf16.msra.mxu0 0
  %122 = vmatprep.mubr.bf16.mxu0 0
  %123 = vmatmul.mubr.bf16.gmra.mrb[0].mxu0 %v88
  %v124 = vpop.f32.mrb[0].mxu0
  %v125 = vadd.f32 %v29, %v124
  %v126 = vpop.f32.mrb[0].mxu0
  %v127 = vadd.f32 %v33, %v126
  %v128 = vpop.f32.mrb[0].mxu0
  %v129 = vpop.f32.mrb[0].mxu0
  %130 = vdwg.mxu0
  %131 = vmatprep.subr.bf16.mxu0 %v73
  %132 = vmatpush1.bf16.msra.mxu0 %v72
  %133 = vmatprep.subr.bf16.mxu0 %v77
  %134 = vmatpush1.bf16.msra.mxu0 %v76
  %135 = vmatprep.subr.bf16.mxu0 0
  %136 = vmatpush1.bf16.msra.mxu0 0
  %137 = vmatprep.subr.bf16.mxu0 0
  %138 = vmatpush1.bf16.msra.mxu0 0
  %139 = vmatprep.subr.bf16.mxu0 0
  %140 = vmatpush1.bf16.msra.mxu0 0
  %141 = vmatprep.subr.bf16.mxu0 0
  %142 = vmatpush1.bf16.msra.mxu0 0
  %143 = vmatprep.subr.bf16.mxu0 0
  %144 = vmatpush1.bf16.msra.mxu0 0
  %145 = vmatprep.subr.bf16.mxu0 0
  %146 = vmatpush1.bf16.msra.mxu0 0
  %147 = vmatprep.subr.bf16.mxu0 0
  %148 = vmatpush1.bf16.msra.mxu0 0
  %149 = vmatprep.subr.bf16.mxu0 0
  %150 = vmatpush1.bf16.msra.mxu0 0
  %151 = vmatprep.subr.bf16.mxu0 0
  %152 = vmatpush1.bf16.msra.mxu0 0
  %153 = vmatprep.subr.bf16.mxu0 0
  %154 = vmatpush1.bf16.msra.mxu0 0
  %155 = vmatprep.subr.bf16.mxu0 0
  %156 = vmatpush1.bf16.msra.mxu0 0
  %157 = vmatprep.subr.bf16.mxu0 0
  %158 = vmatpush1.bf16.msra.mxu0 0
  %159 = vmatprep.subr.bf16.mxu0 0
  %160 = vmatpush1.bf16.msra.mxu0 0
  %161 = vmatprep.subr.bf16.mxu0 0
  %162 = vmatpush1.bf16.msra.mxu0 0
  %163 = vmatprep.mubr.bf16.mxu0 0
  %164 = vmatmul.mubr.bf16.gmra.mrb[0].mxu0 %v88
  %v165 = vpop.f32.mrb[0].mxu0
  %v166 = vadd.f32 %v37, %v165
  %v167 = vpop.f32.mrb[0].mxu0
  %v168 = vadd.f32 %v41, %v167
  %v169 = vpop.f32.mrb[0].mxu0
  %v170 = vpop.f32.mrb[0].mxu0
  %171 = vdwg.mxu0
  %v172 = vpack.c.bf16 %v125, %v125
  %v173 = vpack.c.bf16 %v127, %v127
  %v174 = vpack.c.bf16 %v166, %v166
  %v175 = vpack.c.bf16 %v168, %v168
  %v180 = vcombine.low %v172, %v173
  %v181 = vcombine.low %v174, %v175
  %v183 = vunpack.c.l.s4 1966171168
  %v184 = vunpack.c.0.s8 %v183
  %v185 = vlaneseq
  %v186 = vshrl.u32 %v185, 7
  %v187 = vsub.s32 %v184, %v186
  %v188 = vrot.slane %v180, %v187
  %v190 = vunpack.c.l.s4 1966171168
  %v191 = vunpack.c.0.s8 %v190
  %v192 = vlaneseq
  %v193 = vshrl.u32 %v192, 7
  %v194 = vsub.s32 %v191, %v193
  %v195 = vrot.slane %v181, %v194
  %v196 = vcombine.low %v188, %v195
  %v198 = vunpack.c.l.s4 1966171168
  %v199 = vunpack.c.0.s8 %v198
  %v200 = vlaneseq
  %v201 = vshrl.u32 %v200, 7
  %v202 = vsub.s32 %v199, %v201
  %v203 = vrot.slane %v196, %v202
  %205 = vst [vmem:[%s3] sm:$0xf] %v203
  // Predicated region
  $region14: #{generator_forward.5} parent=0 // pred_check
    _
  $region15: #{generator_forward.5} parent=0 // pred_check_branch
    %207 = sbr.rel (0) target = $region17
  $region16: #{generator_forward.5} parent=0 // pred_region
    _
  $region17: #{generator_forward.5} parent=0 // pred_fallthru
    _
  // Predicated region
  $region18: #{generator_forward.5} parent=0 // pred_check
    _
  $region19: #{generator_forward.5} parent=0 // pred_check_branch
    %209 = sbr.rel (0) target = $region21
  $region20: #{generator_forward.5} parent=0 // pred_region
    _
  $region21: #{generator_forward.5} parent=0 // pred_fallthru
    _

// kernel: generator_forward.6
$region0: #{generator_forward.6}
  #allocation0 [shape = 'u32[]', space=smem, size = 0x4, offset = 0x4, fixed_abs, tag = 'smem constant byte address 0x4 - core index']
  #allocation1 [shape = 'u32[144,128]{1,0:T(1,128)}', space=vmem, size = 0x12000, scoped, tag = 'internal scratch']
  #allocation2 [shape = 'f32[32,256]{1,0:T(8,128)}', space=vmem, size = 0x8000, scoped, tag = 'scratch operand']
  #allocation3 [shape = 'f32[16,256]{1,0:T(8,128)}', space=vmem, size = 0x4000, scoped, tag = 'scratch operand']
  %s0 = inlined_call_operand.vmem [shape: bf16[2,32,16], index: 0, kind: input, shape index: {}]
  %s1 = inlined_call_operand.vmem [shape: bf16[16,288], index: 1, kind: input, shape index: {}]
  %s2 = inlined_call_operand.vmem [shape: f32[16,1], index: 2, kind: input, shape index: {}]
  %s3 = inlined_call_operand.vmem [shape: bf16[16,144], index: 3, kind: input, shape index: {}]
  %s4 = inlined_call_operand.vmem [shape: f32[16,1], index: 4, kind: input, shape index: {}]
  %s5 = inlined_call_operand.vmem [shape: bf16[16,32], index: 5, kind: input, shape index: {}]
  %s6 = inlined_call_operand.vmem [shape: bf16[2,16,16], index: 6, kind: output, shape index: {}]
  %s7 = sld [smem:[#allocation0]]
  $region57: #{generator_forward.6} parent=0
    _
  %s9 = ssub.s32 1, %s7
  %s10 = scalar_select 0, %s9, %s7
  loop: start=0, step=1, limit=4
  $region2: #{generator_forward.6} parent=0 // loop_pre_header
    _
  $region3: #{generator_forward.6} parent=0 // loop_header
    %s12 = sphi 0, %s16
    %p13 = scmp.ge.s32.totalorder %s12, 4
    %s22 = sphi 0, %s24
    %s25 = sphi 0, %s22
    %s26 = sphi 0, %s25
    %s42 = sphi 0, %s26
    %s46 = sphi 0, %s46
    %s48 = sphi 0, %s46
    %s49 = sphi 0, %s48
    %s63 = sphi 0, %s49
    %s67 = sphi 0, %s67
    %s69 = sphi 0, %s67
    %s70 = sphi 0, %s69
    %s84 = sphi 0, %s70
    %s88 = sphi 0, %s88
    %s90 = sphi 0, %s88
    %s91 = sphi 0, %s90
    %s105 = sphi 0, %s91
    %s109 = sphi 0, %s109
    %s111 = sphi 0, %s109
    %s112 = sphi 0, %s111
    %s126 = sphi 0, %s112
    %s130 = sphi 0, %s130
    %s132 = sphi 0, %s130
    %s133 = sphi 0, %s132
    %s147 = sphi 0, %s133
    %s153 = sphi 0, %s155
    %s156 = sphi 0, %s153
    %s157 = sphi 0, %s156
    %s173 = sphi 0, %s157
  $region4: #{generator_forward.6} parent=0 // loop_header_branch
    %15 = sbr.rel (%p13) target = $region8
  $region5: #{generator_forward.6} parent=0 // loop_body
    %s17 = ssub.s32 %s12, 1
    %s18 = ssub.s32 %s12, 2
    %s19 = sadd.s32 %s12, 1
    %s20 = ssub.s32 %s12, %s19
    %p21 = scmp.eq.s32.totalorder %s20, 0
    %s23 = sadd.s32 %s22, 1
    %s24 = scalar_select %p21, %s22, %s23
    %p27 = pneg %p21
    %p28 = scmp.eq.s32.totalorder %s12, 1
    %p29 = por %p27, %p28
    %p30 = scmp.ne.s32.totalorder %s22, %s25
    %p31 = scmp.eq.s32.totalorder %s12, 0
    %p32 = por %p30, %p31
    %p33 = scmp.ne.s32.totalorder %s22, %s25
    %p34 = scmp.eq.s32.totalorder %s17, 1
    %p35 = por %p33, %p34
    %p36 = scmp.ne.s32.totalorder %s25, %s26
    %p37 = scmp.eq.s32.totalorder %s17, 0
    %p38 = por %p36, %p37
    %p39 = scmp.ne.s32.totalorder %s25, %s26
    %p40 = scmp.eq.s32.totalorder %s18, 1
    %p41 = por %p39, %p40
    %p43 = scmp.ne.s32.totalorder %s26, %s42
    %p44 = scmp.eq.s32.totalorder %s18, 0
    %p45 = por %p43, %p44
    %s47 = sadd.s32 %s46, 1
    %p50 = scmp.eq.s32.totalorder %s12, 1
    %p51 = scmp.ne.s32.totalorder %s46, %s48
    %p52 = scmp.eq.s32.totalorder %s12, 0
    %p53 = por %p51, %p52
    %p54 = scmp.ne.s32.totalorder %s46, %s48
    %p55 = scmp.eq.s32.totalorder %s17, 1
    %p56 = por %p54, %p55
    %p57 = scmp.ne.s32.totalorder %s48, %s49
    %p58 = scmp.eq.s32.totalorder %s17, 0
    %p59 = por %p57, %p58
    %p60 = scmp.ne.s32.totalorder %s48, %s49
    %p61 = scmp.eq.s32.totalorder %s18, 1
    %p62 = por %p60, %p61
    %p64 = scmp.ne.s32.totalorder %s49, %s63
    %p65 = scmp.eq.s32.totalorder %s18, 0
    %p66 = por %p64, %p65
    %s68 = sadd.s32 %s67, 1
    %p71 = scmp.eq.s32.totalorder %s12, 1
    %p72 = scmp.ne.s32.totalorder %s67, %s69
    %p73 = scmp.eq.s32.totalorder %s12, 0
    %p74 = por %p72, %p73
    %p75 = scmp.ne.s32.totalorder %s67, %s69
    %p76 = scmp.eq.s32.totalorder %s17, 1
    %p77 = por %p75, %p76
    %p78 = scmp.ne.s32.totalorder %s69, %s70
    %p79 = scmp.eq.s32.totalorder %s17, 0
    %p80 = por %p78, %p79
    %p81 = scmp.ne.s32.totalorder %s69, %s70
    %p82 = scmp.eq.s32.totalorder %s18, 1
    %p83 = por %p81, %p82
    %p85 = scmp.ne.s32.totalorder %s70, %s84
    %p86 = scmp.eq.s32.totalorder %s18, 0
    %p87 = por %p85, %p86
    %s89 = sadd.s32 %s88, 1
    %p92 = scmp.eq.s32.totalorder %s12, 1
    %p93 = scmp.ne.s32.totalorder %s88, %s90
    %p94 = scmp.eq.s32.totalorder %s12, 0
    %p95 = por %p93, %p94
    %p96 = scmp.ne.s32.totalorder %s88, %s90
    %p97 = scmp.eq.s32.totalorder %s17, 1
    %p98 = por %p96, %p97
    %p99 = scmp.ne.s32.totalorder %s90, %s91
    %p100 = scmp.eq.s32.totalorder %s17, 0
    %p101 = por %p99, %p100
    %p102 = scmp.ne.s32.totalorder %s90, %s91
    %p103 = scmp.eq.s32.totalorder %s18, 1
    %p104 = por %p102, %p103
    %p106 = scmp.ne.s32.totalorder %s91, %s105
    %p107 = scmp.eq.s32.totalorder %s18, 0
    %p108 = por %p106, %p107
    %s110 = sadd.s32 %s109, 1
    %p113 = scmp.eq.s32.totalorder %s12, 1
    %p114 = scmp.ne.s32.totalorder %s109, %s111
    %p115 = scmp.eq.s32.totalorder %s12, 0
    %p116 = por %p114, %p115
    %p117 = scmp.ne.s32.totalorder %s109, %s111
    %p118 = scmp.eq.s32.totalorder %s17, 1
    %p119 = por %p117, %p118
    %p120 = scmp.ne.s32.totalorder %s111, %s112
    %p121 = scmp.eq.s32.totalorder %s17, 0
    %p122 = por %p120, %p121
    %p123 = scmp.ne.s32.totalorder %s111, %s112
    %p124 = scmp.eq.s32.totalorder %s18, 1
    %p125 = por %p123, %p124
    %p127 = scmp.ne.s32.totalorder %s112, %s126
    %p128 = scmp.eq.s32.totalorder %s18, 0
    %p129 = por %p127, %p128
    %s131 = sadd.s32 %s130, 1
    %p134 = scmp.eq.s32.totalorder %s12, 1
    %p135 = scmp.ne.s32.totalorder %s130, %s132
    %p136 = scmp.eq.s32.totalorder %s12, 0
    %p137 = por %p135, %p136
    %p138 = scmp.ne.s32.totalorder %s130, %s132
    %p139 = scmp.eq.s32.totalorder %s17, 1
    %p140 = por %p138, %p139
    %p141 = scmp.ne.s32.totalorder %s132, %s133
    %p142 = scmp.eq.s32.totalorder %s17, 0
    %p143 = por %p141, %p142
    %p144 = scmp.ne.s32.totalorder %s132, %s133
    %p145 = scmp.eq.s32.totalorder %s18, 1
    %p146 = por %p144, %p145
    %p148 = scmp.ne.s32.totalorder %s133, %s147
    %p149 = scmp.eq.s32.totalorder %s18, 0
    %p150 = por %p148, %p149
    %s151 = ssub.s32 %s12, %s19
    %p152 = scmp.eq.s32.totalorder %s151, 0
    %s154 = sadd.s32 %s153, 1
    %s155 = scalar_select %p152, %s153, %s154
    %p158 = pneg %p152
    %p159 = scmp.eq.s32.totalorder %s12, 1
    %p160 = por %p158, %p159
    %p161 = scmp.ne.s32.totalorder %s153, %s156
    %p162 = scmp.eq.s32.totalorder %s12, 0
    %p163 = por %p161, %p162
    %p164 = scmp.ne.s32.totalorder %s153, %s156
    %p165 = scmp.eq.s32.totalorder %s17, 1
    %p166 = por %p164, %p165
    %p167 = scmp.ne.s32.totalorder %s156, %s157
    %p168 = scmp.eq.s32.totalorder %s17, 0
    %p169 = por %p167, %p168
    %p170 = scmp.ne.s32.totalorder %s156, %s157
    %p171 = scmp.eq.s32.totalorder %s18, 1
    %p172 = por %p170, %p171
    %p174 = scmp.ne.s32.totalorder %s157, %s173
    %p175 = scmp.eq.s32.totalorder %s18, 0
    %p176 = por %p174, %p175
    %p177 = scmp.le.s32.totalorder 1, %s12
    %p178 = scmp.lt.s32.totalorder %s12, 3
    %p179 = pnand %p177, %p178
    %p180 = pneg %p179
    // Predicated region
    $region9: #{generator_forward.6} parent=5 // pred_check
      _
    $region10: #{generator_forward.6} parent=5 // pred_check_branch
      %182 = sbr.rel (%p179) target = $region12
    $region11: #{generator_forward.6} parent=5 // pred_region
      %s183 = ssub.s32 %s12, 1
      // Predicated region
      $region13: #{generator_forward.6} parent=11 // pred_check
        %p184 = pneg %p59
      $region14: #{generator_forward.6} parent=11 // pred_check_branch
        %186 = sbr.rel (%p184) target = $region16
      $region15: #{generator_forward.6} parent=11 // pred_region
        _
      $region16: #{generator_forward.6} parent=11 // pred_fallthru
        _
      // Predicated region
      $region17: #{generator_forward.6} parent=11 // pred_check
        %p187 = pneg %p80
      $region18: #{generator_forward.6} parent=11 // pred_check_branch
        %189 = sbr.rel (%p187) target = $region20
      $region19: #{generator_forward.6} parent=11 // pred_region
        _
      $region20: #{generator_forward.6} parent=11 // pred_fallthru
        _
      // Predicated region
      $region21: #{generator_forward.6} parent=11 // pred_check
        %p190 = pneg %p101
      $region22: #{generator_forward.6} parent=11 // pred_check_branch
        %192 = sbr.rel (%p190) target = $region24
      $region23: #{generator_forward.6} parent=11 // pred_region
        _
      $region24: #{generator_forward.6} parent=11 // pred_fallthru
        _
      // Predicated region
      $region25: #{generator_forward.6} parent=11 // pred_check
        %p193 = pneg %p122
      $region26: #{generator_forward.6} parent=11 // pred_check_branch
        %195 = sbr.rel (%p193) target = $region28
      $region27: #{generator_forward.6} parent=11 // pred_region
        _
      $region28: #{generator_forward.6} parent=11 // pred_fallthru
        _
      // Predicated region
      $region29: #{generator_forward.6} parent=11 // pred_check
        %p196 = pneg %p143
      $region30: #{generator_forward.6} parent=11 // pred_check_branch
        %198 = sbr.rel (%p196) target = $region32
      $region31: #{generator_forward.6} parent=11 // pred_region
        _
      $region32: #{generator_forward.6} parent=11 // pred_fallthru
        _
    $region12: #{generator_forward.6} parent=5 // pred_fallthru
      _
    %p199 = scmp.lt.s32.totalorder %s12, 2
    // Predicated region
    $region33: #{generator_forward.6} parent=5 // pred_check
      %p200 = pneg %p199
    $region34: #{generator_forward.6} parent=5 // pred_check_branch
      %202 = sbr.rel (%p200) target = $region36
    $region35: #{generator_forward.6} parent=5 // pred_region
      // Predicated region
      $region37: #{generator_forward.6} parent=35 // pred_check
        %p203 = pneg %p32
      $region38: #{generator_forward.6} parent=35 // pred_check_branch
        %205 = sbr.rel (%p203) target = $region40
      $region39: #{generator_forward.6} parent=35 // pred_region
        %p206 = scmp.lt.s32.totalorder %s12, 1
        %s207 = scalar_select %p206, %s12, 1
        %s208 = smul.addr %s207, 4
        %s209 = smul.addr %s208, 4
        %s210 = scalar_lea.vmem %s0, %s209
      $region40: #{generator_forward.6} parent=35 // pred_fallthru
        _
    $region36: #{generator_forward.6} parent=5 // pred_fallthru
      _
    %p211 = scmp.le.s32.totalorder 1, %s12
    %p212 = scmp.lt.s32.totalorder %s12, 3
    %p213 = pnand %p211, %p212
    %p214 = pneg %p213
    // Predicated region
    $region41: #{generator_forward.6} parent=5 // pred_check
      _
    $region42: #{generator_forward.6} parent=5 // pred_check_branch
      %216 = sbr.rel (%p213) target = $region44
    $region43: #{generator_forward.6} parent=5 // pred_region
      %s217 = ssub.s32 %s12, 1
      %p218 = scmp.lt.s32.totalorder %s17, 1
      %s219 = scalar_select %p218, %s17, 1
      %s220 = smul.addr %s219, 4
      %s221 = smul.addr %s220, 4
      %s222 = scalar_lea.vmem %s0, %s221
      %p223 = pneg %p38
      %p224 = pneg %p35
      %p225 = pneg %p59
      %p226 = pneg %p56
      %p227 = pneg %p80
      %p228 = pneg %p77
      %p229 = pneg %p101
      %p230 = pneg %p98
      %p231 = pneg %p122
      %p232 = pneg %p119
      %p233 = pneg %p143
      %p234 = pneg %p140
      %p235 = pneg %p169
      %p236 = pneg %p166
      %p237 = scmp.lt.s32.totalorder %s17, 1
      %s238 = scalar_select %p237, %s17, 1
      %s239 = smul.addr %s238, 2
      %s240 = smul.addr %s239, 4
      %s241 = scalar_lea.vmem %s6, %s240
      %p242 = scmp.lt.s32.totalorder %s17, 1
      %s243 = scalar_select %p242, %s17, 1
      %s244 = smul.addr %s243, 4
      %s245 = smul.addr %s244, 4
      %s246 = scalar_lea.vmem %s0, %s245
      %p247 = scmp.lt.s32.totalorder %s17, 1
      %s248 = scalar_select %p247, %s17, 1
      %s249 = smul.addr %s248, 2
      %s250 = smul.addr %s249, 4
      %s251 = scalar_lea.vmem %s6, %s250
      %v253 = vld [vmem:[%s246] sm:$0xf]
      %v254 = vld [vmem:[%s246 + $0x4] sm:$0xf]
      %v255 = vld [vmem:[%s246 + $0x8] sm:$0xf]
      %v256 = vld [vmem:[%s246 + $0xc] sm:$0xf]
      %v257 = vld [vmem:[%s1] sm:$0xff]
      %v258 = vld [vmem:[%s1 + $0x8] sm:$0xf]
      %v259 = vld [vmem:[%s1 + $0xc] sm:$0xff]
      %v260 = vld [vmem:[%s1 + $0x14] sm:$0xf]
      %v261 = vld [vmem:[%s2] sm:$0xff]
      %v262 = vld [vmem:[%s2 + $0x8] sm:$0xff]
      %v263 = vld [vmem:[%s3] sm:$0xff]
      %v264 = vld [vmem:[%s3 + $0x8] sm:$0xff]
      %v265 = vld [vmem:[%s4] sm:$0xff]
      %v266 = vld [vmem:[%s4 + $0x8] sm:$0xff]
      %v267 = vlaneseq
      %v268 = vand.u32 %v267, 127
      %vm269 = vcmp.lt.s32.totalorder %v268, 0
      %v270 = vsub.s32 0, %v268
      %v271 = vsel %vm269, %v270, %v268
      %v272 = vshrl.u32 %v271, 2
      %v273 = vand.u32 %v271, 3
      %v274 = vsub.s32 0, %v273
      %v275 = vsel %vm269, %v274, %v273
      %vm276 = vcmp.ne.s32.totalorder %v275, 0
      %vm277 = vcmp.lt.s32.totalorder %v275, 0
      %vm278 = vmand %vm277, %vm276
      %v279 = vadd.s32 %v275, 4
      %v280 = vsel %vm278, %v279, %v275
      %vm281 = vcmp.gt.s32.totalorder %v280, 0
      %vm282 = vcmp.lt.s32.totalorder %v280, 3
      %v283 = vunpack.c.l.bf16 %v253
      %v284 = vunpack.c.l.bf16 %v254
      %v285 = vunpack.c.l.bf16 %v255
      %v286 = vunpack.c.l.bf16 %v256
      %v287 = vmul.f32 %v283, 0.2
      %v288 = vmul.f32 %v284, 0.2
      %v289 = vmul.f32 %v285, 0.2
      %v290 = vmul.f32 %v286, 0.2
      %v291 = vmax.f32 %v283, %v287
      %v292 = vmax.f32 %v284, %v288
      %v293 = vmax.f32 %v285, %v289
      %v294 = vmax.f32 %v286, %v290
      %295 = vst [vmem:[#allocation2] sm:$0xff] 0.0
      %296 = vst [vmem:[#allocation2 + $0x8] sm:$0xff] 0.0
      %297 = vst [vmem:[#allocation2 + $0x10] sm:$0xff] 0.0
      %298 = vst [vmem:[#allocation2 + $0x18] sm:$0xff] 0.0
      %299 = vst [vmem:[#allocation2 + $0x20] sm:$0xff] 0.0
      %300 = vst [vmem:[#allocation2 + $0x28] sm:$0xff] 0.0
      %301 = vst [vmem:[#allocation2 + $0x30] sm:$0xff] 0.0
      %302 = vst [vmem:[#allocation2 + $0x38] sm:$0xff] 0.0
      %vm303 = vcmask 130048
      %304 = vst.msk [vmem:[#allocation2 + $0x8] sm:$0xff] %vm303, %v291
      %305 = vst.msk [vmem:[#allocation2 + $0x18] sm:$0xff] %vm303, %v292
      %306 = vst.msk [vmem:[#allocation2 + $0x28] sm:$0xff] %vm303, %v293
      %307 = vst.msk [vmem:[#allocation2 + $0x38] sm:$0xff] %vm303, %v294
      %v308 = vld [vmem:[#allocation2] sm:$0xff]
      %v309 = vld [vmem:[#allocation2 + $0x8] sm:$0xff]
      %v310 = vld [vmem:[#allocation2 + $0x10] sm:$0xff]
      %v311 = vld [vmem:[#allocation2 + $0x18] sm:$0xff]
      %v312 = vld [vmem:[#allocation2 + $0x20] sm:$0xff]
      %v313 = vld [vmem:[#allocation2 + $0x28] sm:$0xff]
      %v314 = vld [vmem:[#allocation2 + $0x30] sm:$0xff]
      %v315 = vld [vmem:[#allocation2 + $0x38] sm:$0xff]
      %v316 = vsel %vm281, 1, 0
      %vm317 = vcmp.eq.s32.totalorder %v316, 1
      %326 = vrot.lane.b32.xlu0 %v308, 5
      %v327 = vpop.permute.xlu0 %326
      %328 = vrot.lane.b32.xlu0 %v309, 5
      %v329 = vpop.permute.xlu0 %328
      %330 = vrot.lane.b32.xlu0 %v310, 5
      %v331 = vpop.permute.xlu0 %330
      %332 = vrot.lane.b32.xlu0 %v311, 5
      %v333 = vpop.permute.xlu0 %332
      %334 = vrot.lane.b32.xlu0 %v312, 5
      %v335 = vpop.permute.xlu0 %334
      %336 = vrot.lane.b32.xlu0 %v313, 5
      %v337 = vpop.permute.xlu0 %336
      %338 = vrot.lane.b32.xlu0 %v314, 5
      %v339 = vpop.permute.xlu0 %338
      %340 = vrot.lane.b32.xlu0 %v315, 5
      %v341 = vpop.permute.xlu0 %340
      %vm342 = vcmask 39936
      %v343 = vsel %vm342, %v327, %v329
      %v344 = vsel %vm342, %v331, %v333
      %v345 = vsel %vm342, %v335, %v337
      %v346 = vsel %vm342, %v339, %v341
      %v351 = vsel %vm317, %v343, 0.0
      %v352 = vsel %vm317, %v344, 0.0
      %v353 = vsel %vm317, %v345, 0.0
      %v354 = vsel %vm317, %v346, 0.0
      %v355 = vsel %vm282, 1, 0
      %vm356 = vcmp.eq.s32.totalorder %v355, 1
      %357 = vrot.lane.b32.xlu0 %v308, 3
      %v358 = vpop.permute.xlu0 %357
      %359 = vrot.lane.b32.xlu0 %v309, 3
      %v360 = vpop.permute.xlu0 %359
      %361 = vrot.lane.b32.xlu0 %v310, 3
      %v362 = vpop.permute.xlu0 %361
      %363 = vrot.lane.b32.xlu0 %v311, 3
      %v364 = vpop.permute.xlu0 %363
      %365 = vrot.lane.b32.xlu0 %v312, 3
      %v366 = vpop.permute.xlu0 %365
      %367 = vrot.lane.b32.xlu0 %v313, 3
      %v368 = vpop.permute.xlu0 %367
      %369 = vrot.lane.b32.xlu0 %v314, 3
      %v370 = vpop.permute.xlu0 %369
      %371 = vrot.lane.b32.xlu0 %v315, 3
      %v372 = vpop.permute.xlu0 %371
      %vm373 = vcmask 23552
      %v374 = vsel %vm373, %v358, %v360
      %v375 = vsel %vm373, %v362, %v364
      %v376 = vsel %vm373, %v366, %v368
      %v377 = vsel %vm373, %v370, %v372
      %v382 = vsel %vm356, %v374, 0.0
      %v383 = vsel %vm356, %v375, 0.0
      %v384 = vsel %vm356, %v376, 0.0
      %v385 = vsel %vm356, %v377, 0.0
      %386 = vrot.lane.b32.xlu0 %v308, 1
      %v387 = vpop.permute.xlu0 %386
      %388 = vrot.lane.b32.xlu0 %v309, 1
      %v389 = vpop.permute.xlu0 %388
      %390 = vrot.lane.b32.xlu0 %v310, 1
      %v391 = vpop.permute.xlu0 %390
      %392 = vrot.lane.b32.xlu0 %v311, 1
      %v393 = vpop.permute.xlu0 %392
      %394 = vrot.lane.b32.xlu0 %v312, 1
      %v395 = vpop.permute.xlu0 %394
      %396 = vrot.lane.b32.xlu0 %v313, 1
      %v397 = vpop.permute.xlu0 %396
      %398 = vrot.lane.b32.xlu0 %v314, 1
      %v399 = vpop.permute.xlu0 %398
      %400 = vrot.lane.b32.xlu0 %v315, 1
      %v401 = vpop.permute.xlu0 %400
      %vm402 = vcmask 7168
      %v403 = vsel %vm402, %v387, %v389
      %v404 = vsel %vm402, %v391, %v393
      %v405 = vsel %vm402, %v395, %v397
      %v406 = vsel %vm402, %v399, %v401
      %v411 = vsel %vm317, %v403, 0.0
      %v412 = vsel %vm317, %v404, 0.0
      %v413 = vsel %vm317, %v405, 0.0
      %v414 = vsel %vm317, %v406, 0.0
      %415 = vrot.lane.b32.xlu0 %v309, 127
      %v416 = vpop.permute.xlu0 %415
      %417 = vrot.lane.b32.xlu0 %v311, 127
      %v418 = vpop.permute.xlu0 %417
      %419 = vrot.lane.b32.xlu0 %v313, 127
      %v420 = vpop.permute.xlu0 %419
      %421 = vrot.lane.b32.xlu0 %v315, 127
      %v422 = vpop.permute.xlu0 %421
      %v427 = vsel %vm356, %v416, 0.0
      %v428 = vsel %vm356, %v418, 0.0
      %v429 = vsel %vm356, %v420, 0.0
      %v430 = vsel %vm356, %v422, 0.0
      %431 = vrot.lane.b32.xlu0 %v309, 125
      %v432 = vpop.permute.xlu0 %431
      %433 = vrot.lane.b32.xlu0 %v311, 125
      %v434 = vpop.permute.xlu0 %433
      %435 = vrot.lane.b32.xlu0 %v313, 125
      %v436 = vpop.permute.xlu0 %435
      %437 = vrot.lane.b32.xlu0 %v315, 125
      %v438 = vpop.permute.xlu0 %437
      %v443 = vsel %vm317, %v432, 0.0
      %v444 = vsel %vm317, %v434, 0.0
      %v445 = vsel %vm317, %v436, 0.0
      %v446 = vsel %vm317, %v438, 0.0
      %447 = vrot.lane.b32.xlu0 %v309, 123
      %v448 = vpop.permute.xlu0 %447
      %449 = vrot.lane.b32.xlu0 %v311, 123
      %v450 = vpop.permute.xlu0 %449
      %451 = vrot.lane.b32.xlu0 %v313, 123
      %v452 = vpop.permute.xlu0 %451
      %453 = vrot.lane.b32.xlu0 %v315, 123
      %v454 = vpop.permute.xlu0 %453
      %v459 = vsel %vm356, %v448, 0.0
      %v460 = vsel %vm356, %v450, 0.0
      %v461 = vsel %vm356, %v452, 0.0
      %v462 = vsel %vm356, %v454, 0.0
      %463 = vrot.lane.b32.xlu0 %v308, 4
      %v464 = vpop.permute.xlu0 %463
      %465 = vrot.lane.b32.xlu0 %v309, 4
      %v466 = vpop.permute.xlu0 %465
      %467 = vrot.lane.b32.xlu0 %v310, 4
      %v468 = vpop.permute.xlu0 %467
      %469 = vrot.lane.b32.xlu0 %v311, 4
      %v470 = vpop.permute.xlu0 %469
      %471 = vrot.lane.b32.xlu0 %v312, 4
      %v472 = vpop.permute.xlu0 %471
      %473 = vrot.lane.b32.xlu0 %v313, 4
      %v474 = vpop.permute.xlu0 %473
      %475 = vrot.lane.b32.xlu0 %v314, 4
      %v476 = vpop.permute.xlu0 %475
      %477 = vrot.lane.b32.xlu0 %v315, 4
      %v478 = vpop.permute.xlu0 %477
      %vm479 = vcmask 31744
      %v480 = vsel %vm479, %v464, %v466
      %v481 = vsel %vm479, %v468, %v470
      %v482 = vsel %vm479, %v472, %v474
      %v483 = vsel %vm479, %v476, %v478
      %488 = vrot.lane.b32.xlu0 %v309, 124
      %v489 = vpop.permute.xlu0 %488
      %490 = vrot.lane.b32.xlu0 %v311, 124
      %v491 = vpop.permute.xlu0 %490
      %492 = vrot.lane.b32.xlu0 %v313, 124
      %v493 = vpop.permute.xlu0 %492
      %494 = vrot.lane.b32.xlu0 %v315, 124
      %v495 = vpop.permute.xlu0 %494
      %v500 = vpack.c.bf16 %v352, %v351
      %v501 = vpack.c.bf16 %v354, %v353
      %v502 = vpack.c.bf16 %v481, %v480
      %v503 = vpack.c.bf16 %v483, %v482
      %v504 = vpack.c.bf16 %v383, %v382
      %v505 = vpack.c.bf16 %v385, %v384
      %v506 = vpack.c.bf16 %v412, %v411
      %v507 = vpack.c.bf16 %v414, %v413
      %v508 = vpack.c.bf16 %v311, %v309
      %v509 = vpack.c.bf16 %v315, %v313
      %v510 = vpack.c.bf16 %v428, %v427
      %v511 = vpack.c.bf16 %v430, %v429
      %v512 = vpack.c.bf16 %v444, %v443
      %v513 = vpack.c.bf16 %v446, %v445
      %v514 = vpack.c.bf16 %v491, %v489
      %v515 = vpack.c.bf16 %v495, %v493
      %v516 = vpack.c.bf16 %v460, %v459
      %v517 = vpack.c.bf16 %v462, %v461
      %519 = vset.pattern.permute.xlu0 0
      %520 = vperm.xlu0 %519, %v261
      %v521 = vpop.permute.xlu0 %520
      %524 = vset.pattern.permute.xlu0 0
      %525 = vperm.xlu0 %524, %v262
      %v526 = vpop.permute.xlu0 %525
      %v532 = vunpack.c.l.b16 %v257
      %v533 = vunpack.c.h.b16 %v257
      %v534 = vunpack.c.l.b16 %v258
      %v535 = vunpack.c.l.b16 %v259
      %v536 = vunpack.c.h.b16 %v259
      %v537 = vunpack.c.l.b16 %v260
      %v538 = vpack.c.b16 %v535, %v532
      %v539 = vpack.c.b16 %v536, %v533
      %v540 = vpack.c.b16 %v537, %v534
      %vm543 = vcmask 261120
      %v545 = vsel %vm543, %v540, 0
      %547 = vmatprep.subr.bf16.mxu0 0
      %548 = vmatpush1.bf16.msra.mxu0 %v500
      %549 = vmatprep.subr.bf16.mxu0 0
      %550 = vmatpush1.bf16.msra.mxu0 %v501
      %551 = vmatprep.subr.bf16.mxu0 0
      %552 = vmatpush1.bf16.msra.mxu0 %v502
      %553 = vmatprep.subr.bf16.mxu0 0
      %554 = vmatpush1.bf16.msra.mxu0 %v503
      %555 = vmatprep.subr.bf16.mxu0 0
      %556 = vmatpush1.bf16.msra.mxu0 %v504
      %557 = vmatprep.subr.bf16.mxu0 0
      %558 = vmatpush1.bf16.msra.mxu0 %v505
      %559 = vmatprep.subr.bf16.mxu0 0
      %560 = vmatpush1.bf16.msra.mxu0 %v506
      %561 = vmatprep.subr.bf16.mxu0 0
      %562 = vmatpush1.bf16.msra.mxu0 %v507
      %563 = vmatprep.subr.bf16.mxu0 0
      %564 = vmatpush1.bf16.msra.mxu0 %v508
      %565 = vmatprep.subr.bf16.mxu0 0
      %566 = vmatpush1.bf16.msra.mxu0 %v509
      %567 = vmatprep.subr.bf16.mxu0 0
      %568 = vmatpush1.bf16.msra.mxu0 %v510
      %569 = vmatprep.subr.bf16.mxu0 0
      %570 = vmatpush1.bf16.msra.mxu0 %v511
      %571 = vmatprep.subr.bf16.mxu0 0
      %572 = vmatpush1.bf16.msra.mxu0 %v512
      %573 = vmatprep.subr.bf16.mxu0 0
      %574 = vmatpush1.bf16.msra.mxu0 %v513
      %575 = vmatprep.subr.bf16.mxu0 0
      %576 = vmatpush1.bf16.msra.mxu0 %v514
      %577 = vmatprep.subr.bf16.mxu0 0
      %578 = vmatpush1.bf16.msra.mxu0 %v515
      %579 = vmatprep.mubr.bf16.mxu0 %v539
      %580 = vmatmul.mubr.bf16.gmra.mrb[0].mxu0 %v538
      %v581 = vpop.f32.mrb[0].mxu0
      %v582 = vadd.f32 %v521, %v581
      %v583 = vpop.f32.mrb[0].mxu0
      %v584 = vpop.f32.mrb[0].mxu0
      %v585 = vadd.f32 %v526, %v584
      %v586 = vpop.f32.mrb[0].mxu0
      %587 = vdwg.mxu0
      %588 = vmatprep.subr.bf16.mxu0 0
      %589 = vmatpush1.bf16.msra.mxu0 %v516
      %590 = vmatprep.subr.bf16.mxu0 0
      %591 = vmatpush1.bf16.msra.mxu0 %v517
      %592 = vmatprep.subr.bf16.mxu0 0
      %593 = vmatpush1.bf16.msra.mxu0 0
      %594 = vmatprep.subr.bf16.mxu0 0
      %595 = vmatpush1.bf16.msra.mxu0 0
      %596 = vmatprep.subr.bf16.mxu0 0
      %597 = vmatpush1.bf16.msra.mxu0 0
      %598 = vmatprep.subr.bf16.mxu0 0
      %599 = vmatpush1.bf16.msra.mxu0 0
      %600 = vmatprep.subr.bf16.mxu0 0
      %601 = vmatpush1.bf16.msra.mxu0 0
      %602 = vmatprep.subr.bf16.mxu0 0
      %603 = vmatpush1.bf16.msra.mxu0 0
      %604 = vmatprep.subr.bf16.mxu0 0
      %605 = vmatpush1.bf16.msra.mxu0 0
      %606 = vmatprep.subr.bf16.mxu0 0
      %607 = vmatpush1.bf16.msra.mxu0 0
      %608 = vmatprep.subr.bf16.mxu0 0
      %609 = vmatpush1.bf16.msra.mxu0 0
      %610 = vmatprep.subr.bf16.mxu0 0
      %611 = vmatpush1.bf16.msra.mxu0 0
      %612 = vmatprep.subr.bf16.mxu0 0
      %613 = vmatpush1.bf16.msra.mxu0 0
      %614 = vmatprep.subr.bf16.mxu0 0
      %615 = vmatpush1.bf16.msra.mxu0 0
      %616 = vmatprep.subr.bf16.mxu0 0
      %617 = vmatpush1.bf16.msra.mxu0 0
      %618 = vmatprep.subr.bf16.mxu0 0
      %619 = vmatpush1.bf16.msra.mxu0 0
      %620 = vmatprep.mubr.bf16.mxu0 0
      %621 = vmatmul.mubr.bf16.gmra.mrb[0].mxu0 %v545
      %v622 = vpop.f32.mrb[0].mxu0
      %v623 = vadd.f32 %v582, %v622
      %v624 = vpop.f32.mrb[0].mxu0
      %v625 = vpop.f32.mrb[0].mxu0
      %v626 = vadd.f32 %v585, %v625
      %v627 = vpop.f32.mrb[0].mxu0
      %628 = vdwg.mxu0
      %v629 = vmul.f32 %v623, 0.2
      %v630 = vmul.f32 %v626, 0.2
      %v631 = vmax.f32 %v623, %v629
      %v632 = vmax.f32 %v626, %v630
      %633 = vst [vmem:[#allocation3] sm:$0xff] 0.0
      %634 = vst [vmem:[#allocation3 + $0x8] sm:$0xff] 0.0
      %635 = vst [vmem:[#allocation3 + $0x10] sm:$0xff] 0.0
      %636 = vst [vmem:[#allocation3 + $0x18] sm:$0xff] 0.0
      %637 = vst.msk [vmem:[#allocation3 + $0x8] sm:$0xff] %vm303, %v631
      %638 = vst.msk [vmem:[#allocation3 + $0x18] sm:$0xff] %vm303, %v632
      %v639 = vld [vmem:[#allocation3] sm:$0xff]
      %v640 = vld [vmem:[#allocation3 + $0x8] sm:$0xff]
      %v641 = vld [vmem:[#allocation3 + $0x10] sm:$0xff]
      %v642 = vld [vmem:[#allocation3 + $0x18] sm:$0xff]
      %647 = vrot.lane.b32.xlu0 %v639, 5
      %v648 = vpop.permute.xlu0 %647
      %649 = vrot.lane.b32.xlu0 %v640, 5
      %v650 = vpop.permute.xlu0 %649
      %651 = vrot.lane.b32.xlu0 %v641, 5
      %v652 = vpop.permute.xlu0 %651
      %653 = vrot.lane.b32.xlu0 %v642, 5
      %v654 = vpop.permute.xlu0 %653
      %v655 = vsel %vm342, %v648, %v650
      %v656 = vsel %vm342, %v652, %v654
      %v659 = vsel %vm317, %v655, 0.0
      %v660 = vsel %vm317, %v656, 0.0
      %661 = vrot.lane.b32.xlu0 %v639, 3
      %v662 = vpop.permute.xlu0 %661
      %663 = vrot.lane.b32.xlu0 %v640, 3
      %v664 = vpop.permute.xlu0 %663
      %665 = vrot.lane.b32.xlu0 %v641, 3
      %v666 = vpop.permute.xlu0 %665
      %667 = vrot.lane.b32.xlu0 %v642, 3
      %v668 = vpop.permute.xlu0 %667
      %v669 = vsel %vm373, %v662, %v664
      %v670 = vsel %vm373, %v666, %v668
      %v673 = vsel %vm356, %v669, 0.0
      %v674 = vsel %vm356, %v670, 0.0
      %675 = vrot.lane.b32.xlu0 %v639, 1
      %v676 = vpop.permute.xlu0 %675
      %677 = vrot.lane.b32.xlu0 %v640, 1
      %v678 = vpop.permute.xlu0 %677
      %679 = vrot.lane.b32.xlu0 %v641, 1
      %v680 = vpop.permute.xlu0 %679
      %681 = vrot.lane.b32.xlu0 %v642, 1
      %v682 = vpop.permute.xlu0 %681
      %v683 = vsel %vm402, %v676, %v678
      %v684 = vsel %vm402, %v680, %v682
      %v687 = vsel %vm317, %v683, 0.0
      %v688 = vsel %vm317, %v684, 0.0
      %689 = vrot.lane.b32.xlu0 %v640, 127
      %v690 = vpop.permute.xlu0 %689
      %691 = vrot.lane.b32.xlu0 %v642, 127
      %v692 = vpop.permute.xlu0 %691
      %v695 = vsel %vm356, %v690, 0.0
      %v696 = vsel %vm356, %v692, 0.0
      %697 = vrot.lane.b32.xlu0 %v640, 125
      %v698 = vpop.permute.xlu0 %697
      %699 = vrot.lane.b32.xlu0 %v642, 125
      %v700 = vpop.permute.xlu0 %699
      %v703 = vsel %vm317, %v698, 0.0
      %v704 = vsel %vm317, %v700, 0.0
      %705 = vrot.lane.b32.xlu0 %v640, 123
      %v706 = vpop.permute.xlu0 %705
      %707 = vrot.lane.b32.xlu0 %v642, 123
      %v708 = vpop.permute.xlu0 %707
      %v711 = vsel %vm356, %v706, 0.0
      %v712 = vsel %vm356, %v708, 0.0
      %713 = vrot.lane.b32.xlu0 %v639, 4
      %v714 = vpop.permute.xlu0 %713
      %715 = vrot.lane.b32.xlu0 %v640, 4
      %v716 = vpop.permute.xlu0 %715
      %717 = vrot.lane.b32.xlu0 %v641, 4
      %v718 = vpop.permute.xlu0 %717
      %719 = vrot.lane.b32.xlu0 %v642, 4
      %v720 = vpop.permute.xlu0 %719
      %v721 = vsel %vm479, %v714, %v716
      %v722 = vsel %vm479, %v718, %v720
      %725 = vrot.lane.b32.xlu0 %v640, 124
      %v726 = vpop.permute.xlu0 %725
      %727 = vrot.lane.b32.xlu0 %v642, 124
      %v728 = vpop.permute.xlu0 %727
      %v731 = vpack.c.bf16 %v660, %v659
      %v732 = vpack.c.bf16 %v722, %v721
      %v733 = vpack.c.bf16 %v674, %v673
      %v734 = vpack.c.bf16 %v688, %v687
      %v735 = vpack.c.bf16 %v642, %v640
      %v736 = vpack.c.bf16 %v696, %v695
      %v737 = vpack.c.bf16 %v704, %v703
      %v738 = vpack.c.bf16 %v728, %v726
      %v739 = vpack.c.bf16 %v712, %v711
      %741 = vset.pattern.permute.xlu0 0
      %742 = vperm.xlu0 %741, %v265
      %v743 = vpop.permute.xlu0 %742
      %746 = vset.pattern.permute.xlu0 0
      %747 = vperm.xlu0 %746, %v266
      %v748 = vpop.permute.xlu0 %747
      %v752 = vunpack.c.l.b16 %v263
      %v753 = vunpack.c.h.b16 %v263
      %v754 = vunpack.c.l.b16 %v264
      %v755 = vunpack.c.h.b16 %v264
      %v756 = vpack.c.b16 %v754, %v752
      %v757 = vpack.c.b16 %v755, %v753
      %v760 = vsel %vm303, %v757, 0
      %762 = vmatprep.subr.bf16.mxu0 0
      %763 = vmatpush1.bf16.msra.mxu0 %v731
      %764 = vmatprep.subr.bf16.mxu0 0
      %765 = vmatpush1.bf16.msra.mxu0 %v732
      %766 = vmatprep.subr.bf16.mxu0 0
      %767 = vmatpush1.bf16.msra.mxu0 %v733
      %768 = vmatprep.subr.bf16.mxu0 0
      %769 = vmatpush1.bf16.msra.mxu0 %v734
      %770 = vmatprep.subr.bf16.mxu0 0
      %771 = vmatpush1.bf16.msra.mxu0 %v735
      %772 = vmatprep.subr.bf16.mxu0 0
      %773 = vmatpush1.bf16.msra.mxu0 %v736
      %774 = vmatprep.subr.bf16.mxu0 0
      %775 = vmatpush1.bf16.msra.mxu0 %v737
      %776 = vmatprep.subr.bf16.mxu0 0
      %777 = vmatpush1.bf16.msra.mxu0 %v738
      %778 = vmatprep.subr.bf16.mxu0 0
      %779 = vmatpush1.bf16.msra.mxu0 %v739
      %780 = vmatprep.subr.bf16.mxu0 0
      %781 = vmatpush1.bf16.msra.mxu0 0
      %782 = vmatprep.subr.bf16.mxu0 0
      %783 = vmatpush1.bf16.msra.mxu0 0
      %784 = vmatprep.subr.bf16.mxu0 0
      %785 = vmatpush1.bf16.msra.mxu0 0
      %786 = vmatprep.subr.bf16.mxu0 0
      %787 = vmatpush1.bf16.msra.mxu0 0
      %788 = vmatprep.subr.bf16.mxu0 0
      %789 = vmatpush1.bf16.msra.mxu0 0
      %790 = vmatprep.subr.bf16.mxu0 0
      %791 = vmatpush1.bf16.msra.mxu0 0
      %792 = vmatprep.subr.bf16.mxu0 0
      %793 = vmatpush1.bf16.msra.mxu0 0
      %794 = vmatprep.mubr.bf16.mxu0 %v760
      %795 = vmatmul.mubr.bf16.gmra.mrb[0].mxu0 %v756
      %v796 = vpop.f32.mrb[0].mxu0
      %v797 = vadd.f32 %v743, %v796
      %v798 = vpop.f32.mrb[0].mxu0
      %v799 = vpop.f32.mrb[0].mxu0
      %v800 = vadd.f32 %v748, %v799
      %v801 = vpop.f32.mrb[0].mxu0
      %802 = vdwg.mxu0
      %v803 = vld [vmem:[%s5] sm:$0xf]
      %v804 = vld [vmem:[%s5 + $0x4] sm:$0xf]
      %v805 = vmul.f32 %v797, 0.1
      %v806 = vmul.f32 %v800, 0.1
      %v809 = vunpack.c.l.b16 %v803
      %v810 = vunpack.c.l.b16 %v804
      %v811 = vpack.c.b16 %v810, %v809
      %v816 = vunpack.c.l.b16 %v253
      %v817 = vunpack.c.l.b16 %v254
      %v818 = vunpack.c.l.b16 %v255
      %v819 = vunpack.c.l.b16 %v256
      %v820 = vpack.c.b16 %v817, %v816
      %v821 = vpack.c.b16 %v819, %v818
      %v825 = vsel %vm543, %v811, 0
      %827 = vmatprep.subr.bf16.mxu0 0
      %828 = vmatpush1.bf16.msra.mxu0 %v820
      %829 = vmatprep.subr.bf16.mxu0 0
      %830 = vmatpush1.bf16.msra.mxu0 %v821
      %831 = vmatprep.subr.bf16.mxu0 0
      %832 = vmatpush1.bf16.msra.mxu0 0
      %833 = vmatprep.subr.bf16.mxu0 0
      %834 = vmatpush1.bf16.msra.mxu0 0
      %835 = vmatprep.subr.bf16.mxu0 0
      %836 = vmatpush1.bf16.msra.mxu0 0
      %837 = vmatprep.subr.bf16.mxu0 0
      %838 = vmatpush1.bf16.msra.mxu0 0
      %839 = vmatprep.subr.bf16.mxu0 0
      %840 = vmatpush1.bf16.msra.mxu0 0
      %841 = vmatprep.subr.bf16.mxu0 0
      %842 = vmatpush1.bf16.msra.mxu0 0
      %843 = vmatprep.subr.bf16.mxu0 0
      %844 = vmatpush1.bf16.msra.mxu0 0
      %845 = vmatprep.subr.bf16.mxu0 0
      %846 = vmatpush1.bf16.msra.mxu0 0
      %847 = vmatprep.subr.bf16.mxu0 0
      %848 = vmatpush1.bf16.msra.mxu0 0
      %849 = vmatprep.subr.bf16.mxu0 0
      %850 = vmatpush1.bf16.msra.mxu0 0
      %851 = vmatprep.subr.bf16.mxu0 0
      %852 = vmatpush1.bf16.msra.mxu0 0
      %853 = vmatprep.subr.bf16.mxu0 0
      %854 = vmatpush1.bf16.msra.mxu0 0
      %855 = vmatprep.subr.bf16.mxu0 0
      %856 = vmatpush1.bf16.msra.mxu0 0
      %857 = vmatprep.subr.bf16.mxu0 0
      %858 = vmatpush1.bf16.msra.mxu0 0
      %859 = vmatprep.mubr.bf16.mxu0 0
      %860 = vmatmul.mubr.bf16.gmra.mrb[0].mxu0 %v825
      %v861 = vpop.f32.mrb[0].mxu0
      %v862 = vadd.f32 %v805, %v861
      %v863 = vpop.f32.mrb[0].mxu0
      %v864 = vpop.f32.mrb[0].mxu0
      %v865 = vadd.f32 %v806, %v864
      %v866 = vpop.f32.mrb[0].mxu0
      %867 = vdwg.mxu0
      %v868 = vpack.c.bf16 %v865, %v862
      %v870 = vunpack.c.l.b16 %v868
      %v871 = vunpack.c.h.b16 %v868
      %v872 = vpack.c.b16 %v870, %v870
      %v873 = vpack.c.b16 %v871, %v871
      %vm876 = vcmask 125952
      %877 = vst.msk [vmem:[%s251] sm:$0xf] %vm876, %v872
      %878 = vst.msk [vmem:[%s251 + $0x4] sm:$0xf] %vm876, %v873
      %p879 = scmp.lt.s32.totalorder %s17, 1
      %s880 = scalar_select %p879, %s17, 1
      %s881 = smul.addr %s880, 2
      %s882 = smul.addr %s881, 4
      %s883 = scalar_lea.vmem %s6, %s882
      // Predicated region
      $region45: #{generator_forward.6} parent=43 // pred_check
        %p884 = pneg %p166
      $region46: #{generator_forward.6} parent=43 // pred_check_branch
        %886 = sbr.rel (%p884) target = $region48
      $region47: #{generator_forward.6} parent=43 // pred_region
        _
      $region48: #{generator_forward.6} parent=43 // pred_fallthru
        _
    $region44: #{generator_forward.6} parent=5 // pred_fallthru
      _
    %p887 = scmp.le.s32.totalorder 2, %s12
    // Predicated region
    $region49: #{generator_forward.6} parent=5 // pred_check
      %p888 = pneg %p887
    $region50: #{generator_forward.6} parent=5 // pred_check_branch
      %890 = sbr.rel (%p888) target = $region52
    $region51: #{generator_forward.6} parent=5 // pred_region
      %s891 = ssub.s32 %s12, 2
      // Predicated region
      $region53: #{generator_forward.6} parent=51 // pred_check
        %p892 = pneg %p172
      $region54: #{generator_forward.6} parent=51 // pred_check_branch
        %894 = sbr.rel (%p892) target = $region56
      $region55: #{generator_forward.6} parent=51 // pred_region
        %p895 = scmp.lt.s32.totalorder %s18, 1
        %s896 = scalar_select %p895, %s18, 1
        %s897 = smul.addr %s896, 2
        %s898 = smul.addr %s897, 4
        %s899 = scalar_lea.vmem %s6, %s898
      $region56: #{generator_forward.6} parent=51 // pred_fallthru
        _
    $region52: #{generator_forward.6} parent=5 // pred_fallthru
      _
  $region6: #{generator_forward.6} parent=0 // loop_footer
    %s16 = sadd.s32 1, %s12
  $region7: #{generator_forward.6} parent=0 // loop_footer_branch
    %11 = sbr.rel target = $region3
  $region8: #{generator_forward.6} parent=0 // loop_exit
    _

// kernel: generator_forward.7
$region0: #{generator_forward.7}
  #allocation0 [shape = 'u32[]', space=smem, size = 0x4, offset = 0x4, fixed_abs, tag = 'smem constant byte address 0x4 - core index']
  #allocation1 [shape = 'u32[144,128]{1,0:T(1,128)}', space=vmem, size = 0x12000, scoped, tag = 'internal scratch']
  #allocation2 [shape = 'f32[16,256]{1,0:T(8,128)}', space=vmem, size = 0x4000, scoped, tag = 'scratch operand']
  #allocation3 [shape = 'f32[8,256]{1,0:T(8,128)}', space=vmem, size = 0x2000, scoped, tag = 'scratch operand']
  %s0 = inlined_call_operand.vmem [shape: bf16[2,16,64], index: 0, kind: input, shape index: {}]
  %s1 = inlined_call_operand.vmem [shape: bf16[8,144], index: 1, kind: input, shape index: {}]
  %s2 = inlined_call_operand.vmem [shape: f32[8,1], index: 2, kind: input, shape index: {}]
  %s3 = inlined_call_operand.vmem [shape: bf16[8,72], index: 3, kind: input, shape index: {}]
  %s4 = inlined_call_operand.vmem [shape: f32[8,1], index: 4, kind: input, shape index: {}]
  %s5 = inlined_call_operand.vmem [shape: bf16[8,16], index: 5, kind: input, shape index: {}]
  %s6 = inlined_call_operand.vmem [shape: bf16[2,8,64], index: 6, kind: output, shape index: {}]
  %s7 = sld [smem:[#allocation0]]
  $region57: #{generator_forward.7} parent=0
    _
  %s9 = ssub.s32 1, %s7
  %s10 = scalar_select 0, %s9, %s7
  loop: start=0, step=1, limit=4
  $region2: #{generator_forward.7} parent=0 // loop_pre_header
    _
  $region3: #{generator_forward.7} parent=0 // loop_header
    %s12 = sphi 0, %s16
    %p13 = scmp.ge.s32.totalorder %s12, 4
    %s22 = sphi 0, %s24
    %s25 = sphi 0, %s22
    %s26 = sphi 0, %s25
    %s42 = sphi 0, %s26
    %s46 = sphi 0, %s46
    %s48 = sphi 0, %s46
    %s49 = sphi 0, %s48
    %s63 = sphi 0, %s49
    %s67 = sphi 0, %s67
    %s69 = sphi 0, %s67
    %s70 = sphi 0, %s69
    %s84 = sphi 0, %s70
    %s88 = sphi 0, %s88
    %s90 = sphi 0, %s88
    %s91 = sphi 0, %s90
    %s105 = sphi 0, %s91
    %s109 = sphi 0, %s109
    %s111 = sphi 0, %s109
    %s112 = sphi 0, %s111
    %s126 = sphi 0, %s112
    %s130 = sphi 0, %s130
    %s132 = sphi 0, %s130
    %s133 = sphi 0, %s132
    %s147 = sphi 0, %s133
    %s153 = sphi 0, %s155
    %s156 = sphi 0, %s153
    %s157 = sphi 0, %s156
    %s173 = sphi 0, %s157
  $region4: #{generator_forward.7} parent=0 // loop_header_branch
    %15 = sbr.rel (%p13) target = $region8
  $region5: #{generator_forward.7} parent=0 // loop_body
    %s17 = ssub.s32 %s12, 1
    %s18 = ssub.s32 %s12, 2
    %s19 = sadd.s32 %s12, 1
    %s20 = ssub.s32 %s12, %s19
    %p21 = scmp.eq.s32.totalorder %s20, 0
    %s23 = sadd.s32 %s22, 1
    %s24 = scalar_select %p21, %s22, %s23
    %p27 = pneg %p21
    %p28 = scmp.eq.s32.totalorder %s12, 1
    %p29 = por %p27, %p28
    %p30 = scmp.ne.s32.totalorder %s22, %s25
    %p31 = scmp.eq.s32.totalorder %s12, 0
    %p32 = por %p30, %p31
    %p33 = scmp.ne.s32.totalorder %s22, %s25
    %p34 = scmp.eq.s32.totalorder %s17, 1
    %p35 = por %p33, %p34
    %p36 = scmp.ne.s32.totalorder %s25, %s26
    %p37 = scmp.eq.s32.totalorder %s17, 0
    %p38 = por %p36, %p37
    %p39 = scmp.ne.s32.totalorder %s25, %s26
    %p40 = scmp.eq.s32.totalorder %s18, 1
    %p41 = por %p39, %p40
    %p43 = scmp.ne.s32.totalorder %s26, %s42
    %p44 = scmp.eq.s32.totalorder %s18, 0
    %p45 = por %p43, %p44
    %s47 = sadd.s32 %s46, 1
    %p50 = scmp.eq.s32.totalorder %s12, 1
    %p51 = scmp.ne.s32.totalorder %s46, %s48
    %p52 = scmp.eq.s32.totalorder %s12, 0
    %p53 = por %p51, %p52
    %p54 = scmp.ne.s32.totalorder %s46, %s48
    %p55 = scmp.eq.s32.totalorder %s17, 1
    %p56 = por %p54, %p55
    %p57 = scmp.ne.s32.totalorder %s48, %s49
    %p58 = scmp.eq.s32.totalorder %s17, 0
    %p59 = por %p57, %p58
    %p60 = scmp.ne.s32.totalorder %s48, %s49
    %p61 = scmp.eq.s32.totalorder %s18, 1
    %p62 = por %p60, %p61
    %p64 = scmp.ne.s32.totalorder %s49, %s63
    %p65 = scmp.eq.s32.totalorder %s18, 0
    %p66 = por %p64, %p65
    %s68 = sadd.s32 %s67, 1
    %p71 = scmp.eq.s32.totalorder %s12, 1
    %p72 = scmp.ne.s32.totalorder %s67, %s69
    %p73 = scmp.eq.s32.totalorder %s12, 0
    %p74 = por %p72, %p73
    %p75 = scmp.ne.s32.totalorder %s67, %s69
    %p76 = scmp.eq.s32.totalorder %s17, 1
    %p77 = por %p75, %p76
    %p78 = scmp.ne.s32.totalorder %s69, %s70
    %p79 = scmp.eq.s32.totalorder %s17, 0
    %p80 = por %p78, %p79
    %p81 = scmp.ne.s32.totalorder %s69, %s70
    %p82 = scmp.eq.s32.totalorder %s18, 1
    %p83 = por %p81, %p82
    %p85 = scmp.ne.s32.totalorder %s70, %s84
    %p86 = scmp.eq.s32.totalorder %s18, 0
    %p87 = por %p85, %p86
    %s89 = sadd.s32 %s88, 1
    %p92 = scmp.eq.s32.totalorder %s12, 1
    %p93 = scmp.ne.s32.totalorder %s88, %s90
    %p94 = scmp.eq.s32.totalorder %s12, 0
    %p95 = por %p93, %p94
    %p96 = scmp.ne.s32.totalorder %s88, %s90
    %p97 = scmp.eq.s32.totalorder %s17, 1
    %p98 = por %p96, %p97
    %p99 = scmp.ne.s32.totalorder %s90, %s91
    %p100 = scmp.eq.s32.totalorder %s17, 0
    %p101 = por %p99, %p100
    %p102 = scmp.ne.s32.totalorder %s90, %s91
    %p103 = scmp.eq.s32.totalorder %s18, 1
    %p104 = por %p102, %p103
    %p106 = scmp.ne.s32.totalorder %s91, %s105
    %p107 = scmp.eq.s32.totalorder %s18, 0
    %p108 = por %p106, %p107
    %s110 = sadd.s32 %s109, 1
    %p113 = scmp.eq.s32.totalorder %s12, 1
    %p114 = scmp.ne.s32.totalorder %s109, %s111
    %p115 = scmp.eq.s32.totalorder %s12, 0
    %p116 = por %p114, %p115
    %p117 = scmp.ne.s32.totalorder %s109, %s111
    %p118 = scmp.eq.s32.totalorder %s17, 1
    %p119 = por %p117, %p118
    %p120 = scmp.ne.s32.totalorder %s111, %s112
    %p121 = scmp.eq.s32.totalorder %s17, 0
    %p122 = por %p120, %p121
    %p123 = scmp.ne.s32.totalorder %s111, %s112
    %p124 = scmp.eq.s32.totalorder %s18, 1
    %p125 = por %p123, %p124
    %p127 = scmp.ne.s32.totalorder %s112, %s126
    %p128 = scmp.eq.s32.totalorder %s18, 0
    %p129 = por %p127, %p128
    %s131 = sadd.s32 %s130, 1
    %p134 = scmp.eq.s32.totalorder %s12, 1
    %p135 = scmp.ne.s32.totalorder %s130, %s132
    %p136 = scmp.eq.s32.totalorder %s12, 0
    %p137 = por %p135, %p136
    %p138 = scmp.ne.s32.totalorder %s130, %s132
    %p139 = scmp.eq.s32.totalorder %s17, 1
    %p140 = por %p138, %p139
    %p141 = scmp.ne.s32.totalorder %s132, %s133
    %p142 = scmp.eq.s32.totalorder %s17, 0
    %p143 = por %p141, %p142
    %p144 = scmp.ne.s32.totalorder %s132, %s133
    %p145 = scmp.eq.s32.totalorder %s18, 1
    %p146 = por %p144, %p145
    %p148 = scmp.ne.s32.totalorder %s133, %s147
    %p149 = scmp.eq.s32.totalorder %s18, 0
    %p150 = por %p148, %p149
    %s151 = ssub.s32 %s12, %s19
    %p152 = scmp.eq.s32.totalorder %s151, 0
    %s154 = sadd.s32 %s153, 1
    %s155 = scalar_select %p152, %s153, %s154
    %p158 = pneg %p152
    %p159 = scmp.eq.s32.totalorder %s12, 1
    %p160 = por %p158, %p159
    %p161 = scmp.ne.s32.totalorder %s153, %s156
    %p162 = scmp.eq.s32.totalorder %s12, 0
    %p163 = por %p161, %p162
    %p164 = scmp.ne.s32.totalorder %s153, %s156
    %p165 = scmp.eq.s32.totalorder %s17, 1
    %p166 = por %p164, %p165
    %p167 = scmp.ne.s32.totalorder %s156, %s157
    %p168 = scmp.eq.s32.totalorder %s17, 0
    %p169 = por %p167, %p168
    %p170 = scmp.ne.s32.totalorder %s156, %s157
    %p171 = scmp.eq.s32.totalorder %s18, 1
    %p172 = por %p170, %p171
    %p174 = scmp.ne.s32.totalorder %s157, %s173
    %p175 = scmp.eq.s32.totalorder %s18, 0
    %p176 = por %p174, %p175
    %p177 = scmp.le.s32.totalorder 1, %s12
    %p178 = scmp.lt.s32.totalorder %s12, 3
    %p179 = pnand %p177, %p178
    %p180 = pneg %p179
    // Predicated region
    $region9: #{generator_forward.7} parent=5 // pred_check
      _
    $region10: #{generator_forward.7} parent=5 // pred_check_branch
      %182 = sbr.rel (%p179) target = $region12
    $region11: #{generator_forward.7} parent=5 // pred_region
      %s183 = ssub.s32 %s12, 1
      // Predicated region
      $region13: #{generator_forward.7} parent=11 // pred_check
        %p184 = pneg %p59
      $region14: #{generator_forward.7} parent=11 // pred_check_branch
        %186 = sbr.rel (%p184) target = $region16
      $region15: #{generator_forward.7} parent=11 // pred_region
        _
      $region16: #{generator_forward.7} parent=11 // pred_fallthru
        _
      // Predicated region
      $region17: #{generator_forward.7} parent=11 // pred_check
        %p187 = pneg %p80
      $region18: #{generator_forward.7} parent=11 // pred_check_branch
        %189 = sbr.rel (%p187) target = $region20
      $region19: #{generator_forward.7} parent=11 // pred_region
        _
      $region20: #{generator_forward.7} parent=11 // pred_fallthru
        _
      // Predicated region
      $region21: #{generator_forward.7} parent=11 // pred_check
        %p190 = pneg %p101
      $region22: #{generator_forward.7} parent=11 // pred_check_branch
        %192 = sbr.rel (%p190) target = $region24
      $region23: #{generator_forward.7} parent=11 // pred_region
        _
      $region24: #{generator_forward.7} parent=11 // pred_fallthru
        _
      // Predicated region
      $region25: #{generator_forward.7} parent=11 // pred_check
        %p193 = pneg %p122
      $region26: #{generator_forward.7} parent=11 // pred_check_branch
        %195 = sbr.rel (%p193) target = $region28
      $region27: #{generator_forward.7} parent=11 // pred_region
        _
      $region28: #{generator_forward.7} parent=11 // pred_fallthru
        _
      // Predicated region
      $region29: #{generator_forward.7} parent=11 // pred_check
        %p196 = pneg %p143
      $region30: #{generator_forward.7} parent=11 // pred_check_branch
        %198 = sbr.rel (%p196) target = $region32
      $region31: #{generator_forward.7} parent=11 // pred_region
        _
      $region32: #{generator_forward.7} parent=11 // pred_fallthru
        _
    $region12: #{generator_forward.7} parent=5 // pred_fallthru
      _
    %p199 = scmp.lt.s32.totalorder %s12, 2
    // Predicated region
    $region33: #{generator_forward.7} parent=5 // pred_check
      %p200 = pneg %p199
    $region34: #{generator_forward.7} parent=5 // pred_check_branch
      %202 = sbr.rel (%p200) target = $region36
    $region35: #{generator_forward.7} parent=5 // pred_region
      // Predicated region
      $region37: #{generator_forward.7} parent=35 // pred_check
        %p203 = pneg %p32
      $region38: #{generator_forward.7} parent=35 // pred_check_branch
        %205 = sbr.rel (%p203) target = $region40
      $region39: #{generator_forward.7} parent=35 // pred_region
        %p206 = scmp.lt.s32.totalorder %s12, 1
        %s207 = scalar_select %p206, %s12, 1
        %s208 = smul.addr %s207, 2
        %s209 = smul.addr %s208, 4
        %s210 = scalar_lea.vmem %s0, %s209
      $region40: #{generator_forward.7} parent=35 // pred_fallthru
        _
    $region36: #{generator_forward.7} parent=5 // pred_fallthru
      _
    %p211 = scmp.le.s32.totalorder 1, %s12
    %p212 = scmp.lt.s32.totalorder %s12, 3
    %p213 = pnand %p211, %p212
    %p214 = pneg %p213
    // Predicated region
    $region41: #{generator_forward.7} parent=5 // pred_check
      _
    $region42: #{generator_forward.7} parent=5 // pred_check_branch
      %216 = sbr.rel (%p213) target = $region44
    $region43: #{generator_forward.7} parent=5 // pred_region
      %s217 = ssub.s32 %s12, 1
      %p218 = scmp.lt.s32.totalorder %s17, 1
      %s219 = scalar_select %p218, %s17, 1
      %s220 = smul.addr %s219, 2
      %s221 = smul.addr %s220, 4
      %s222 = scalar_lea.vmem %s0, %s221
      %p223 = pneg %p38
      %p224 = pneg %p35
      %p225 = pneg %p59
      %p226 = pneg %p56
      %p227 = pneg %p80
      %p228 = pneg %p77
      %p229 = pneg %p101
      %p230 = pneg %p98
      %p231 = pneg %p122
      %p232 = pneg %p119
      %p233 = pneg %p143
      %p234 = pneg %p140
      %p235 = pneg %p169
      %p236 = pneg %p166
      %p237 = scmp.lt.s32.totalorder %s17, 1
      %s238 = scalar_select %p237, %s17, 1
      %s239 = smul.addr %s238, 4
      %s240 = scalar_lea.vmem %s6, %s239
      %p241 = scmp.lt.s32.totalorder %s17, 1
      %s242 = scalar_select %p241, %s17, 1
      %s243 = smul.addr %s242, 2
      %s244 = smul.addr %s243, 4
      %s245 = scalar_lea.vmem %s0, %s244
      %p246 = scmp.lt.s32.totalorder %s17, 1
      %s247 = scalar_select %p246, %s17, 1
      %s248 = smul.addr %s247, 4
      %s249 = scalar_lea.vmem %s6, %s248
      %v251 = vld [vmem:[%s245] sm:$0xf]
      %v252 = vld [vmem:[%s245 + $0x4] sm:$0xf]
      %v253 = vld [vmem:[%s1] sm:$0xff]
      %v254 = vld [vmem:[%s2] sm:$0xff]
      %v255 = vld [vmem:[%s3] sm:$0xf]
      %v256 = vld [vmem:[%s4] sm:$0xff]
      %v257 = vlaneseq
      %v258 = vand.u32 %v257, 127
      %vm259 = vcmp.lt.s32.totalorder %v258, 0
      %v260 = vsub.s32 0, %v258
      %v261 = vsel %vm259, %v260, %v258
      %v262 = vshrl.u32 %v261, 3
      %v263 = vand.u32 %v261, 7
      %v264 = vsub.s32 0, %v263
      %v265 = vsel %vm259, %v264, %v263
      %vm266 = vcmp.ne.s32.totalorder %v265, 0
      %vm267 = vcmp.lt.s32.totalorder %v265, 0
      %vm268 = vmand %vm267, %vm266
      %v269 = vadd.s32 %v265, 8
      %v270 = vsel %vm268, %v269, %v265
      %vm271 = vcmp.gt.s32.totalorder %v270, 0
      %vm272 = vcmp.lt.s32.totalorder %v270, 7
      %v273 = vunpack.c.l.bf16 %v251
      %v274 = vunpack.c.l.bf16 %v252
      %v275 = vmul.f32 %v273, 0.2
      %v276 = vmul.f32 %v274, 0.2
      %v277 = vmax.f32 %v273, %v275
      %v278 = vmax.f32 %v274, %v276
      %279 = vst [vmem:[#allocation2] sm:$0xff] 0.0
      %280 = vst [vmem:[#allocation2 + $0x8] sm:$0xff] 0.0
      %281 = vst [vmem:[#allocation2 + $0x10] sm:$0xff] 0.0
      %282 = vst [vmem:[#allocation2 + $0x18] sm:$0xff] 0.0
      %vm283 = vcmask 523264
      %284 = vst.msk [vmem:[#allocation2 + $0x8] sm:$0xff] %vm283, %v277
      %285 = vst.msk [vmem:[#allocation2 + $0x18] sm:$0xff] %vm283, %v278
      %v286 = vld [vmem:[#allocation2] sm:$0xff]
      %v287 = vld [vmem:[#allocation2 + $0x8] sm:$0xff]
      %v288 = vld [vmem:[#allocation2 + $0x10] sm:$0xff]
      %v289 = vld [vmem:[#allocation2 + $0x18] sm:$0xff]
      %v290 = vsel %vm271, 1, 0
      %vm291 = vcmp.eq.s32.totalorder %v290, 1
      %296 = vrot.lane.b32.xlu0 %v286, 9
      %v297 = vpop.permute.xlu0 %296
      %298 = vrot.lane.b32.xlu0 %v287, 9
      %v299 = vpop.permute.xlu0 %298
      %300 = vrot.lane.b32.xlu0 %v288, 9
      %v301 = vpop.permute.xlu0 %300
      %302 = vrot.lane.b32.xlu0 %v289, 9
      %v303 = vpop.permute.xlu0 %302
      %vm304 = vcmask 72704
      %v305 = vsel %vm304, %v297, %v299
      %v306 = vsel %vm304, %v301, %v303
      %v309 = vsel %vm291, %v305, 0.0
      %v310 = vsel %vm291, %v306, 0.0
      %v311 = vsel %vm272, 1, 0
      %vm312 = vcmp.eq.s32.totalorder %v311, 1
      %313 = vrot.lane.b32.xlu0 %v286, 7
      %v314 = vpop.permute.xlu0 %313
      %315 = vrot.lane.b32.xlu0 %v287, 7
      %v316 = vpop.permute.xlu0 %315
      %317 = vrot.lane.b32.xlu0 %v288, 7
      %v318 = vpop.permute.xlu0 %317
      %319 = vrot.lane.b32.xlu0 %v289, 7
      %v320 = vpop.permute.xlu0 %319
      %vm321 = vcmask 56320
      %v322 = vsel %vm321, %v314, %v316
      %v323 = vsel %vm321, %v318, %v320
      %v326 = vsel %vm312, %v322, 0.0
      %v327 = vsel %vm312, %v323, 0.0
      %328 = vrot.lane.b32.xlu0 %v286, 1
      %v329 = vpop.permute.xlu0 %328
      %330 = vrot.lane.b32.xlu0 %v287, 1
      %v331 = vpop.permute.xlu0 %330
      %332 = vrot.lane.b32.xlu0 %v288, 1
      %v333 = vpop.permute.xlu0 %332
      %334 = vrot.lane.b32.xlu0 %v289, 1
      %v335 = vpop.permute.xlu0 %334
      %vm336 = vcmask 7168
      %v337 = vsel %vm336, %v329, %v331
      %v338 = vsel %vm336, %v333, %v335
      %v341 = vsel %vm291, %v337, 0.0
      %v342 = vsel %vm291, %v338, 0.0
      %343 = vrot.lane.b32.xlu0 %v287, 127
      %v344 = vpop.permute.xlu0 %343
      %345 = vrot.lane.b32.xlu0 %v289, 127
      %v346 = vpop.permute.xlu0 %345
      %v349 = vsel %vm312, %v344, 0.0
      %v350 = vsel %vm312, %v346, 0.0
      %351 = vrot.lane.b32.xlu0 %v287, 121
      %v352 = vpop.permute.xlu0 %351
      %353 = vrot.lane.b32.xlu0 %v289, 121
      %v354 = vpop.permute.xlu0 %353
      %v357 = vsel %vm291, %v352, 0.0
      %v358 = vsel %vm291, %v354, 0.0
      %359 = vrot.lane.b32.xlu0 %v287, 119
      %v360 = vpop.permute.xlu0 %359
      %361 = vrot.lane.b32.xlu0 %v289, 119
      %v362 = vpop.permute.xlu0 %361
      %v365 = vsel %vm312, %v360, 0.0
      %v366 = vsel %vm312, %v362, 0.0
      %367 = vrot.lane.b32.xlu0 %v286, 8
      %v368 = vpop.permute.xlu0 %367
      %369 = vrot.lane.b32.xlu0 %v287, 8
      %v370 = vpop.permute.xlu0 %369
      %371 = vrot.lane.b32.xlu0 %v288, 8
      %v372 = vpop.permute.xlu0 %371
      %373 = vrot.lane.b32.xlu0 %v289, 8
      %v374 = vpop.permute.xlu0 %373
      %vm375 = vcmask 64512
      %v376 = vsel %vm375, %v368, %v370
      %v377 = vsel %vm375, %v372, %v374
      %380 = vrot.lane.b32.xlu0 %v287, 120
      %v381 = vpop.permute.xlu0 %380
      %382 = vrot.lane.b32.xlu0 %v289, 120
      %v383 = vpop.permute.xlu0 %382
      %v386 = vpack.c.bf16 %v310, %v309
      %v387 = vpack.c.bf16 %v377, %v376
      %v388 = vpack.c.bf16 %v327, %v326
      %v389 = vpack.c.bf16 %v342, %v341
      %v390 = vpack.c.bf16 %v289, %v287
      %v391 = vpack.c.bf16 %v350, %v349
      %v392 = vpack.c.bf16 %v358, %v357
      %v393 = vpack.c.bf16 %v383, %v381
      %v394 = vpack.c.bf16 %v366, %v365
      %396 = vset.pattern.permute.xlu0 0
      %397 = vperm.xlu0 %396, %v254
      %v398 = vpop.permute.xlu0 %397
      %v401 = vunpack.c.l.b16 %v253
      %v402 = vunpack.c.h.b16 %v253
      %v403 = vpack.c.b16 %v401, %v401
      %v404 = vpack.c.b16 %v402, %v402
      %vm406 = vcmask 130048
      %v408 = vsel %vm406, %v404, 0
      %410 = vmatprep.subr.bf16.mxu0 0
      %411 = vmatpush1.bf16.msra.mxu0 %v386
      %412 = vmatprep.subr.bf16.mxu0 0
      %413 = vmatpush1.bf16.msra.mxu0 %v387
      %414 = vmatprep.subr.bf16.mxu0 0
      %415 = vmatpush1.bf16.msra.mxu0 %v388
      %416 = vmatprep.subr.bf16.mxu0 0
      %417 = vmatpush1.bf16.msra.mxu0 %v389
      %418 = vmatprep.subr.bf16.mxu0 0
      %419 = vmatpush1.bf16.msra.mxu0 %v390
      %420 = vmatprep.subr.bf16.mxu0 0
      %421 = vmatpush1.bf16.msra.mxu0 %v391
      %422 = vmatprep.subr.bf16.mxu0 0
      %423 = vmatpush1.bf16.msra.mxu0 %v392
      %424 = vmatprep.subr.bf16.mxu0 0
      %425 = vmatpush1.bf16.msra.mxu0 %v393
      %426 = vmatprep.subr.bf16.mxu0 0
      %427 = vmatpush1.bf16.msra.mxu0 %v394
      %428 = vmatprep.subr.bf16.mxu0 0
      %429 = vmatpush1.bf16.msra.mxu0 0
      %430 = vmatprep.subr.bf16.mxu0 0
      %431 = vmatpush1.bf16.msra.mxu0 0
      %432 = vmatprep.subr.bf16.mxu0 0
      %433 = vmatpush1.bf16.msra.mxu0 0
      %434 = vmatprep.subr.bf16.mxu0 0
      %435 = vmatpush1.bf16.msra.mxu0 0
      %436 = vmatprep.subr.bf16.mxu0 0
      %437 = vmatpush1.bf16.msra.mxu0 0
      %438 = vmatprep.subr.bf16.mxu0 0
      %439 = vmatpush1.bf16.msra.mxu0 0
      %440 = vmatprep.subr.bf16.mxu0 0
      %441 = vmatpush1.bf16.msra.mxu0 0
      %442 = vmatprep.mubr.bf16.mxu0 %v408
      %443 = vmatmul.mubr.bf16.gmra.mrb[0].mxu0 %v403
      %v444 = vpop.f32.mrb[0].mxu0
      %v445 = vadd.f32 %v398, %v444
      %v446 = vpop.f32.mrb[0].mxu0
      %v447 = vpop.f32.mrb[0].mxu0
      %v448 = vpop.f32.mrb[0].mxu0
      %449 = vdwg.mxu0
      %v450 = vmul.f32 %v445, 0.2
      %v451 = vmax.f32 %v445, %v450
      %452 = vst [vmem:[#allocation3] sm:$0xff] 0.0
      %453 = vst [vmem:[#allocation3 + $0x8] sm:$0xff] 0.0
      %454 = vst.msk [vmem:[#allocation3 + $0x8] sm:$0xff] %vm283, %v451
      %v455 = vld [vmem:[#allocation3] sm:$0xff]
      %v456 = vld [vmem:[#allocation3 + $0x8] sm:$0xff]
      %459 = vrot.lane.b32.xlu0 %v455, 9
      %v460 = vpop.permute.xlu0 %459
      %461 = vrot.lane.b32.xlu0 %v456, 9
      %v462 = vpop.permute.xlu0 %461
      %v463 = vsel %vm304, %v460, %v462
      %v465 = vsel %vm291, %v463, 0.0
      %466 = vrot.lane.b32.xlu0 %v455, 7
      %v467 = vpop.permute.xlu0 %466
      %468 = vrot.lane.b32.xlu0 %v456, 7
      %v469 = vpop.permute.xlu0 %468
      %v470 = vsel %vm321, %v467, %v469
      %v472 = vsel %vm312, %v470, 0.0
      %473 = vrot.lane.b32.xlu0 %v455, 1
      %v474 = vpop.permute.xlu0 %473
      %475 = vrot.lane.b32.xlu0 %v456, 1
      %v476 = vpop.permute.xlu0 %475
      %v477 = vsel %vm336, %v474, %v476
      %v479 = vsel %vm291, %v477, 0.0
      %480 = vrot.lane.b32.xlu0 %v456, 127
      %v481 = vpop.permute.xlu0 %480
      %v483 = vsel %vm312, %v481, 0.0
      %484 = vrot.lane.b32.xlu0 %v456, 121
      %v485 = vpop.permute.xlu0 %484
      %v487 = vsel %vm291, %v485, 0.0
      %488 = vrot.lane.b32.xlu0 %v456, 119
      %v489 = vpop.permute.xlu0 %488
      %v491 = vsel %vm312, %v489, 0.0
      %492 = vrot.lane.b32.xlu0 %v455, 8
      %v493 = vpop.permute.xlu0 %492
      %494 = vrot.lane.b32.xlu0 %v456, 8
      %v495 = vpop.permute.xlu0 %494
      %v496 = vsel %vm375, %v493, %v495
      %498 = vrot.lane.b32.xlu0 %v456, 120
      %v499 = vpop.permute.xlu0 %498
      %v501 = vpack.c.bf16 %v496, %v465
      %v502 = vpack.c.bf16 %v479, %v472
      %v503 = vpack.c.bf16 %v483, %v456
      %v504 = vpack.c.bf16 %v499, %v487
      %v505 = vpack.c.bf16 %v491, %v491
      %507 = vset.pattern.permute.xlu0 0
      %508 = vperm.xlu0 %507, %v256
      %v509 = vpop.permute.xlu0 %508
      %vm511 = vcmask 588800
      %v513 = vsel %vm511, %v255, 0
      %vm515 = vcmask 1043456
      %v517 = vsel %vm515, %v505, 0
      %519 = vmatprep.subr.bf16.mxu0 0
      %520 = vmatpush1.bf16.msra.mxu0 %v501
      %521 = vmatprep.subr.bf16.mxu0 0
      %522 = vmatpush1.bf16.msra.mxu0 %v502
      %523 = vmatprep.subr.bf16.mxu0 0
      %524 = vmatpush1.bf16.msra.mxu0 %v503
      %525 = vmatprep.subr.bf16.mxu0 0
      %526 = vmatpush1.bf16.msra.mxu0 %v504
      %527 = vmatprep.subr.bf16.mxu0 0
      %528 = vmatpush1.bf16.msra.mxu0 %v517
      %529 = vmatprep.subr.bf16.mxu0 0
      %530 = vmatpush1.bf16.msra.mxu0 0
      %531 = vmatprep.subr.bf16.mxu0 0
      %532 = vmatpush1.bf16.msra.mxu0 0
      %533 = vmatprep.subr.bf16.mxu0 0
      %534 = vmatpush1.bf16.msra.mxu0 0
      %535 = vmatprep.subr.bf16.mxu0 0
      %536 = vmatpush1.bf16.msra.mxu0 0
      %537 = vmatprep.subr.bf16.mxu0 0
      %538 = vmatpush1.bf16.msra.mxu0 0
      %539 = vmatprep.subr.bf16.mxu0 0
      %540 = vmatpush1.bf16.msra.mxu0 0
      %541 = vmatprep.subr.bf16.mxu0 0
      %542 = vmatpush1.bf16.msra.mxu0 0
      %543 = vmatprep.subr.bf16.mxu0 0
      %544 = vmatpush1.bf16.msra.mxu0 0
      %545 = vmatprep.subr.bf16.mxu0 0
      %546 = vmatpush1.bf16.msra.mxu0 0
      %547 = vmatprep.subr.bf16.mxu0 0
      %548 = vmatpush1.bf16.msra.mxu0 0
      %549 = vmatprep.subr.bf16.mxu0 0
      %550 = vmatpush1.bf16.msra.mxu0 0
      %551 = vmatprep.mubr.bf16.mxu0 0
      %552 = vmatmul.mubr.bf16.gmra.mrb[0].mxu0 %v513
      %v553 = vpop.f32.mrb[0].mxu0
      %v554 = vadd.f32 %v509, %v553
      %v555 = vpop.f32.mrb[0].mxu0
      %v556 = vpop.f32.mrb[0].mxu0
      %v557 = vpop.f32.mrb[0].mxu0
      %558 = vdwg.mxu0
      %v559 = vld [vmem:[%s5] sm:$0xf]
      %v560 = vmul.f32 %v554, 0.1
      %v563 = vunpack.c.l.b16 %v251
      %v564 = vunpack.c.l.b16 %v252
      %v565 = vpack.c.b16 %v564, %v563
      %v568 = vsel %vm406, %v559, 0
      %570 = vmatprep.subr.bf16.mxu0 0
      %571 = vmatpush1.bf16.msra.mxu0 %v565
      %572 = vmatprep.subr.bf16.mxu0 0
      %573 = vmatpush1.bf16.msra.mxu0 0
      %574 = vmatprep.subr.bf16.mxu0 0
      %575 = vmatpush1.bf16.msra.mxu0 0
      %576 = vmatprep.subr.bf16.mxu0 0
      %577 = vmatpush1.bf16.msra.mxu0 0
      %578 = vmatprep.subr.bf16.mxu0 0
      %579 = vmatpush1.bf16.msra.mxu0 0
      %580 = vmatprep.subr.bf16.mxu0 0
      %581 = vmatpush1.bf16.msra.mxu0 0
      %582 = vmatprep.subr.bf16.mxu0 0
      %583 = vmatpush1.bf16.msra.mxu0 0
      %584 = vmatprep.subr.bf16.mxu0 0
      %585 = vmatpush1.bf16.msra.mxu0 0
      %586 = vmatprep.subr.bf16.mxu0 0
      %587 = vmatpush1.bf16.msra.mxu0 0
      %588 = vmatprep.subr.bf16.mxu0 0
      %589 = vmatpush1.bf16.msra.mxu0 0
      %590 = vmatprep.subr.bf16.mxu0 0
      %591 = vmatpush1.bf16.msra.mxu0 0
      %592 = vmatprep.subr.bf16.mxu0 0
      %593 = vmatpush1.bf16.msra.mxu0 0
      %594 = vmatprep.subr.bf16.mxu0 0
      %595 = vmatpush1.bf16.msra.mxu0 0
      %596 = vmatprep.subr.bf16.mxu0 0
      %597 = vmatpush1.bf16.msra.mxu0 0
      %598 = vmatprep.subr.bf16.mxu0 0
      %599 = vmatpush1.bf16.msra.mxu0 0
      %600 = vmatprep.subr.bf16.mxu0 0
      %601 = vmatpush1.bf16.msra.mxu0 0
      %602 = vmatprep.mubr.bf16.mxu0 0
      %603 = vmatmul.mubr.bf16.gmra.mrb[0].mxu0 %v568
      %v604 = vpop.f32.mrb[0].mxu0
      %v605 = vadd.f32 %v560, %v604
      %v606 = vpop.f32.mrb[0].mxu0
      %v607 = vpop.f32.mrb[0].mxu0
      %v608 = vpop.f32.mrb[0].mxu0
      %609 = vdwg.mxu0
      %v610 = vpack.c.bf16 %v605, %v605
      %vm611 = vcmask 519168
      %612 = vst.msk [vmem:[%s249] sm:$0xf] %vm611, %v610
      %p613 = scmp.lt.s32.totalorder %s17, 1
      %s614 = scalar_select %p613, %s17, 1
      %s615 = smul.addr %s614, 4
      %s616 = scalar_lea.vmem %s6, %s615
      // Predicated region
      $region45: #{generator_forward.7} parent=43 // pred_check
        %p617 = pneg %p166
      $region46: #{generator_forward.7} parent=43 // pred_check_branch
        %619 = sbr.rel (%p617) target = $region48
      $region47: #{generator_forward.7} parent=43 // pred_region
        _
      $region48: #{generator_forward.7} parent=43 // pred_fallthru
        _
    $region44: #{generator_forward.7} parent=5 // pred_fallthru
      _
    %p620 = scmp.le.s32.totalorder 2, %s12
    // Predicated region
    $region49: #{generator_forward.7} parent=5 // pred_check
      %p621 = pneg %p620
    $region50: #{generator_forward.7} parent=5 // pred_check_branch
      %623 = sbr.rel (%p621) target = $region52
    $region51: #{generator_forward.7} parent=5 // pred_region
      %s624 = ssub.s32 %s12, 2
      // Predicated region
      $region53: #{generator_forward.7} parent=51 // pred_check
        %p625 = pneg %p172
      $region54: #{generator_forward.7} parent=51 // pred_check_branch
        %627 = sbr.rel (%p625) target = $region56
      $region55: #{generator_forward.7} parent=51 // pred_region
        %p628 = scmp.lt.s32.totalorder %s18, 1
        %s629 = scalar_select %p628, %s18, 1
        %s630 = smul.addr %s629, 4
        %s631 = scalar_lea.vmem %s6, %s630
      $region56: #{generator_forward.7} parent=51 // pred_fallthru
        _
    $region52: #{generator_forward.7} parent=5 // pred_fallthru
      _
  $region6: #{generator_forward.7} parent=0 // loop_footer
    %s16 = sadd.s32 1, %s12
  $region7: #{generator_forward.7} parent=0 // loop_footer_branch
    %11 = sbr.rel target = $region3
  $region8: #{generator_forward.7} parent=0 // loop_exit
    _

// kernel: generator_forward.9
$region0: #{generator_forward.9}
  #allocation0 [shape = 'u32[]', space=smem, size = 0x4, offset = 0x4, fixed_abs, tag = 'smem constant byte address 0x4 - core index']
  #allocation1 [shape = 'u32[144,128]{1,0:T(1,128)}', space=vmem, size = 0x12000, scoped, tag = 'internal scratch']
  #allocation2 [shape = 'f32[8,512]{1,0:T(8,128)}', space=vmem, size = 0x4000, scoped, tag = 'scratch operand']
  %s0 = inlined_call_operand.vmem [shape: bf16[2,8,256], index: 0, kind: input, shape index: {}]
  %s1 = inlined_call_operand.vmem [shape: bf16[3,72], index: 1, kind: input, shape index: {}]
  %s2 = inlined_call_operand.vmem [shape: f32[3,1], index: 2, kind: input, shape index: {}]
  %s3 = inlined_call_operand.vmem [shape: f32[2,3,256], index: 3, kind: output, shape index: {}]
  %s4 = sld [smem:[#allocation0]]
  $region45: #{generator_forward.9} parent=0
    _
  %s6 = ssub.s32 1, %s4
  %s7 = scalar_select 0, %s6, %s4
  loop: start=0, step=1, limit=4
  $region2: #{generator_forward.9} parent=0 // loop_pre_header
    _
  $region3: #{generator_forward.9} parent=0 // loop_header
    %s9 = sphi 0, %s13
    %p10 = scmp.ge.s32.totalorder %s9, 4
    %s19 = sphi 0, %s21
    %s22 = sphi 0, %s19
    %s23 = sphi 0, %s22
    %s39 = sphi 0, %s23
    %s43 = sphi 0, %s43
    %s45 = sphi 0, %s43
    %s46 = sphi 0, %s45
    %s60 = sphi 0, %s46
    %s64 = sphi 0, %s64
    %s66 = sphi 0, %s64
    %s67 = sphi 0, %s66
    %s81 = sphi 0, %s67
    %s87 = sphi 0, %s89
    %s90 = sphi 0, %s87
    %s91 = sphi 0, %s90
    %s107 = sphi 0, %s91
  $region4: #{generator_forward.9} parent=0 // loop_header_branch
    %12 = sbr.rel (%p10) target = $region8
  $region5: #{generator_forward.9} parent=0 // loop_body
    %s14 = ssub.s32 %s9, 1
    %s15 = ssub.s32 %s9, 2
    %s16 = sadd.s32 %s9, 1
    %s17 = ssub.s32 %s9, %s16
    %p18 = scmp.eq.s32.totalorder %s17, 0
    %s20 = sadd.s32 %s19, 1
    %s21 = scalar_select %p18, %s19, %s20
    %p24 = pneg %p18
    %p25 = scmp.eq.s32.totalorder %s9, 1
    %p26 = por %p24, %p25
    %p27 = scmp.ne.s32.totalorder %s19, %s22
    %p28 = scmp.eq.s32.totalorder %s9, 0
    %p29 = por %p27, %p28
    %p30 = scmp.ne.s32.totalorder %s19, %s22
    %p31 = scmp.eq.s32.totalorder %s14, 1
    %p32 = por %p30, %p31
    %p33 = scmp.ne.s32.totalorder %s22, %s23
    %p34 = scmp.eq.s32.totalorder %s14, 0
    %p35 = por %p33, %p34
    %p36 = scmp.ne.s32.totalorder %s22, %s23
    %p37 = scmp.eq.s32.totalorder %s15, 1
    %p38 = por %p36, %p37
    %p40 = scmp.ne.s32.totalorder %s23, %s39
    %p41 = scmp.eq.s32.totalorder %s15, 0
    %p42 = por %p40, %p41
    %s44 = sadd.s32 %s43, 1
    %p47 = scmp.eq.s32.totalorder %s9, 1
    %p48 = scmp.ne.s32.totalorder %s43, %s45
    %p49 = scmp.eq.s32.totalorder %s9, 0
    %p50 = por %p48, %p49
    %p51 = scmp.ne.s32.totalorder %s43, %s45
    %p52 = scmp.eq.s32.totalorder %s14, 1
    %p53 = por %p51, %p52
    %p54 = scmp.ne.s32.totalorder %s45, %s46
    %p55 = scmp.eq.s32.totalorder %s14, 0
    %p56 = por %p54, %p55
    %p57 = scmp.ne.s32.totalorder %s45, %s46
    %p58 = scmp.eq.s32.totalorder %s15, 1
    %p59 = por %p57, %p58
    %p61 = scmp.ne.s32.totalorder %s46, %s60
    %p62 = scmp.eq.s32.totalorder %s15, 0
    %p63 = por %p61, %p62
    %s65 = sadd.s32 %s64, 1
    %p68 = scmp.eq.s32.totalorder %s9, 1
    %p69 = scmp.ne.s32.totalorder %s64, %s66
    %p70 = scmp.eq.s32.totalorder %s9, 0
    %p71 = por %p69, %p70
    %p72 = scmp.ne.s32.totalorder %s64, %s66
    %p73 = scmp.eq.s32.totalorder %s14, 1
    %p74 = por %p72, %p73
    %p75 = scmp.ne.s32.totalorder %s66, %s67
    %p76 = scmp.eq.s32.totalorder %s14, 0
    %p77 = por %p75, %p76
    %p78 = scmp.ne.s32.totalorder %s66, %s67
    %p79 = scmp.eq.s32.totalorder %s15, 1
    %p80 = por %p78, %p79
    %p82 = scmp.ne.s32.totalorder %s67, %s81
    %p83 = scmp.eq.s32.totalorder %s15, 0
    %p84 = por %p82, %p83
    %s85 = ssub.s32 %s9, %s16
    %p86 = scmp.eq.s32.totalorder %s85, 0
    %s88 = sadd.s32 %s87, 1
    %s89 = scalar_select %p86, %s87, %s88
    %p92 = pneg %p86
    %p93 = scmp.eq.s32.totalorder %s9, 1
    %p94 = por %p92, %p93
    %p95 = scmp.ne.s32.totalorder %s87, %s90
    %p96 = scmp.eq.s32.totalorder %s9, 0
    %p97 = por %p95, %p96
    %p98 = scmp.ne.s32.totalorder %s87, %s90
    %p99 = scmp.eq.s32.totalorder %s14, 1
    %p100 = por %p98, %p99
    %p101 = scmp.ne.s32.totalorder %s90, %s91
    %p102 = scmp.eq.s32.totalorder %s14, 0
    %p103 = por %p101, %p102
    %p104 = scmp.ne.s32.totalorder %s90, %s91
    %p105 = scmp.eq.s32.totalorder %s15, 1
    %p106 = por %p104, %p105
    %p108 = scmp.ne.s32.totalorder %s91, %s107
    %p109 = scmp.eq.s32.totalorder %s15, 0
    %p110 = por %p108, %p109
    %p111 = scmp.le.s32.totalorder 1, %s9
    %p112 = scmp.lt.s32.totalorder %s9, 3
    %p113 = pnand %p111, %p112
    %p114 = pneg %p113
    // Predicated region
    $region9: #{generator_forward.9} parent=5 // pred_check
      _
    $region10: #{generator_forward.9} parent=5 // pred_check_branch
      %116 = sbr.rel (%p113) target = $region12
    $region11: #{generator_forward.9} parent=5 // pred_region
      %s117 = ssub.s32 %s9, 1
      // Predicated region
      $region13: #{generator_forward.9} parent=11 // pred_check
        %p118 = pneg %p56
      $region14: #{generator_forward.9} parent=11 // pred_check_branch
        %120 = sbr.rel (%p118) target = $region16
      $region15: #{generator_forward.9} parent=11 // pred_region
        _
      $region16: #{generator_forward.9} parent=11 // pred_fallthru
        _
      // Predicated region
      $region17: #{generator_forward.9} parent=11 // pred_check
        %p121 = pneg %p77
      $region18: #{generator_forward.9} parent=11 // pred_check_branch
        %123 = sbr.rel (%p121) target = $region20
      $region19: #{generator_forward.9} parent=11 // pred_region
        _
      $region20: #{generator_forward.9} parent=11 // pred_fallthru
        _
    $region12: #{generator_forward.9} parent=5 // pred_fallthru
      _
    %p124 = scmp.lt.s32.totalorder %s9, 2
    // Predicated region
    $region21: #{generator_forward.9} parent=5 // pred_check
      %p125 = pneg %p124
    $region22: #{generator_forward.9} parent=5 // pred_check_branch
      %127 = sbr.rel (%p125) target = $region24
    $region23: #{generator_forward.9} parent=5 // pred_region
      // Predicated region
      $region25: #{generator_forward.9} parent=23 // pred_check
        %p128 = pneg %p29
      $region26: #{generator_forward.9} parent=23 // pred_check_branch
        %130 = sbr.rel (%p128) target = $region28
      $region27: #{generator_forward.9} parent=23 // pred_region
        %p131 = scmp.lt.s32.totalorder %s9, 1
        %s132 = scalar_select %p131, %s9, 1
        %s133 = smul.addr %s132, 2
        %s134 = smul.addr %s133, 4
        %s135 = scalar_lea.vmem %s0, %s134
      $region28: #{generator_forward.9} parent=23 // pred_fallthru
        _
    $region24: #{generator_forward.9} parent=5 // pred_fallthru
      _
    %p136 = scmp.le.s32.totalorder 1, %s9
    %p137 = scmp.lt.s32.totalorder %s9, 3
    %p138 = pnand %p136, %p137
    %p139 = pneg %p138
    // Predicated region
    $region29: #{generator_forward.9} parent=5 // pred_check
      _
    $region30: #{generator_forward.9} parent=5 // pred_check_branch
      %141 = sbr.rel (%p138) target = $region32
    $region31: #{generator_forward.9} parent=5 // pred_region
      %s142 = ssub.s32 %s9, 1
      %p143 = scmp.lt.s32.totalorder %s14, 1
      %s144 = scalar_select %p143, %s14, 1
      %s145 = smul.addr %s144, 2
      %s146 = smul.addr %s145, 4
      %s147 = scalar_lea.vmem %s0, %s146
      %p148 = pneg %p35
      %p149 = pneg %p32
      %p150 = pneg %p56
      %p151 = pneg %p53
      %p152 = pneg %p77
      %p153 = pneg %p74
      %p154 = pneg %p103
      %p155 = pneg %p100
      %p156 = scmp.lt.s32.totalorder %s14, 1
      %s157 = scalar_select %p156, %s14, 1
      %s158 = smul.addr %s157, 2
      %s159 = smul.addr %s158, 4
      %s160 = scalar_lea.vmem %s3, %s159
      %p161 = scmp.lt.s32.totalorder %s14, 1
      %s162 = scalar_select %p161, %s14, 1
      %s163 = smul.addr %s162, 2
      %s164 = smul.addr %s163, 4
      %s165 = scalar_lea.vmem %s0, %s164
      %p166 = scmp.lt.s32.totalorder %s14, 1
      %s167 = scalar_select %p166, %s14, 1
      %s168 = smul.addr %s167, 2
      %s169 = smul.addr %s168, 4
      %s170 = scalar_lea.vmem %s3, %s169
      %v172 = vlaneseq
      %v173 = vand.u32 %v172, 127
      %v174 = vadd.s32 %v173, 128
      %vm175 = vcmp.lt.s32.totalorder %v173, 0
      %v176 = vsub.s32 0, %v173
      %v177 = vsel %vm175, %v176, %v173
      %v178 = vshrl.u32 %v177, 4
      %v179 = vand.u32 %v177, 15
      %v180 = vsub.s32 0, %v179
      %v181 = vsel %vm175, %v180, %v179
      %vm182 = vcmp.lt.s32.totalorder %v174, 0
      %v183 = vsub.s32 0, %v174
      %v184 = vsel %vm182, %v183, %v174
      %v185 = vshrl.u32 %v184, 4
      %v186 = vand.u32 %v184, 15
      %v187 = vsub.s32 0, %v186
      %v188 = vsel %vm182, %v187, %v186
      %vm189 = vcmp.ne.s32.totalorder %v181, 0
      %vm190 = vcmp.ne.s32.totalorder %v188, 0
      %vm191 = vcmp.lt.s32.totalorder %v181, 0
      %vm192 = vcmp.lt.s32.totalorder %v188, 0
      %vm193 = vmand %vm191, %vm189
      %vm194 = vmand %vm192, %vm190
      %v195 = vadd.s32 %v181, 16
      %v196 = vadd.s32 %v188, 16
      %v197 = vsel %vm193, %v195, %v181
      %v198 = vsel %vm194, %v196, %v188
      %vm199 = vcmp.gt.s32.totalorder %v197, 0
      %vm200 = vcmp.gt.s32.totalorder %v198, 0
      %vm201 = vcmp.lt.s32.totalorder %v197, 15
      %vm202 = vcmp.lt.s32.totalorder %v198, 15
      %v203 = vld [vmem:[%s165] sm:$0xff]
      %v204 = vunpack.c.l.bf16 %v203
      %v205 = vunpack.c.h.bf16 %v203
      %v206 = vmul.f32 %v204, 0.2
      %v207 = vmul.f32 %v205, 0.2
      %v208 = vmax.f32 %v204, %v206
      %v209 = vmax.f32 %v205, %v207
      %210 = vst [vmem:[#allocation2] sm:$0xff] 0.0
      %211 = vst [vmem:[#allocation2 + $0x8] sm:$0xff] 0.0
      %212 = vst [vmem:[#allocation2 + $0x10] sm:$0xff] 0.0
      %213 = vst [vmem:[#allocation2 + $0x18] sm:$0xff] 0.0
      %214 = vst [vmem:[#allocation2 + $0x8] sm:$0xff] %v208
      %215 = vst [vmem:[#allocation2 + $0x10] sm:$0xff] %v209
      %v216 = vld [vmem:[#allocation2] sm:$0xff]
      %v217 = vld [vmem:[#allocation2 + $0x8] sm:$0xff]
      %v218 = vld [vmem:[#allocation2 + $0x10] sm:$0xff]
      %v219 = vld [vmem:[#allocation2 + $0x18] sm:$0xff]
      %v220 = vld [vmem:[%s1] sm:$0x3]
      %v221 = vsel %vm199, 1, 0
      %v222 = vsel %vm200, 1, 0
      %vm223 = vcmp.eq.s32.totalorder %v221, 1
      %vm224 = vcmp.eq.s32.totalorder %v222, 1
      %228 = vrot.lane.b32.xlu0 %v216, 17
      %v229 = vpop.permute.xlu0 %228
      %230 = vrot.lane.b32.xlu0 %v217, 17
      %v231 = vpop.permute.xlu0 %230
      %232 = vrot.lane.b32.xlu0 %v218, 17
      %v233 = vpop.permute.xlu0 %232
      %vm234 = vcmask 138240
      %v235 = vsel %vm234, %v229, %v231
      %v236 = vsel %vm234, %v231, %v233
      %v239 = vsel %vm223, %v235, 0.0
      %v240 = vsel %vm224, %v236, 0.0
      %v241 = vsel %vm201, 1, 0
      %v242 = vsel %vm202, 1, 0
      %vm243 = vcmp.eq.s32.totalorder %v241, 1
      %vm244 = vcmp.eq.s32.totalorder %v242, 1
      %245 = vrot.lane.b32.xlu0 %v216, 15
      %v246 = vpop.permute.xlu0 %245
      %247 = vrot.lane.b32.xlu0 %v217, 15
      %v248 = vpop.permute.xlu0 %247
      %249 = vrot.lane.b32.xlu0 %v218, 15
      %v250 = vpop.permute.xlu0 %249
      %vm251 = vcmask 121856
      %v252 = vsel %vm251, %v246, %v248
      %v253 = vsel %vm251, %v248, %v250
      %v256 = vsel %vm243, %v252, 0.0
      %v257 = vsel %vm244, %v253, 0.0
      %258 = vrot.lane.b32.xlu0 %v216, 1
      %v259 = vpop.permute.xlu0 %258
      %260 = vrot.lane.b32.xlu0 %v217, 1
      %v261 = vpop.permute.xlu0 %260
      %262 = vrot.lane.b32.xlu0 %v218, 1
      %v263 = vpop.permute.xlu0 %262
      %vm264 = vcmask 7168
      %v265 = vsel %vm264, %v259, %v261
      %v266 = vsel %vm264, %v261, %v263
      %v269 = vsel %vm223, %v265, 0.0
      %v270 = vsel %vm224, %v266, 0.0
      %272 = vrot.lane.b32.xlu0 %v217, 127
      %v273 = vpop.permute.xlu0 %272
      %274 = vrot.lane.b32.xlu0 %v218, 127
      %v275 = vpop.permute.xlu0 %274
      %276 = vrot.lane.b32.xlu0 %v219, 127
      %v277 = vpop.permute.xlu0 %276
      %vm278 = vcmask 1039360
      %v279 = vsel %vm278, %v273, %v275
      %v280 = vsel %vm278, %v275, %v277
      %v283 = vsel %vm243, %v279, 0.0
      %v284 = vsel %vm244, %v280, 0.0
      %285 = vrot.lane.b32.xlu0 %v217, 113
      %v286 = vpop.permute.xlu0 %285
      %287 = vrot.lane.b32.xlu0 %v218, 113
      %v288 = vpop.permute.xlu0 %287
      %289 = vrot.lane.b32.xlu0 %v219, 113
      %v290 = vpop.permute.xlu0 %289
      %vm291 = vcmask 924672
      %v292 = vsel %vm291, %v286, %v288
      %v293 = vsel %vm291, %v288, %v290
      %v296 = vsel %vm223, %v292, 0.0
      %v297 = vsel %vm224, %v293, 0.0
      %298 = vrot.lane.b32.xlu0 %v217, 111
      %v299 = vpop.permute.xlu0 %298
      %300 = vrot.lane.b32.xlu0 %v218, 111
      %v301 = vpop.permute.xlu0 %300
      %302 = vrot.lane.b32.xlu0 %v219, 111
      %v303 = vpop.permute.xlu0 %302
      %vm304 = vcmask 908288
      %v305 = vsel %vm304, %v299, %v301
      %v306 = vsel %vm304, %v301, %v303
      %v309 = vsel %vm243, %v305, 0.0
      %v310 = vsel %vm244, %v306, 0.0
      %311 = vrot.lane.b32.xlu0 %v216, 16
      %v312 = vpop.permute.xlu0 %311
      %313 = vrot.lane.b32.xlu0 %v217, 16
      %v314 = vpop.permute.xlu0 %313
      %315 = vrot.lane.b32.xlu0 %v218, 16
      %v316 = vpop.permute.xlu0 %315
      %vm317 = vcmask 130048
      %v318 = vsel %vm317, %v312, %v314
      %v319 = vsel %vm317, %v314, %v316
      %322 = vrot.lane.b32.xlu0 %v217, 112
      %v323 = vpop.permute.xlu0 %322
      %324 = vrot.lane.b32.xlu0 %v218, 112
      %v325 = vpop.permute.xlu0 %324
      %326 = vrot.lane.b32.xlu0 %v219, 112
      %v327 = vpop.permute.xlu0 %326
      %vm328 = vcmask 916480
      %v329 = vsel %vm328, %v323, %v325
      %v330 = vsel %vm328, %v325, %v327
      %v333 = vpack.c.bf16 %v318, %v239
      %v334 = vpack.c.bf16 %v319, %v240
      %v335 = vpack.c.bf16 %v269, %v256
      %v336 = vpack.c.bf16 %v270, %v257
      %v337 = vpack.c.bf16 %v283, %v217
      %v338 = vpack.c.bf16 %v284, %v218
      %v339 = vpack.c.bf16 %v329, %v296
      %v340 = vpack.c.bf16 %v330, %v297
      %v341 = vpack.c.bf16 %v309, %v309
      %v342 = vpack.c.bf16 %v310, %v310
      %v343 = vld [vmem:[%s2] sm:$0x7]
      %345 = vset.pattern.permute.xlu0 0
      %346 = vperm.xlu0 %345, %v343
      %v347 = vpop.permute.xlu0 %346
      %vm349 = vcmask 588800
      %v351 = vsel %vm349, %v220, 0
      %vm353 = vcmask 1043456
      %v355 = vsel %vm353, %v341, 0
      %v358 = vsel %vm353, %v342, 0
      %360 = vmatprep.subr.bf16.mxu0 %v334
      %361 = vmatpush1.bf16.msra.mxu0 %v333
      %362 = vmatprep.subr.bf16.mxu0 %v336
      %363 = vmatpush1.bf16.msra.mxu0 %v335
      %364 = vmatprep.subr.bf16.mxu0 %v338
      %365 = vmatpush1.bf16.msra.mxu0 %v337
      %366 = vmatprep.subr.bf16.mxu0 %v340
      %367 = vmatpush1.bf16.msra.mxu0 %v339
      %368 = vmatprep.subr.bf16.mxu0 %v358
      %369 = vmatpush1.bf16.msra.mxu0 %v355
      %370 = vmatprep.subr.bf16.mxu0 0
      %371 = vmatpush1.bf16.msra.mxu0 0
      %372 = vmatprep.subr.bf16.mxu0 0
      %373 = vmatpush1.bf16.msra.mxu0 0
      %374 = vmatprep.subr.bf16.mxu0 0
      %375 = vmatpush1.bf16.msra.mxu0 0
      %376 = vmatprep.subr.bf16.mxu0 0
      %377 = vmatpush1.bf16.msra.mxu0 0
      %378 = vmatprep.subr.bf16.mxu0 0
      %379 = vmatpush1.bf16.msra.mxu0 0
      %380 = vmatprep.subr.bf16.mxu0 0
      %381 = vmatpush1.bf16.msra.mxu0 0
      %382 = vmatprep.subr.bf16.mxu0 0
      %383 = vmatpush1.bf16.msra.mxu0 0
      %384 = vmatprep.subr.bf16.mxu0 0
      %385 = vmatpush1.bf16.msra.mxu0 0
      %386 = vmatprep.subr.bf16.mxu0 0
      %387 = vmatpush1.bf16.msra.mxu0 0
      %388 = vmatprep.subr.bf16.mxu0 0
      %389 = vmatpush1.bf16.msra.mxu0 0
      %390 = vmatprep.subr.bf16.mxu0 0
      %391 = vmatpush1.bf16.msra.mxu0 0
      %392 = vmatprep.mubr.bf16.mxu0 0
      %393 = vmatmul.mubr.bf16.gmra.mrb[0].mxu0 %v351
      %v394 = vpop.f32.mrb[0].mxu0
      %v395 = vadd.f32 %v347, %v394
      %v396 = vpop.f32.mrb[0].mxu0
      %v397 = vadd.f32 %v347, %v396
      %v398 = vpop.f32.mrb[0].mxu0
      %v399 = vpop.f32.mrb[0].mxu0
      %400 = vdwg.mxu0
      %v401 = vtanh.pop %v395
      %v402 = vtanh.pop %v397
      %v405 = vcombine.low %v401, %v402
      %407 = vst [vmem:[%s170] sm:$0x77] %v405
      %p408 = scmp.lt.s32.totalorder %s14, 1
      %s409 = scalar_select %p408, %s14, 1
      %s410 = smul.addr %s409, 2
      %s411 = smul.addr %s410, 4
      %s412 = scalar_lea.vmem %s3, %s411
      // Predicated region
      $region33: #{generator_forward.9} parent=31 // pred_check
        %p413 = pneg %p100
      $region34: #{generator_forward.9} parent=31 // pred_check_branch
        %415 = sbr.rel (%p413) target = $region36
      $region35: #{generator_forward.9} parent=31 // pred_region
        _
      $region36: #{generator_forward.9} parent=31 // pred_fallthru
        _
    $region32: #{generator_forward.9} parent=5 // pred_fallthru
      _
    %p416 = scmp.le.s32.totalorder 2, %s9
    // Predicated region
    $region37: #{generator_forward.9} parent=5 // pred_check
      %p417 = pneg %p416
    $region38: #{generator_forward.9} parent=5 // pred_check_branch
      %419 = sbr.rel (%p417) target = $region40
    $region39: #{generator_forward.9} parent=5 // pred_region
      %s420 = ssub.s32 %s9, 2
      // Predicated region
      $region41: #{generator_forward.9} parent=39 // pred_check
        %p421 = pneg %p106
      $region42: #{generator_forward.9} parent=39 // pred_check_branch
        %423 = sbr.rel (%p421) target = $region44
      $region43: #{generator_forward.9} parent=39 // pred_region
        %p424 = scmp.lt.s32.totalorder %s15, 1
        %s425 = scalar_select %p424, %s15, 1
        %s426 = smul.addr %s425, 2
        %s427 = smul.addr %s426, 4
        %s428 = scalar_lea.vmem %s3, %s427
      $region44: #{generator_forward.9} parent=39 // pred_fallthru
        _
    $region40: #{generator_forward.9} parent=5 // pred_fallthru
      _
  $region6: #{generator_forward.9} parent=0 // loop_footer
    %s13 = sadd.s32 1, %s9
  $region7: #{generator_forward.9} parent=0 // loop_footer_branch
    %8 = sbr.rel target = $region3
  $region8: #{generator_forward.9} parent=0 // loop_exit
    _

// kernel: generator_forward.8
$region0: #{generator_forward.8}
  #allocation0 [shape = 'u32[]', space=smem, size = 0x4, offset = 0x4, fixed_abs, tag = 'smem constant byte address 0x4 - core index']
  #allocation1 [shape = 'u32[144,128]{1,0:T(1,128)}', space=vmem, size = 0x12000, scoped, tag = 'internal scratch']
  #allocation2 [shape = 'f32[8,512]{1,0:T(8,128)}', space=vmem, size = 0x4000, scoped, tag = 'scratch operand']
  #allocation3 [shape = 'f32[8,512]{1,0:T(8,128)}', space=vmem, size = 0x4000, scoped, tag = 'scratch operand']
  %s0 = inlined_call_operand.vmem [shape: bf16[2,8,256], index: 0, kind: input, shape index: {}]
  %s1 = inlined_call_operand.vmem [shape: bf16[8,72], index: 1, kind: input, shape index: {}]
  %s2 = inlined_call_operand.vmem [shape: f32[8,1], index: 2, kind: input, shape index: {}]
  %s3 = inlined_call_operand.vmem [shape: bf16[8,72], index: 3, kind: input, shape index: {}]
  %s4 = inlined_call_operand.vmem [shape: f32[8,1], index: 4, kind: input, shape index: {}]
  %s5 = inlined_call_operand.vmem [shape: bf16[2,8,256], index: 5, kind: output, shape index: {}]
  %s6 = sld [smem:[#allocation0]]
  $region53: #{generator_forward.8} parent=0
    _
  %s8 = ssub.s32 1, %s6
  %s9 = scalar_select 0, %s8, %s6
  loop: start=0, step=1, limit=4
  $region2: #{generator_forward.8} parent=0 // loop_pre_header
    _
  $region3: #{generator_forward.8} parent=0 // loop_header
    %s11 = sphi 0, %s15
    %p12 = scmp.ge.s32.totalorder %s11, 4
    %s21 = sphi 0, %s23
    %s24 = sphi 0, %s21
    %s25 = sphi 0, %s24
    %s41 = sphi 0, %s25
    %s45 = sphi 0, %s45
    %s47 = sphi 0, %s45
    %s48 = sphi 0, %s47
    %s62 = sphi 0, %s48
    %s66 = sphi 0, %s66
    %s68 = sphi 0, %s66
    %s69 = sphi 0, %s68
    %s83 = sphi 0, %s69
    %s87 = sphi 0, %s87
    %s89 = sphi 0, %s87
    %s90 = sphi 0, %s89
    %s104 = sphi 0, %s90
    %s108 = sphi 0, %s108
    %s110 = sphi 0, %s108
    %s111 = sphi 0, %s110
    %s125 = sphi 0, %s111
    %s131 = sphi 0, %s133
    %s134 = sphi 0, %s131
    %s135 = sphi 0, %s134
    %s151 = sphi 0, %s135
  $region4: #{generator_forward.8} parent=0 // loop_header_branch
    %14 = sbr.rel (%p12) target = $region8
  $region5: #{generator_forward.8} parent=0 // loop_body
    %s16 = ssub.s32 %s11, 1
    %s17 = ssub.s32 %s11, 2
    %s18 = sadd.s32 %s11, 1
    %s19 = ssub.s32 %s11, %s18
    %p20 = scmp.eq.s32.totalorder %s19, 0
    %s22 = sadd.s32 %s21, 1
    %s23 = scalar_select %p20, %s21, %s22
    %p26 = pneg %p20
    %p27 = scmp.eq.s32.totalorder %s11, 1
    %p28 = por %p26, %p27
    %p29 = scmp.ne.s32.totalorder %s21, %s24
    %p30 = scmp.eq.s32.totalorder %s11, 0
    %p31 = por %p29, %p30
    %p32 = scmp.ne.s32.totalorder %s21, %s24
    %p33 = scmp.eq.s32.totalorder %s16, 1
    %p34 = por %p32, %p33
    %p35 = scmp.ne.s32.totalorder %s24, %s25
    %p36 = scmp.eq.s32.totalorder %s16, 0
    %p37 = por %p35, %p36
    %p38 = scmp.ne.s32.totalorder %s24, %s25
    %p39 = scmp.eq.s32.totalorder %s17, 1
    %p40 = por %p38, %p39
    %p42 = scmp.ne.s32.totalorder %s25, %s41
    %p43 = scmp.eq.s32.totalorder %s17, 0
    %p44 = por %p42, %p43
    %s46 = sadd.s32 %s45, 1
    %p49 = scmp.eq.s32.totalorder %s11, 1
    %p50 = scmp.ne.s32.totalorder %s45, %s47
    %p51 = scmp.eq.s32.totalorder %s11, 0
    %p52 = por %p50, %p51
    %p53 = scmp.ne.s32.totalorder %s45, %s47
    %p54 = scmp.eq.s32.totalorder %s16, 1
    %p55 = por %p53, %p54
    %p56 = scmp.ne.s32.totalorder %s47, %s48
    %p57 = scmp.eq.s32.totalorder %s16, 0
    %p58 = por %p56, %p57
    %p59 = scmp.ne.s32.totalorder %s47, %s48
    %p60 = scmp.eq.s32.totalorder %s17, 1
    %p61 = por %p59, %p60
    %p63 = scmp.ne.s32.totalorder %s48, %s62
    %p64 = scmp.eq.s32.totalorder %s17, 0
    %p65 = por %p63, %p64
    %s67 = sadd.s32 %s66, 1
    %p70 = scmp.eq.s32.totalorder %s11, 1
    %p71 = scmp.ne.s32.totalorder %s66, %s68
    %p72 = scmp.eq.s32.totalorder %s11, 0
    %p73 = por %p71, %p72
    %p74 = scmp.ne.s32.totalorder %s66, %s68
    %p75 = scmp.eq.s32.totalorder %s16, 1
    %p76 = por %p74, %p75
    %p77 = scmp.ne.s32.totalorder %s68, %s69
    %p78 = scmp.eq.s32.totalorder %s16, 0
    %p79 = por %p77, %p78
    %p80 = scmp.ne.s32.totalorder %s68, %s69
    %p81 = scmp.eq.s32.totalorder %s17, 1
    %p82 = por %p80, %p81
    %p84 = scmp.ne.s32.totalorder %s69, %s83
    %p85 = scmp.eq.s32.totalorder %s17, 0
    %p86 = por %p84, %p85
    %s88 = sadd.s32 %s87, 1
    %p91 = scmp.eq.s32.totalorder %s11, 1
    %p92 = scmp.ne.s32.totalorder %s87, %s89
    %p93 = scmp.eq.s32.totalorder %s11, 0
    %p94 = por %p92, %p93
    %p95 = scmp.ne.s32.totalorder %s87, %s89
    %p96 = scmp.eq.s32.totalorder %s16, 1
    %p97 = por %p95, %p96
    %p98 = scmp.ne.s32.totalorder %s89, %s90
    %p99 = scmp.eq.s32.totalorder %s16, 0
    %p100 = por %p98, %p99
    %p101 = scmp.ne.s32.totalorder %s89, %s90
    %p102 = scmp.eq.s32.totalorder %s17, 1
    %p103 = por %p101, %p102
    %p105 = scmp.ne.s32.totalorder %s90, %s104
    %p106 = scmp.eq.s32.totalorder %s17, 0
    %p107 = por %p105, %p106
    %s109 = sadd.s32 %s108, 1
    %p112 = scmp.eq.s32.totalorder %s11, 1
    %p113 = scmp.ne.s32.totalorder %s108, %s110
    %p114 = scmp.eq.s32.totalorder %s11, 0
    %p115 = por %p113, %p114
    %p116 = scmp.ne.s32.totalorder %s108, %s110
    %p117 = scmp.eq.s32.totalorder %s16, 1
    %p118 = por %p116, %p117
    %p119 = scmp.ne.s32.totalorder %s110, %s111
    %p120 = scmp.eq.s32.totalorder %s16, 0
    %p121 = por %p119, %p120
    %p122 = scmp.ne.s32.totalorder %s110, %s111
    %p123 = scmp.eq.s32.totalorder %s17, 1
    %p124 = por %p122, %p123
    %p126 = scmp.ne.s32.totalorder %s111, %s125
    %p127 = scmp.eq.s32.totalorder %s17, 0
    %p128 = por %p126, %p127
    %s129 = ssub.s32 %s11, %s18
    %p130 = scmp.eq.s32.totalorder %s129, 0
    %s132 = sadd.s32 %s131, 1
    %s133 = scalar_select %p130, %s131, %s132
    %p136 = pneg %p130
    %p137 = scmp.eq.s32.totalorder %s11, 1
    %p138 = por %p136, %p137
    %p139 = scmp.ne.s32.totalorder %s131, %s134
    %p140 = scmp.eq.s32.totalorder %s11, 0
    %p141 = por %p139, %p140
    %p142 = scmp.ne.s32.totalorder %s131, %s134
    %p143 = scmp.eq.s32.totalorder %s16, 1
    %p144 = por %p142, %p143
    %p145 = scmp.ne.s32.totalorder %s134, %s135
    %p146 = scmp.eq.s32.totalorder %s16, 0
    %p147 = por %p145, %p146
    %p148 = scmp.ne.s32.totalorder %s134, %s135
    %p149 = scmp.eq.s32.totalorder %s17, 1
    %p150 = por %p148, %p149
    %p152 = scmp.ne.s32.totalorder %s135, %s151
    %p153 = scmp.eq.s32.totalorder %s17, 0
    %p154 = por %p152, %p153
    %p155 = scmp.le.s32.totalorder 1, %s11
    %p156 = scmp.lt.s32.totalorder %s11, 3
    %p157 = pnand %p155, %p156
    %p158 = pneg %p157
    // Predicated region
    $region9: #{generator_forward.8} parent=5 // pred_check
      _
    $region10: #{generator_forward.8} parent=5 // pred_check_branch
      %160 = sbr.rel (%p157) target = $region12
    $region11: #{generator_forward.8} parent=5 // pred_region
      %s161 = ssub.s32 %s11, 1
      // Predicated region
      $region13: #{generator_forward.8} parent=11 // pred_check
        %p162 = pneg %p58
      $region14: #{generator_forward.8} parent=11 // pred_check_branch
        %164 = sbr.rel (%p162) target = $region16
      $region15: #{generator_forward.8} parent=11 // pred_region
        _
      $region16: #{generator_forward.8} parent=11 // pred_fallthru
        _
      // Predicated region
      $region17: #{generator_forward.8} parent=11 // pred_check
        %p165 = pneg %p79
      $region18: #{generator_forward.8} parent=11 // pred_check_branch
        %167 = sbr.rel (%p165) target = $region20
      $region19: #{generator_forward.8} parent=11 // pred_region
        _
      $region20: #{generator_forward.8} parent=11 // pred_fallthru
        _
      // Predicated region
      $region21: #{generator_forward.8} parent=11 // pred_check
        %p168 = pneg %p100
      $region22: #{generator_forward.8} parent=11 // pred_check_branch
        %170 = sbr.rel (%p168) target = $region24
      $region23: #{generator_forward.8} parent=11 // pred_region
        _
      $region24: #{generator_forward.8} parent=11 // pred_fallthru
        _
      // Predicated region
      $region25: #{generator_forward.8} parent=11 // pred_check
        %p171 = pneg %p121
      $region26: #{generator_forward.8} parent=11 // pred_check_branch
        %173 = sbr.rel (%p171) target = $region28
      $region27: #{generator_forward.8} parent=11 // pred_region
        _
      $region28: #{generator_forward.8} parent=11 // pred_fallthru
        _
    $region12: #{generator_forward.8} parent=5 // pred_fallthru
      _
    %p174 = scmp.lt.s32.totalorder %s11, 2
    // Predicated region
    $region29: #{generator_forward.8} parent=5 // pred_check
      %p175 = pneg %p174
    $region30: #{generator_forward.8} parent=5 // pred_check_branch
      %177 = sbr.rel (%p175) target = $region32
    $region31: #{generator_forward.8} parent=5 // pred_region
      // Predicated region
      $region33: #{generator_forward.8} parent=31 // pred_check
        %p178 = pneg %p31
      $region34: #{generator_forward.8} parent=31 // pred_check_branch
        %180 = sbr.rel (%p178) target = $region36
      $region35: #{generator_forward.8} parent=31 // pred_region
        %p181 = scmp.lt.s32.totalorder %s11, 1
        %s182 = scalar_select %p181, %s11, 1
        %s183 = smul.addr %s182, 2
        %s184 = smul.addr %s183, 4
        %s185 = scalar_lea.vmem %s0, %s184
      $region36: #{generator_forward.8} parent=31 // pred_fallthru
        _
    $region32: #{generator_forward.8} parent=5 // pred_fallthru
      _
    %p186 = scmp.le.s32.totalorder 1, %s11
    %p187 = scmp.lt.s32.totalorder %s11, 3
    %p188 = pnand %p186, %p187
    %p189 = pneg %p188
    // Predicated region
    $region37: #{generator_forward.8} parent=5 // pred_check
      _
    $region38: #{generator_forward.8} parent=5 // pred_check_branch
      %191 = sbr.rel (%p188) target = $region40
    $region39: #{generator_forward.8} parent=5 // pred_region
      %s192 = ssub.s32 %s11, 1
      %p193 = scmp.lt.s32.totalorder %s16, 1
      %s194 = scalar_select %p193, %s16, 1
      %s195 = smul.addr %s194, 2
      %s196 = smul.addr %s195, 4
      %s197 = scalar_lea.vmem %s0, %s196
      %p198 = pneg %p37
      %p199 = pneg %p34
      %p200 = pneg %p58
      %p201 = pneg %p55
      %p202 = pneg %p79
      %p203 = pneg %p76
      %p204 = pneg %p100
      %p205 = pneg %p97
      %p206 = pneg %p121
      %p207 = pneg %p118
      %p208 = pneg %p147
      %p209 = pneg %p144
      %p210 = scmp.lt.s32.totalorder %s16, 1
      %s211 = scalar_select %p210, %s16, 1
      %s212 = smul.addr %s211, 2
      %s213 = smul.addr %s212, 4
      %s214 = scalar_lea.vmem %s5, %s213
      %p215 = scmp.lt.s32.totalorder %s16, 1
      %s216 = scalar_select %p215, %s16, 1
      %s217 = smul.addr %s216, 2
      %s218 = smul.addr %s217, 4
      %s219 = scalar_lea.vmem %s0, %s218
      %p220 = scmp.lt.s32.totalorder %s16, 1
      %s221 = scalar_select %p220, %s16, 1
      %s222 = smul.addr %s221, 2
      %s223 = smul.addr %s222, 4
      %s224 = scalar_lea.vmem %s5, %s223
      %v226 = vld [vmem:[%s219] sm:$0xff]
      %v227 = vld [vmem:[%s1] sm:$0xf]
      %v228 = vld [vmem:[%s2] sm:$0xff]
      %v229 = vld [vmem:[%s3] sm:$0xf]
      %v230 = vld [vmem:[%s4] sm:$0xff]
      %v231 = vlaneseq
      %v232 = vand.u32 %v231, 127
      %v233 = vadd.s32 %v232, 128
      %vm234 = vcmp.lt.s32.totalorder %v232, 0
      %v235 = vsub.s32 0, %v232
      %v236 = vsel %vm234, %v235, %v232
      %v237 = vshrl.u32 %v236, 4
      %v238 = vand.u32 %v236, 15
      %v239 = vsub.s32 0, %v238
      %v240 = vsel %vm234, %v239, %v238
      %vm241 = vcmp.lt.s32.totalorder %v233, 0
      %v242 = vsub.s32 0, %v233
      %v243 = vsel %vm241, %v242, %v233
      %v244 = vshrl.u32 %v243, 4
      %v245 = vand.u32 %v243, 15
      %v246 = vsub.s32 0, %v245
      %v247 = vsel %vm241, %v246, %v245
      %vm248 = vcmp.ne.s32.totalorder %v240, 0
      %vm249 = vcmp.ne.s32.totalorder %v247, 0
      %vm250 = vcmp.lt.s32.totalorder %v240, 0
      %vm251 = vcmp.lt.s32.totalorder %v247, 0
      %vm252 = vmand %vm250, %vm248
      %vm253 = vmand %vm251, %vm249
      %v254 = vadd.s32 %v240, 16
      %v255 = vadd.s32 %v247, 16
      %v256 = vsel %vm252, %v254, %v240
      %v257 = vsel %vm253, %v255, %v247
      %vm258 = vcmp.gt.s32.totalorder %v256, 0
      %vm259 = vcmp.gt.s32.totalorder %v257, 0
      %vm260 = vcmp.lt.s32.totalorder %v256, 15
      %vm261 = vcmp.lt.s32.totalorder %v257, 15
      %v262 = vunpack.c.l.bf16 %v226
      %v263 = vunpack.c.h.bf16 %v226
      %v264 = vmul.f32 %v262, 0.2
      %v265 = vmul.f32 %v263, 0.2
      %v266 = vmax.f32 %v262, %v264
      %v267 = vmax.f32 %v263, %v265
      %268 = vst [vmem:[#allocation2] sm:$0xff] 0.0
      %269 = vst [vmem:[#allocation2 + $0x8] sm:$0xff] 0.0
      %270 = vst [vmem:[#allocation2 + $0x10] sm:$0xff] 0.0
      %271 = vst [vmem:[#allocation2 + $0x18] sm:$0xff] 0.0
      %272 = vst [vmem:[#allocation2 + $0x8] sm:$0xff] %v266
      %273 = vst [vmem:[#allocation2 + $0x10] sm:$0xff] %v267
      %v274 = vld [vmem:[#allocation2] sm:$0xff]
      %v275 = vld [vmem:[#allocation2 + $0x8] sm:$0xff]
      %v276 = vld [vmem:[#allocation2 + $0x10] sm:$0xff]
      %v277 = vld [vmem:[#allocation2 + $0x18] sm:$0xff]
      %v278 = vsel %vm258, 1, 0
      %v279 = vsel %vm259, 1, 0
      %vm280 = vcmp.eq.s32.totalorder %v278, 1
      %vm281 = vcmp.eq.s32.totalorder %v279, 1
      %285 = vrot.lane.b32.xlu0 %v274, 17
      %v286 = vpop.permute.xlu0 %285
      %287 = vrot.lane.b32.xlu0 %v275, 17
      %v288 = vpop.permute.xlu0 %287
      %289 = vrot.lane.b32.xlu0 %v276, 17
      %v290 = vpop.permute.xlu0 %289
      %vm291 = vcmask 138240
      %v292 = vsel %vm291, %v286, %v288
      %v293 = vsel %vm291, %v288, %v290
      %v296 = vsel %vm280, %v292, 0.0
      %v297 = vsel %vm281, %v293, 0.0
      %v298 = vsel %vm260, 1, 0
      %v299 = vsel %vm261, 1, 0
      %vm300 = vcmp.eq.s32.totalorder %v298, 1
      %vm301 = vcmp.eq.s32.totalorder %v299, 1
      %302 = vrot.lane.b32.xlu0 %v274, 15
      %v303 = vpop.permute.xlu0 %302
      %304 = vrot.lane.b32.xlu0 %v275, 15
      %v305 = vpop.permute.xlu0 %304
      %306 = vrot.lane.b32.xlu0 %v276, 15
      %v307 = vpop.permute.xlu0 %306
      %vm308 = vcmask 121856
      %v309 = vsel %vm308, %v303, %v305
      %v310 = vsel %vm308, %v305, %v307
      %v313 = vsel %vm300, %v309, 0.0
      %v314 = vsel %vm301, %v310, 0.0
      %315 = vrot.lane.b32.xlu0 %v274, 1
      %v316 = vpop.permute.xlu0 %315
      %317 = vrot.lane.b32.xlu0 %v275, 1
      %v318 = vpop.permute.xlu0 %317
      %319 = vrot.lane.b32.xlu0 %v276, 1
      %v320 = vpop.permute.xlu0 %319
      %vm321 = vcmask 7168
      %v322 = vsel %vm321, %v316, %v318
      %v323 = vsel %vm321, %v318, %v320
      %v326 = vsel %vm280, %v322, 0.0
      %v327 = vsel %vm281, %v323, 0.0
      %329 = vrot.lane.b32.xlu0 %v275, 127
      %v330 = vpop.permute.xlu0 %329
      %331 = vrot.lane.b32.xlu0 %v276, 127
      %v332 = vpop.permute.xlu0 %331
      %333 = vrot.lane.b32.xlu0 %v277, 127
      %v334 = vpop.permute.xlu0 %333
      %vm335 = vcmask 1039360
      %v336 = vsel %vm335, %v330, %v332
      %v337 = vsel %vm335, %v332, %v334
      %v340 = vsel %vm300, %v336, 0.0
      %v341 = vsel %vm301, %v337, 0.0
      %342 = vrot.lane.b32.xlu0 %v275, 113
      %v343 = vpop.permute.xlu0 %342
      %344 = vrot.lane.b32.xlu0 %v276, 113
      %v345 = vpop.permute.xlu0 %344
      %346 = vrot.lane.b32.xlu0 %v277, 113
      %v347 = vpop.permute.xlu0 %346
      %vm348 = vcmask 924672
      %v349 = vsel %vm348, %v343, %v345
      %v350 = vsel %vm348, %v345, %v347
      %v353 = vsel %vm280, %v349, 0.0
      %v354 = vsel %vm281, %v350, 0.0
      %355 = vrot.lane.b32.xlu0 %v275, 111
      %v356 = vpop.permute.xlu0 %355
      %357 = vrot.lane.b32.xlu0 %v276, 111
      %v358 = vpop.permute.xlu0 %357
      %359 = vrot.lane.b32.xlu0 %v277, 111
      %v360 = vpop.permute.xlu0 %359
      %vm361 = vcmask 908288
      %v362 = vsel %vm361, %v356, %v358
      %v363 = vsel %vm361, %v358, %v360
      %v366 = vsel %vm300, %v362, 0.0
      %v367 = vsel %vm301, %v363, 0.0
      %368 = vrot.lane.b32.xlu0 %v274, 16
      %v369 = vpop.permute.xlu0 %368
      %370 = vrot.lane.b32.xlu0 %v275, 16
      %v371 = vpop.permute.xlu0 %370
      %372 = vrot.lane.b32.xlu0 %v276, 16
      %v373 = vpop.permute.xlu0 %372
      %vm374 = vcmask 130048
      %v375 = vsel %vm374, %v369, %v371
      %v376 = vsel %vm374, %v371, %v373
      %379 = vrot.lane.b32.xlu0 %v275, 112
      %v380 = vpop.permute.xlu0 %379
      %381 = vrot.lane.b32.xlu0 %v276, 112
      %v382 = vpop.permute.xlu0 %381
      %383 = vrot.lane.b32.xlu0 %v277, 112
      %v384 = vpop.permute.xlu0 %383
      %vm385 = vcmask 916480
      %v386 = vsel %vm385, %v380, %v382
      %v387 = vsel %vm385, %v382, %v384
      %v390 = vpack.c.bf16 %v375, %v296
      %v391 = vpack.c.bf16 %v376, %v297
      %v392 = vpack.c.bf16 %v326, %v313
      %v393 = vpack.c.bf16 %v327, %v314
      %v394 = vpack.c.bf16 %v340, %v275
      %v395 = vpack.c.bf16 %v341, %v276
      %v396 = vpack.c.bf16 %v386, %v353
      %v397 = vpack.c.bf16 %v387, %v354
      %v398 = vpack.c.bf16 %v366, %v366
      %v399 = vpack.c.bf16 %v367, %v367
      %401 = vset.pattern.permute.xlu0 0
      %402 = vperm.xlu0 %401, %v228
      %v403 = vpop.permute.xlu0 %402
      %vm405 = vcmask 588800
      %v407 = vsel %vm405, %v227, 0
      %vm409 = vcmask 1043456
      %v411 = vsel %vm409, %v398, 0
      %v414 = vsel %vm409, %v399, 0
      %416 = vmatprep.subr.bf16.mxu0 %v391
      %417 = vmatpush1.bf16.msra.mxu0 %v390
      %418 = vmatprep.subr.bf16.mxu0 %v393
      %419 = vmatpush1.bf16.msra.mxu0 %v392
      %420 = vmatprep.subr.bf16.mxu0 %v395
      %421 = vmatpush1.bf16.msra.mxu0 %v394
      %422 = vmatprep.subr.bf16.mxu0 %v397
      %423 = vmatpush1.bf16.msra.mxu0 %v396
      %424 = vmatprep.subr.bf16.mxu0 %v414
      %425 = vmatpush1.bf16.msra.mxu0 %v411
      %426 = vmatprep.subr.bf16.mxu0 0
      %427 = vmatpush1.bf16.msra.mxu0 0
      %428 = vmatprep.subr.bf16.mxu0 0
      %429 = vmatpush1.bf16.msra.mxu0 0
      %430 = vmatprep.subr.bf16.mxu0 0
      %431 = vmatpush1.bf16.msra.mxu0 0
      %432 = vmatprep.subr.bf16.mxu0 0
      %433 = vmatpush1.bf16.msra.mxu0 0
      %434 = vmatprep.subr.bf16.mxu0 0
      %435 = vmatpush1.bf16.msra.mxu0 0
      %436 = vmatprep.subr.bf16.mxu0 0
      %437 = vmatpush1.bf16.msra.mxu0 0
      %438 = vmatprep.subr.bf16.mxu0 0
      %439 = vmatpush1.bf16.msra.mxu0 0
      %440 = vmatprep.subr.bf16.mxu0 0
      %441 = vmatpush1.bf16.msra.mxu0 0
      %442 = vmatprep.subr.bf16.mxu0 0
      %443 = vmatpush1.bf16.msra.mxu0 0
      %444 = vmatprep.subr.bf16.mxu0 0
      %445 = vmatpush1.bf16.msra.mxu0 0
      %446 = vmatprep.subr.bf16.mxu0 0
      %447 = vmatpush1.bf16.msra.mxu0 0
      %448 = vmatprep.mubr.bf16.mxu0 0
      %449 = vmatmul.mubr.bf16.gmra.mrb[0].mxu0 %v407
      %v450 = vpop.f32.mrb[0].mxu0
      %v451 = vadd.f32 %v403, %v450
      %v452 = vpop.f32.mrb[0].mxu0
      %v453 = vadd.f32 %v403, %v452
      %v454 = vpop.f32.mrb[0].mxu0
      %v455 = vpop.f32.mrb[0].mxu0
      %456 = vdwg.mxu0
      %v457 = vmul.f32 %v451, 0.2
      %v458 = vmul.f32 %v453, 0.2
      %v459 = vmax.f32 %v451, %v457
      %v460 = vmax.f32 %v453, %v458
      %461 = vst [vmem:[#allocation3] sm:$0xff] 0.0
      %462 = vst [vmem:[#allocation3 + $0x8] sm:$0xff] 0.0
      %463 = vst [vmem:[#allocation3 + $0x10] sm:$0xff] 0.0
      %464 = vst [vmem:[#allocation3 + $0x18] sm:$0xff] 0.0
      %465 = vst [vmem:[#allocation3 + $0x8] sm:$0xff] %v459
      %466 = vst [vmem:[#allocation3 + $0x10] sm:$0xff] %v460
      %v467 = vld [vmem:[#allocation3] sm:$0xff]
      %v468 = vld [vmem:[#allocation3 + $0x8] sm:$0xff]
      %v469 = vld [vmem:[#allocation3 + $0x10] sm:$0xff]
      %v470 = vld [vmem:[#allocation3 + $0x18] sm:$0xff]
      %474 = vrot.lane.b32.xlu0 %v467, 17
      %v475 = vpop.permute.xlu0 %474
      %476 = vrot.lane.b32.xlu0 %v468, 17
      %v477 = vpop.permute.xlu0 %476
      %478 = vrot.lane.b32.xlu0 %v469, 17
      %v479 = vpop.permute.xlu0 %478
      %v480 = vsel %vm291, %v475, %v477
      %v481 = vsel %vm291, %v477, %v479
      %v484 = vsel %vm280, %v480, 0.0
      %v485 = vsel %vm281, %v481, 0.0
      %486 = vrot.lane.b32.xlu0 %v467, 15
      %v487 = vpop.permute.xlu0 %486
      %488 = vrot.lane.b32.xlu0 %v468, 15
      %v489 = vpop.permute.xlu0 %488
      %490 = vrot.lane.b32.xlu0 %v469, 15
      %v491 = vpop.permute.xlu0 %490
      %v492 = vsel %vm308, %v487, %v489
      %v493 = vsel %vm308, %v489, %v491
      %v496 = vsel %vm300, %v492, 0.0
      %v497 = vsel %vm301, %v493, 0.0
      %498 = vrot.lane.b32.xlu0 %v467, 1
      %v499 = vpop.permute.xlu0 %498
      %500 = vrot.lane.b32.xlu0 %v468, 1
      %v501 = vpop.permute.xlu0 %500
      %502 = vrot.lane.b32.xlu0 %v469, 1
      %v503 = vpop.permute.xlu0 %502
      %v504 = vsel %vm321, %v499, %v501
      %v505 = vsel %vm321, %v501, %v503
      %v508 = vsel %vm280, %v504, 0.0
      %v509 = vsel %vm281, %v505, 0.0
      %511 = vrot.lane.b32.xlu0 %v468, 127
      %v512 = vpop.permute.xlu0 %511
      %513 = vrot.lane.b32.xlu0 %v469, 127
      %v514 = vpop.permute.xlu0 %513
      %515 = vrot.lane.b32.xlu0 %v470, 127
      %v516 = vpop.permute.xlu0 %515
      %v517 = vsel %vm335, %v512, %v514
      %v518 = vsel %vm335, %v514, %v516
      %v521 = vsel %vm300, %v517, 0.0
      %v522 = vsel %vm301, %v518, 0.0
      %523 = vrot.lane.b32.xlu0 %v468, 113
      %v524 = vpop.permute.xlu0 %523
      %525 = vrot.lane.b32.xlu0 %v469, 113
      %v526 = vpop.permute.xlu0 %525
      %527 = vrot.lane.b32.xlu0 %v470, 113
      %v528 = vpop.permute.xlu0 %527
      %v529 = vsel %vm348, %v524, %v526
      %v530 = vsel %vm348, %v526, %v528
      %v533 = vsel %vm280, %v529, 0.0
      %v534 = vsel %vm281, %v530, 0.0
      %535 = vrot.lane.b32.xlu0 %v468, 111
      %v536 = vpop.permute.xlu0 %535
      %537 = vrot.lane.b32.xlu0 %v469, 111
      %v538 = vpop.permute.xlu0 %537
      %539 = vrot.lane.b32.xlu0 %v470, 111
      %v540 = vpop.permute.xlu0 %539
      %v541 = vsel %vm361, %v536, %v538
      %v542 = vsel %vm361, %v538, %v540
      %v545 = vsel %vm300, %v541, 0.0
      %v546 = vsel %vm301, %v542, 0.0
      %547 = vrot.lane.b32.xlu0 %v467, 16
      %v548 = vpop.permute.xlu0 %547
      %549 = vrot.lane.b32.xlu0 %v468, 16
      %v550 = vpop.permute.xlu0 %549
      %551 = vrot.lane.b32.xlu0 %v469, 16
      %v552 = vpop.permute.xlu0 %551
      %v553 = vsel %vm374, %v548, %v550
      %v554 = vsel %vm374, %v550, %v552
      %557 = vrot.lane.b32.xlu0 %v468, 112
      %v558 = vpop.permute.xlu0 %557
      %559 = vrot.lane.b32.xlu0 %v469, 112
      %v560 = vpop.permute.xlu0 %559
      %561 = vrot.lane.b32.xlu0 %v470, 112
      %v562 = vpop.permute.xlu0 %561
      %v563 = vsel %vm385, %v558, %v560
      %v564 = vsel %vm385, %v560, %v562
      %v567 = vpack.c.bf16 %v553, %v484
      %v568 = vpack.c.bf16 %v554, %v485
      %v569 = vpack.c.bf16 %v508, %v496
      %v570 = vpack.c.bf16 %v509, %v497
      %v571 = vpack.c.bf16 %v521, %v468
      %v572 = vpack.c.bf16 %v522, %v469
      %v573 = vpack.c.bf16 %v563, %v533
      %v574 = vpack.c.bf16 %v564, %v534
      %v575 = vpack.c.bf16 %v545, %v545
      %v576 = vpack.c.bf16 %v546, %v546
      %578 = vset.pattern.permute.xlu0 0
      %579 = vperm.xlu0 %578, %v230
      %v580 = vpop.permute.xlu0 %579
      %v583 = vsel %vm405, %v229, 0
      %v586 = vsel %vm409, %v575, 0
      %v589 = vsel %vm409, %v576, 0
      %591 = vmatprep.subr.bf16.mxu0 %v568
      %592 = vmatpush1.bf16.msra.mxu0 %v567
      %593 = vmatprep.subr.bf16.mxu0 %v570
      %594 = vmatpush1.bf16.msra.mxu0 %v569
      %595 = vmatprep.subr.bf16.mxu0 %v572
      %596 = vmatpush1.bf16.msra.mxu0 %v571
      %597 = vmatprep.subr.bf16.mxu0 %v574
      %598 = vmatpush1.bf16.msra.mxu0 %v573
      %599 = vmatprep.subr.bf16.mxu0 %v589
      %600 = vmatpush1.bf16.msra.mxu0 %v586
      %601 = vmatprep.subr.bf16.mxu0 0
      %602 = vmatpush1.bf16.msra.mxu0 0
      %603 = vmatprep.subr.bf16.mxu0 0
      %604 = vmatpush1.bf16.msra.mxu0 0
      %605 = vmatprep.subr.bf16.mxu0 0
      %606 = vmatpush1.bf16.msra.mxu0 0
      %607 = vmatprep.subr.bf16.mxu0 0
      %608 = vmatpush1.bf16.msra.mxu0 0
      %609 = vmatprep.subr.bf16.mxu0 0
      %610 = vmatpush1.bf16.msra.mxu0 0
      %611 = vmatprep.subr.bf16.mxu0 0
      %612 = vmatpush1.bf16.msra.mxu0 0
      %613 = vmatprep.subr.bf16.mxu0 0
      %614 = vmatpush1.bf16.msra.mxu0 0
      %615 = vmatprep.subr.bf16.mxu0 0
      %616 = vmatpush1.bf16.msra.mxu0 0
      %617 = vmatprep.subr.bf16.mxu0 0
      %618 = vmatpush1.bf16.msra.mxu0 0
      %619 = vmatprep.subr.bf16.mxu0 0
      %620 = vmatpush1.bf16.msra.mxu0 0
      %621 = vmatprep.subr.bf16.mxu0 0
      %622 = vmatpush1.bf16.msra.mxu0 0
      %623 = vmatprep.mubr.bf16.mxu0 0
      %624 = vmatmul.mubr.bf16.gmra.mrb[0].mxu0 %v583
      %v625 = vpop.f32.mrb[0].mxu0
      %v626 = vadd.f32 %v580, %v625
      %v627 = vpop.f32.mrb[0].mxu0
      %v628 = vadd.f32 %v580, %v627
      %v629 = vpop.f32.mrb[0].mxu0
      %v630 = vpop.f32.mrb[0].mxu0
      %631 = vdwg.mxu0
      %v632 = vmul.f32 %v626, 0.1
      %v633 = vmul.f32 %v628, 0.1
      %v634 = vadd.f32 %v262, %v632
      %v635 = vadd.f32 %v263, %v633
      %v636 = vpack.c.bf16 %v634, %v634
      %v637 = vpack.c.bf16 %v635, %v635
      %v640 = vunpack.c.l.b16 %v636
      %v641 = vunpack.c.l.b16 %v637
      %v642 = vpack.c.b16 %v641, %v640
      %644 = vst [vmem:[%s224] sm:$0xff] %v642
      %p645 = scmp.lt.s32.totalorder %s16, 1
      %s646 = scalar_select %p645, %s16, 1
      %s647 = smul.addr %s646, 2
      %s648 = smul.addr %s647, 4
      %s649 = scalar_lea.vmem %s5, %s648
      // Predicated region
      $region41: #{generator_forward.8} parent=39 // pred_check
        %p650 = pneg %p144
      $region42: #{generator_forward.8} parent=39 // pred_check_branch
        %652 = sbr.rel (%p650) target = $region44
      $region43: #{generator_forward.8} parent=39 // pred_region
        _
      $region44: #{generator_forward.8} parent=39 // pred_fallthru
        _
    $region40: #{generator_forward.8} parent=5 // pred_fallthru
      _
    %p653 = scmp.le.s32.totalorder 2, %s11
    // Predicated region
    $region45: #{generator_forward.8} parent=5 // pred_check
      %p654 = pneg %p653
    $region46: #{generator_forward.8} parent=5 // pred_check_branch
      %656 = sbr.rel (%p654) target = $region48
    $region47: #{generator_forward.8} parent=5 // pred_region
      %s657 = ssub.s32 %s11, 2
      // Predicated region
      $region49: #{generator_forward.8} parent=47 // pred_check
        %p658 = pneg %p150
      $region50: #{generator_forward.8} parent=47 // pred_check_branch
        %660 = sbr.rel (%p658) target = $region52
      $region51: #{generator_forward.8} parent=47 // pred_region
        %p661 = scmp.lt.s32.totalorder %s17, 1
        %s662 = scalar_select %p661, %s17, 1
        %s663 = smul.addr %s662, 2
        %s664 = smul.addr %s663, 4
        %s665 = scalar_lea.vmem %s5, %s664
      $region52: #{generator_forward.8} parent=47 // pred_fallthru
        _
    $region48: #{generator_forward.8} parent=5 // pred_fallthru
      _
  $region6: #{generator_forward.8} parent=0 // loop_footer
    %s15 = sadd.s32 1, %s11
  $region7: #{generator_forward.8} parent=0 // loop_footer_branch
    %10 = sbr.rel target = $region3
  $region8: #{generator_forward.8} parent=0 // loop_exit
    _

</llo_original>
